<compile_context>
chip_gen: v5e
topology: v5e:2x2
jax: 0.10.0
libtpu: 0.0.40
codegen_flags: <defaults>
</compile_context>

<pallas_src>
import jax
import jax.numpy as jnp
from jax import lax
from jax.experimental import pallas as pl
from jax.experimental.pallas import tpu as pltpu

LANE = 128


def _round_up(x, m):
    return (x + m - 1) // m * m


def _tiling(batch, tb_max=512):
    """Batch tile TB (multiple of 16, for bf16 packing) and padded batch Bp."""
    bp = _round_up(max(batch, 16), 16)
    if bp <= tb_max:
        tb = bp
    else:
        tb = tb_max
        bp = _round_up(bp, tb)
    return bp, tb


# ----------------------------- kernel ----------------------------------------

def _textmf_kernel(mid_ref, pid_ref, noise_ref, ptab_ref, qtab_ref,
                   wp_ref, bp_ref, wc_ref, bc_ref, out_ref):
    tb = mid_ref.shape[0]
    num_models = ptab_ref.shape[0]
    num_prompts = qtab_ref.shape[0]

    mids = mid_ref[...]                                      # (TB, 1) int32
    pids = pid_ref[...]                                      # (TB, 1) int32

    # Exact one-hot gathers on the MXU (one 1.0 per row -> exact row select).
    onehot_p = (mids == lax.broadcasted_iota(
        jnp.int32, (tb, num_models), 1)).astype(jnp.float32)
    onehot_q = (pids == lax.broadcasted_iota(
        jnp.int32, (tb, num_prompts), 1)).astype(jnp.bfloat16)

    p = jnp.dot(onehot_p, ptab_ref[...],
                preferred_element_type=jnp.float32)          # (TB, dim) f32
    q = jnp.dot(onehot_q, qtab_ref[...],
                preferred_element_type=jnp.float32).astype(jnp.bfloat16)

    # text_proj: bf16 MXU matmul, f32 accumulation; bias + (projected) noise
    # added in f32.  noise_ref is (TB, dim) in train mode, (1, dim) zeros in
    # test mode (broadcast add).
    qp = (jnp.dot(q, wp_ref[...], preferred_element_type=jnp.float32)
          + bp_ref[...] + noise_ref[...])

    h = p * qp                                               # elementwise gate
    out_ref[...] = (jnp.dot(h, wc_ref[...],
                            preferred_element_type=jnp.float32)
                    + bc_ref[...]).astype(out_ref.dtype)


# ----------------------------- wrapper ----------------------------------------

def prepare_params(params):
    """One-time (per weight update) kernel-ready casts / padding / Cholesky."""
    Wp_f32 = params["Wproj"].astype(jnp.float32)
    dim = Wp_f32.shape[1]
    num_classes = params["Wcls"].shape[1]
    ncp = _round_up(num_classes, LANE)

    cov = Wp_f32.T @ Wp_f32 + 1e-6 * jnp.eye(dim, dtype=jnp.float32)
    chol = jnp.linalg.cholesky(cov)                          # (dim, dim)

    Wc_pad = jnp.zeros((dim, ncp), jnp.float32)
    Wc_pad = Wc_pad.at[:, :num_classes].set(params["Wcls"].astype(jnp.float32))
    bc_pad = jnp.zeros((1, ncp), jnp.float32)
    bc_pad = bc_pad.at[:, :num_classes].set(params["bcls"].astype(jnp.float32))

    return dict(
        P=params["P"].astype(jnp.float32),
        Q=params["Q"].astype(jnp.bfloat16),       # frozen text embeddings -> bf16
        Wproj=Wp_f32.astype(jnp.bfloat16),
        bproj=params["bproj"].astype(jnp.float32).reshape(1, dim),
        Wcls_pad=Wc_pad, bcls_pad=bc_pad,
        chol=chol, num_classes=num_classes)


def projected_noise(prep, key, batch, alpha):
    """Low-dim noise equivalent (in distribution) to alpha*N(0,I_768) @ Wproj."""
    dim = prep["P"].shape[1]
    z = jax.random.normal(key, (batch, dim), jnp.float32)
    return alpha * (z @ prep["chol"].T)


def textmf_forward(prep, model_ids, prompt_ids, *, key=None, alpha=0.05,
                   test_mode=False, tb_max=512):
    P, Q = prep["P"], prep["Q"]
    Wp, bp2 = prep["Wproj"], prep["bproj"]
    Wc, bc = prep["Wcls_pad"], prep["bcls_pad"]

    num_models, dim = P.shape
    num_prompts, text_dim = Q.shape
    ncp = Wc.shape[1]
    num_classes = prep["num_classes"]

    table_bytes = (Q.size * Q.dtype.itemsize + P.size * P.dtype.itemsize
                   + Wp.size * Wp.dtype.itemsize + Wc.size * Wc.dtype.itemsize)
    if table_bytes > 16 * 1024 * 1024:
        # TODO(synk): for large prompt tables switch Q to HBM-resident
        # (memory_space=pl.ANY) with scalar-prefetched prompt_ids and a per-tile
        # manual DMA row gather (P4 double-buffer) instead of the VMEM-resident
        # one-hot gather used here.
        raise ValueError("embedding tables too large for the VMEM-resident "
                         "fused-gather path")

    B = model_ids.shape[0]
    Bp, TB = _tiling(B, tb_max)

    # Only the tiny id / noise tensors are padded (no (B, text_dim) padding).
    mids = jnp.zeros((Bp, 1), jnp.int32).at[:B, 0].set(model_ids.astype(jnp.int32))
    pids = jnp.zeros((Bp, 1), jnp.int32).at[:B, 0].set(prompt_ids.astype(jnp.int32))

    row = lambda i: (i, 0)                 # batch-tiled blocks
    fixed = lambda i: (0, 0)               # VMEM-resident weights / tables

    if test_mode:
        noise = jnp.zeros((1, dim), jnp.float32)
        noise_spec = pl.BlockSpec((1, dim), fixed)
    else:
        if key is None:
            raise ValueError("training mode requires a PRNG `key`")
        noise = jnp.zeros((Bp, dim), jnp.float32)
        noise = noise.at[:B].set(projected_noise(prep, key, B, alpha))
        noise_spec = pl.BlockSpec((TB, dim), row)

    grid = (Bp // TB,)
    in_specs = [
        pl.BlockSpec((TB, 1), row),                      # model ids
        pl.BlockSpec((TB, 1), row),                      # prompt ids
        noise_spec,                                      # projected noise
        pl.BlockSpec((num_models, dim), fixed),          # P table
        pl.BlockSpec((num_prompts, text_dim), fixed),    # Q table (bf16)
        pl.BlockSpec((text_dim, dim), fixed),            # Wproj (bf16)
        pl.BlockSpec((1, dim), fixed),                   # bproj
        pl.BlockSpec((dim, ncp), fixed),                 # Wcls (lane padded)
        pl.BlockSpec((1, ncp), fixed),                   # bcls (lane padded)
    ]
    out_spec = pl.BlockSpec((TB, ncp), row)

    flops = 2 * Bp * (num_prompts * text_dim + num_models * dim
                      + text_dim * dim + dim * ncp)
    bytes_accessed = (mids.size * 4 + pids.size * 4 + noise.size * 4
                      + Bp * ncp * 4 + int(table_bytes))
    cost = pl.CostEstimate(flops=flops, transcendentals=0,
                           bytes_accessed=bytes_accessed)

    out = pl.pallas_call(
        _textmf_kernel,
        out_shape=jax.ShapeDtypeStruct((Bp, ncp), jnp.float32),
        grid_spec=pltpu.PrefetchScalarGridSpec(
            num_scalar_prefetch=0, grid=grid,
            in_specs=in_specs, out_specs=out_spec),
        compiler_params=pltpu.CompilerParams(
            dimension_semantics=("parallel",)),
        cost_estimate=cost,
    )(mids, pids, noise, P, Q, Wp, bp2, Wc, bc)

    return out[:B, :num_classes]


# ----------------------------- init & references ------------------------------

def init_params(key, *, num_models, num_prompts, dim, text_dim, num_classes):
    ks = jax.random.split(key, 6)
    # Embeddings ~ N(0,1) like torch.nn.Embedding; Q stands in for the frozen
    # prompt-embedding checkpoint (no file I/O in this synthetic run).
    P = jax.random.normal(ks[0], (num_models, dim), jnp.float32)
    Q = jax.random.normal(ks[1], (num_prompts, text_dim), jnp.float32)
    lim_p = 1.0 / (text_dim ** 0.5)
    Wproj = jax.random.uniform(ks[2], (text_dim, dim), jnp.float32, -lim_p, lim_p)
    bproj = jax.random.uniform(ks[3], (dim,), jnp.float32, -lim_p, lim_p)
    lim_c = 1.0 / (dim ** 0.5)
    Wcls = jax.random.uniform(ks[4], (dim, num_classes), jnp.float32, -lim_c, lim_c)
    bcls = jax.random.uniform(ks[5], (num_classes,), jnp.float32, -lim_c, lim_c)
    return dict(P=P, Q=Q, Wproj=Wproj, bproj=bproj, Wcls=Wcls, bcls=bcls)


def reference_forward_mixed(prep, model_ids, prompt_ids, *, noise_proj=None):
    """Pure-JAX reference mirroring the kernel's dtype handling exactly."""
    p = prep["P"][model_ids]
    q = prep["Q"][prompt_ids]                                 # bf16 rows
    qp = jnp.dot(q, prep["Wproj"],
                 preferred_element_type=jnp.float32) + prep["bproj"]
    if noise_proj is not None:
        qp = qp + noise_proj
    h = p * qp
    out = jnp.dot(h, prep["Wcls_pad"],
                  preferred_element_type=jnp.float32) + prep["bcls_pad"]
    return out[:, :prep["num_classes"]]


def reference_forward_f32(params, model_ids, prompt_ids):
    """Full-f32 reference matching the original PyTorch math (no noise)."""
    p = params["P"][model_ids]
    q = params["Q"][prompt_ids]
    q = q @ params["Wproj"] + params["bproj"]
    return (p * q) @ params["Wcls"] + params["bcls"]


# ----------------------------- demo / test ------------------------------------

if __name__ == "__main__":
    num_models, num_prompts = 4, 16
    dim, text_dim, num_classes = 32, 768, 2
    alpha = 0.05
    B = 1000          # pads to 1024 -> two 512-row tiles (exercises the grid)

    root = jax.random.PRNGKey(0)
    k_params, k_model, k_prompt, k_noise = jax.random.split(root, 4)
    params = init_params(k_params, num_models=num_models,
                         num_prompts=num_prompts, dim=dim,
                         text_dim=text_dim, num_classes=num_classes)
    prep = prepare_params(params)

    model_ids = jax.random.randint(k_model, (B,), 0, num_models)
    prompt_ids = jax.random.randint(k_prompt, (B,), 0, num_prompts)

    # Training-mode forward (noise applied in the low-dim projected space).
    out_train = textmf_forward(prep, model_ids, prompt_ids, key=k_noise,
                               alpha=alpha, test_mode=False)
    out_train = jax.block_until_ready(out_train)
    assert out_train.shape == (B, num_classes)

    noise_proj = projected_noise(prep, k_noise, B, alpha)
    ref_train = reference_forward_mixed(prep, model_ids, prompt_ids,
                                        noise_proj=noise_proj)
    assert jnp.allclose(out_train, ref_train, atol=1e-2, rtol=1e-2), (
        "train max err", float(jnp.max(jnp.abs(out_train - ref_train))))

    # Test-mode forward (noise-free) + predict glue.
    logits = textmf_forward(prep, model_ids, prompt_ids, test_mode=True)
    logits = jax.block_until_ready(logits)
    assert logits.shape == (B, num_classes)
    ref_test = reference_forward_mixed(prep, model_ids, prompt_ids)
    assert jnp.allclose(logits, ref_test, atol=1e-2, rtol=1e-2), (
        "test max err", float(jnp.max(jnp.abs(logits - ref_test))))
    # Loose sanity check vs. the original full-f32 math (bf16 matmul inputs).
    ref_f32 = reference_forward_f32(params, model_ids, prompt_ids)
    assert jnp.allclose(logits, ref_f32, atol=5e-2)

    preds = jnp.argmax(logits, axis=1)
    assert preds.shape == (B,)

    print("KERNEL_OK")
</pallas_src>

<mosaic_0001>
module attributes {stable_mosaic.version = 11 : i64} {
  func.func @_textmf_kernel(%arg0: i32, %arg1: memref<512x1xi32, #tpu.memory_space<vmem>>, %arg2: memref<512x1xi32, #tpu.memory_space<vmem>>, %arg3: memref<512x32xf32, #tpu.memory_space<vmem>>, %arg4: memref<4x32xf32, #tpu.memory_space<vmem>>, %arg5: memref<16x768xbf16, #tpu.memory_space<vmem>>, %arg6: memref<768x32xbf16, #tpu.memory_space<vmem>>, %arg7: memref<1x32xf32, #tpu.memory_space<vmem>>, %arg8: memref<32x128xf32, #tpu.memory_space<vmem>>, %arg9: memref<1x128xf32, #tpu.memory_space<vmem>>, %arg10: memref<512x128xf32, #tpu.memory_space<vmem>>) attributes {dimension_semantics = [#tpu.dimension_semantics<parallel>], iteration_bounds = array<i64: 2>, scalar_prefetch = 0 : i64, scratch_operands = 0 : i64, tpu.core_type = #tpu.core_type<tc>, window_params = [{transform_indices = @transform_0, window_bounds = array<i64: 512, 1>}, {transform_indices = @transform_1, window_bounds = array<i64: 512, 1>}, {transform_indices = @transform_2, window_bounds = array<i64: 512, 32>}, {pipeline_mode = #tpu.pipeline_mode<synchronous>, transform_indices = @transform_3, window_bounds = array<i64: 4, 32>}, {pipeline_mode = #tpu.pipeline_mode<synchronous>, transform_indices = @transform_4, window_bounds = array<i64: 16, 768>}, {pipeline_mode = #tpu.pipeline_mode<synchronous>, transform_indices = @transform_5, window_bounds = array<i64: 768, 32>}, {pipeline_mode = #tpu.pipeline_mode<synchronous>, transform_indices = @transform_6, window_bounds = array<i64: 1, 32>}, {pipeline_mode = #tpu.pipeline_mode<synchronous>, transform_indices = @transform_7, window_bounds = array<i64: 32, 128>}, {pipeline_mode = #tpu.pipeline_mode<synchronous>, transform_indices = @transform_8, window_bounds = array<i64: 1, 128>}, {transform_indices = @transform_9, window_bounds = array<i64: 512, 128>}]} {
    %c0 = arith.constant 0 : index
    %c0_0 = arith.constant 0 : index
    %0 = vector.load %arg1[%c0, %c0_0] : memref<512x1xi32, #tpu.memory_space<vmem>>, vector<512x1xi32>
    %c0_1 = arith.constant 0 : index
    %c0_2 = arith.constant 0 : index
    %1 = vector.load %arg2[%c0_1, %c0_2] : memref<512x1xi32, #tpu.memory_space<vmem>>, vector<512x1xi32>
    %2 = tpu.iota {dimensions = array<i32: 1>} : vector<512x4xi32>
    %3 = vector.broadcast %0 : vector<512x1xi32> to vector<512x4xi32>
    %4 = arith.cmpi eq, %3, %2 : vector<512x4xi32>
    %5 = arith.extui %4 : vector<512x4xi1> to vector<512x4xi32>
    %6 = arith.sitofp %5 : vector<512x4xi32> to vector<512x4xf32>
    %7 = tpu.iota {dimensions = array<i32: 1>} : vector<512x16xi32>
    %8 = vector.broadcast %1 : vector<512x1xi32> to vector<512x16xi32>
    %9 = arith.cmpi eq, %8, %7 : vector<512x16xi32>
    %10 = arith.extui %9 : vector<512x16xi1> to vector<512x16xi32>
    %11 = arith.sitofp %10 : vector<512x16xi32> to vector<512x16xf32>
    %12 = arith.truncf %11 : vector<512x16xf32> to vector<512x16xbf16>
    %c0_3 = arith.constant 0 : index
    %c0_4 = arith.constant 0 : index
    %13 = vector.load %arg4[%c0_3, %c0_4] : memref<4x32xf32, #tpu.memory_space<vmem>>, vector<4x32xf32>
    %cst = arith.constant dense<0.000000e+00> : vector<512x32xf32>
    %14 = tpu.matmul %6, %13, %cst {dimension_numbers = #tpu.dot_dimension_numbers<[1], [0], [0], [1], [0, 0, 1, 1], [], []>} : vector<512x4xf32>, vector<4x32xf32>, vector<512x32xf32> -> vector<512x32xf32>
    %c0_5 = arith.constant 0 : index
    %c0_6 = arith.constant 0 : index
    %15 = vector.load %arg5[%c0_5, %c0_6] : memref<16x768xbf16, #tpu.memory_space<vmem>>, vector<16x768xbf16>
    %cst_7 = arith.constant dense<0.000000e+00> : vector<512x768xf32>
    %16 = tpu.matmul %12, %15, %cst_7 {dimension_numbers = #tpu.dot_dimension_numbers<[1], [0], [0], [1], [0, 0, 1, 1], [], []>} : vector<512x16xbf16>, vector<16x768xbf16>, vector<512x768xf32> -> vector<512x768xf32>
    %17 = arith.truncf %16 : vector<512x768xf32> to vector<512x768xbf16>
    %c0_8 = arith.constant 0 : index
    %c0_9 = arith.constant 0 : index
    %18 = vector.load %arg6[%c0_8, %c0_9] : memref<768x32xbf16, #tpu.memory_space<vmem>>, vector<768x32xbf16>
    %cst_10 = arith.constant dense<0.000000e+00> : vector<512x32xf32>
    %19 = tpu.matmul %17, %18, %cst_10 {dimension_numbers = #tpu.dot_dimension_numbers<[1], [0], [0], [1], [0, 0, 1, 1], [], []>} : vector<512x768xbf16>, vector<768x32xbf16>, vector<512x32xf32> -> vector<512x32xf32>
    %c0_11 = arith.constant 0 : index
    %c0_12 = arith.constant 0 : index
    %20 = vector.load %arg7[%c0_11, %c0_12] : memref<1x32xf32, #tpu.memory_space<vmem>>, vector<1x32xf32>
    %21 = vector.broadcast %20 : vector<1x32xf32> to vector<512x32xf32>
    %22 = arith.addf %19, %21 : vector<512x32xf32>
    %c0_13 = arith.constant 0 : index
    %c0_14 = arith.constant 0 : index
    %23 = vector.load %arg3[%c0_13, %c0_14] : memref<512x32xf32, #tpu.memory_space<vmem>>, vector<512x32xf32>
    %24 = arith.addf %22, %23 : vector<512x32xf32>
    %25 = arith.mulf %14, %24 : vector<512x32xf32>
    %c0_15 = arith.constant 0 : index
    %c0_16 = arith.constant 0 : index
    %26 = vector.load %arg8[%c0_15, %c0_16] : memref<32x128xf32, #tpu.memory_space<vmem>>, vector<32x128xf32>
    %cst_17 = arith.constant dense<0.000000e+00> : vector<512x128xf32>
    %27 = tpu.matmul %25, %26, %cst_17 {dimension_numbers = #tpu.dot_dimension_numbers<[1], [0], [0], [1], [0, 0, 1, 1], [], []>} : vector<512x32xf32>, vector<32x128xf32>, vector<512x128xf32> -> vector<512x128xf32>
    %c0_18 = arith.constant 0 : index
    %c0_19 = arith.constant 0 : index
    %28 = vector.load %arg9[%c0_18, %c0_19] : memref<1x128xf32, #tpu.memory_space<vmem>>, vector<1x128xf32>
    %29 = vector.broadcast %28 : vector<1x128xf32> to vector<512x128xf32>
    %30 = arith.addf %27, %29 : vector<512x128xf32>
    %c0_20 = arith.constant 0 : index
    %c0_21 = arith.constant 0 : index
    %31 = vector.load %arg10[%c0_20, %c0_21] : memref<512x128xf32, #tpu.memory_space<vmem>>, vector<512x128xf32>
    tpu.vector_store %arg10[%c0_20, %c0_21], %30 {strides = array<i32>} : memref<512x128xf32, #tpu.memory_space<vmem>>, vector<512x128xf32>,
    return
  }
  func.func @transform_0(%arg0: i32) -> (i32, i32) {
    %c0_i32 = arith.constant 0 : i32
    %c0_i32_0 = arith.constant 0 : i32
    return %arg0, %c0_i32 : i32, i32
  }
  func.func @transform_1(%arg0: i32) -> (i32, i32) {
    %c0_i32 = arith.constant 0 : i32
    %c0_i32_0 = arith.constant 0 : i32
    return %arg0, %c0_i32 : i32, i32
  }
  func.func @transform_2(%arg0: i32) -> (i32, i32) {
    %c0_i32 = arith.constant 0 : i32
    %c0_i32_0 = arith.constant 0 : i32
    return %arg0, %c0_i32 : i32, i32
  }
  func.func @transform_3(%arg0: i32) -> (i32, i32) {
    %c0_i32 = arith.constant 0 : i32
    %c0_i32_0 = arith.constant 0 : i32
    %c0_i32_1 = arith.constant 0 : i32
    return %c0_i32, %c0_i32_0 : i32, i32
  }
  func.func @transform_4(%arg0: i32) -> (i32, i32) {
    %c0_i32 = arith.constant 0 : i32
    %c0_i32_0 = arith.constant 0 : i32
    %c0_i32_1 = arith.constant 0 : i32
    return %c0_i32, %c0_i32_0 : i32, i32
  }
  func.func @transform_5(%arg0: i32) -> (i32, i32) {
    %c0_i32 = arith.constant 0 : i32
    %c0_i32_0 = arith.constant 0 : i32
    %c0_i32_1 = arith.constant 0 : i32
    return %c0_i32, %c0_i32_0 : i32, i32
  }
  func.func @transform_6(%arg0: i32) -> (i32, i32) {
    %c0_i32 = arith.constant 0 : i32
    %c0_i32_0 = arith.constant 0 : i32
    %c0_i32_1 = arith.constant 0 : i32
    return %c0_i32, %c0_i32_0 : i32, i32
  }
  func.func @transform_7(%arg0: i32) -> (i32, i32) {
    %c0_i32 = arith.constant 0 : i32
    %c0_i32_0 = arith.constant 0 : i32
    %c0_i32_1 = arith.constant 0 : i32
    return %c0_i32, %c0_i32_0 : i32, i32
  }
  func.func @transform_8(%arg0: i32) -> (i32, i32) {
    %c0_i32 = arith.constant 0 : i32
    %c0_i32_0 = arith.constant 0 : i32
    %c0_i32_1 = arith.constant 0 : i32
    return %c0_i32, %c0_i32_0 : i32, i32
  }
  func.func @transform_9(%arg0: i32) -> (i32, i32) {
    %c0_i32 = arith.constant 0 : i32
    %c0_i32_0 = arith.constant 0 : i32
    return %arg0, %c0_i32 : i32, i32
  }
}

</mosaic_0001>

<llo_original>
// kernel: tpu_custom_call.1
$region0: #{tpu_custom_call.1}
  #allocation0 [shape = 'u32[]', space=smem, size = 0x4, offset = 0x4, fixed_abs, tag = 'smem constant byte address 0x4 - core index']
  #allocation1 [shape = 'u32[72,128]{1,0:T(1,128)}', space=vmem, size = 0x9000, scoped, tag = 'internal scratch']
  %s0 = inlined_call_operand.vmem [shape: s32[1024,1], index: 0, kind: input, shape index: {}]
  %s1 = inlined_call_operand.vmem [shape: s32[1024,1], index: 1, kind: input, shape index: {}]
  %s2 = inlined_call_operand.vmem [shape: f32[1024,32], index: 2, kind: input, shape index: {}]
  %s3 = inlined_call_operand.vmem [shape: f32[4,32], index: 3, kind: input, shape index: {}]
  %s4 = inlined_call_operand.vmem [shape: bf16[16,768], index: 4, kind: input, shape index: {}]
  %s5 = inlined_call_operand.vmem [shape: bf16[768,32], index: 5, kind: input, shape index: {}]
  %s6 = inlined_call_operand.vmem [shape: f32[1,32], index: 6, kind: input, shape index: {}]
  %s7 = inlined_call_operand.vmem [shape: f32[32,128], index: 7, kind: input, shape index: {}]
  %s8 = inlined_call_operand.vmem [shape: f32[1,128], index: 8, kind: input, shape index: {}]
  %s9 = inlined_call_operand.hbm [shape: f32[1024,128], index: 9, kind: output, shape index: {}]
  %s10 = sld [smem:[#allocation0]]
  $region69: #{tpu_custom_call.1} parent=0
    _
  %s12 = ssub.s32 1, %s10
  %s13 = scalar_select 0, %s12, %s10
  $region1: #{tpu_custom_call.1} parent=0
    #allocation2 [shape = 'u8[524288]{0}', space=vmem, size = 0x80000, scoped, tag = 'output window, operand 0']
    #allocation3 [shape = 's32[2]{0}', space=sflag, size = 0x8, scoped, tag = 'scoped memory for tpu_custom_call.1']
    %14 = vsyncpa [#allocation3], 0
    %s15 = scalar_lea.sflag [#allocation3], 1
    %16 = vsyncpa %s15, 0
    loop: start=0, step=1, limit=4
    $region2: #{tpu_custom_call.1} parent=1 // loop_pre_header
      _
    $region3: #{tpu_custom_call.1} parent=1 // loop_header
      %s18 = sphi 0, %s22
      %p19 = scmp.ge.s32.totalorder %s18, 4
      %s28 = sphi 0, %s30
      %s31 = sphi 0, %s28
      %s32 = sphi 0, %s31
      %s48 = sphi 0, %s32
      %s54 = sphi 0, %s56
      %s57 = sphi 0, %s54
      %s58 = sphi 0, %s57
      %s74 = sphi 0, %s58
      %s80 = sphi 0, %s82
      %s83 = sphi 0, %s80
      %s84 = sphi 0, %s83
      %s100 = sphi 0, %s84
      %s104 = sphi 0, %s104
      %s106 = sphi 0, %s104
      %s107 = sphi 0, %s106
      %s121 = sphi 0, %s107
      %s125 = sphi 0, %s125
      %s127 = sphi 0, %s125
      %s128 = sphi 0, %s127
      %s142 = sphi 0, %s128
      %s146 = sphi 0, %s146
      %s148 = sphi 0, %s146
      %s149 = sphi 0, %s148
      %s163 = sphi 0, %s149
      %s167 = sphi 0, %s167
      %s169 = sphi 0, %s167
      %s170 = sphi 0, %s169
      %s184 = sphi 0, %s170
      %s188 = sphi 0, %s188
      %s190 = sphi 0, %s188
      %s191 = sphi 0, %s190
      %s205 = sphi 0, %s191
      %s209 = sphi 0, %s209
      %s211 = sphi 0, %s209
      %s212 = sphi 0, %s211
      %s226 = sphi 0, %s212
      %s232 = sphi 0, %s234
      %s235 = sphi 0, %s232
      %s236 = sphi 0, %s235
      %s252 = sphi 0, %s236
    $region4: #{tpu_custom_call.1} parent=1 // loop_header_branch
      %21 = sbr.rel (%p19) target = $region8
    $region5: #{tpu_custom_call.1} parent=1 // loop_body
      %s23 = ssub.s32 %s18, 1
      %s24 = ssub.s32 %s18, 2
      %s25 = sadd.s32 %s18, 1
      %s26 = ssub.s32 %s18, %s25
      %p27 = scmp.eq.s32.totalorder %s26, 0
      %s29 = sadd.s32 %s28, 1
      %s30 = scalar_select %p27, %s28, %s29
      %p33 = pneg %p27
      %p34 = scmp.eq.s32.totalorder %s18, 1
      %p35 = por %p33, %p34
      %p36 = scmp.ne.s32.totalorder %s28, %s31
      %p37 = scmp.eq.s32.totalorder %s18, 0
      %p38 = por %p36, %p37
      %p39 = scmp.ne.s32.totalorder %s28, %s31
      %p40 = scmp.eq.s32.totalorder %s23, 1
      %p41 = por %p39, %p40
      %p42 = scmp.ne.s32.totalorder %s31, %s32
      %p43 = scmp.eq.s32.totalorder %s23, 0
      %p44 = por %p42, %p43
      %p45 = scmp.ne.s32.totalorder %s31, %s32
      %p46 = scmp.eq.s32.totalorder %s24, 1
      %p47 = por %p45, %p46
      %p49 = scmp.ne.s32.totalorder %s32, %s48
      %p50 = scmp.eq.s32.totalorder %s24, 0
      %p51 = por %p49, %p50
      %s52 = ssub.s32 %s18, %s25
      %p53 = scmp.eq.s32.totalorder %s52, 0
      %s55 = sadd.s32 %s54, 1
      %s56 = scalar_select %p53, %s54, %s55
      %p59 = pneg %p53
      %p60 = scmp.eq.s32.totalorder %s18, 1
      %p61 = por %p59, %p60
      %p62 = scmp.ne.s32.totalorder %s54, %s57
      %p63 = scmp.eq.s32.totalorder %s18, 0
      %p64 = por %p62, %p63
      %p65 = scmp.ne.s32.totalorder %s54, %s57
      %p66 = scmp.eq.s32.totalorder %s23, 1
      %p67 = por %p65, %p66
      %p68 = scmp.ne.s32.totalorder %s57, %s58
      %p69 = scmp.eq.s32.totalorder %s23, 0
      %p70 = por %p68, %p69
      %p71 = scmp.ne.s32.totalorder %s57, %s58
      %p72 = scmp.eq.s32.totalorder %s24, 1
      %p73 = por %p71, %p72
      %p75 = scmp.ne.s32.totalorder %s58, %s74
      %p76 = scmp.eq.s32.totalorder %s24, 0
      %p77 = por %p75, %p76
      %s78 = ssub.s32 %s18, %s25
      %p79 = scmp.eq.s32.totalorder %s78, 0
      %s81 = sadd.s32 %s80, 1
      %s82 = scalar_select %p79, %s80, %s81
      %p85 = pneg %p79
      %p86 = scmp.eq.s32.totalorder %s18, 1
      %p87 = por %p85, %p86
      %p88 = scmp.ne.s32.totalorder %s80, %s83
      %p89 = scmp.eq.s32.totalorder %s18, 0
      %p90 = por %p88, %p89
      %p91 = scmp.ne.s32.totalorder %s80, %s83
      %p92 = scmp.eq.s32.totalorder %s23, 1
      %p93 = por %p91, %p92
      %p94 = scmp.ne.s32.totalorder %s83, %s84
      %p95 = scmp.eq.s32.totalorder %s23, 0
      %p96 = por %p94, %p95
      %p97 = scmp.ne.s32.totalorder %s83, %s84
      %p98 = scmp.eq.s32.totalorder %s24, 1
      %p99 = por %p97, %p98
      %p101 = scmp.ne.s32.totalorder %s84, %s100
      %p102 = scmp.eq.s32.totalorder %s24, 0
      %p103 = por %p101, %p102
      %s105 = sadd.s32 %s104, 1
      %p108 = scmp.eq.s32.totalorder %s18, 1
      %p109 = scmp.ne.s32.totalorder %s104, %s106
      %p110 = scmp.eq.s32.totalorder %s18, 0
      %p111 = por %p109, %p110
      %p112 = scmp.ne.s32.totalorder %s104, %s106
      %p113 = scmp.eq.s32.totalorder %s23, 1
      %p114 = por %p112, %p113
      %p115 = scmp.ne.s32.totalorder %s106, %s107
      %p116 = scmp.eq.s32.totalorder %s23, 0
      %p117 = por %p115, %p116
      %p118 = scmp.ne.s32.totalorder %s106, %s107
      %p119 = scmp.eq.s32.totalorder %s24, 1
      %p120 = por %p118, %p119
      %p122 = scmp.ne.s32.totalorder %s107, %s121
      %p123 = scmp.eq.s32.totalorder %s24, 0
      %p124 = por %p122, %p123
      %s126 = sadd.s32 %s125, 1
      %p129 = scmp.eq.s32.totalorder %s18, 1
      %p130 = scmp.ne.s32.totalorder %s125, %s127
      %p131 = scmp.eq.s32.totalorder %s18, 0
      %p132 = por %p130, %p131
      %p133 = scmp.ne.s32.totalorder %s125, %s127
      %p134 = scmp.eq.s32.totalorder %s23, 1
      %p135 = por %p133, %p134
      %p136 = scmp.ne.s32.totalorder %s127, %s128
      %p137 = scmp.eq.s32.totalorder %s23, 0
      %p138 = por %p136, %p137
      %p139 = scmp.ne.s32.totalorder %s127, %s128
      %p140 = scmp.eq.s32.totalorder %s24, 1
      %p141 = por %p139, %p140
      %p143 = scmp.ne.s32.totalorder %s128, %s142
      %p144 = scmp.eq.s32.totalorder %s24, 0
      %p145 = por %p143, %p144
      %s147 = sadd.s32 %s146, 1
      %p150 = scmp.eq.s32.totalorder %s18, 1
      %p151 = scmp.ne.s32.totalorder %s146, %s148
      %p152 = scmp.eq.s32.totalorder %s18, 0
      %p153 = por %p151, %p152
      %p154 = scmp.ne.s32.totalorder %s146, %s148
      %p155 = scmp.eq.s32.totalorder %s23, 1
      %p156 = por %p154, %p155
      %p157 = scmp.ne.s32.totalorder %s148, %s149
      %p158 = scmp.eq.s32.totalorder %s23, 0
      %p159 = por %p157, %p158
      %p160 = scmp.ne.s32.totalorder %s148, %s149
      %p161 = scmp.eq.s32.totalorder %s24, 1
      %p162 = por %p160, %p161
      %p164 = scmp.ne.s32.totalorder %s149, %s163
      %p165 = scmp.eq.s32.totalorder %s24, 0
      %p166 = por %p164, %p165
      %s168 = sadd.s32 %s167, 1
      %p171 = scmp.eq.s32.totalorder %s18, 1
      %p172 = scmp.ne.s32.totalorder %s167, %s169
      %p173 = scmp.eq.s32.totalorder %s18, 0
      %p174 = por %p172, %p173
      %p175 = scmp.ne.s32.totalorder %s167, %s169
      %p176 = scmp.eq.s32.totalorder %s23, 1
      %p177 = por %p175, %p176
      %p178 = scmp.ne.s32.totalorder %s169, %s170
      %p179 = scmp.eq.s32.totalorder %s23, 0
      %p180 = por %p178, %p179
      %p181 = scmp.ne.s32.totalorder %s169, %s170
      %p182 = scmp.eq.s32.totalorder %s24, 1
      %p183 = por %p181, %p182
      %p185 = scmp.ne.s32.totalorder %s170, %s184
      %p186 = scmp.eq.s32.totalorder %s24, 0
      %p187 = por %p185, %p186
      %s189 = sadd.s32 %s188, 1
      %p192 = scmp.eq.s32.totalorder %s18, 1
      %p193 = scmp.ne.s32.totalorder %s188, %s190
      %p194 = scmp.eq.s32.totalorder %s18, 0
      %p195 = por %p193, %p194
      %p196 = scmp.ne.s32.totalorder %s188, %s190
      %p197 = scmp.eq.s32.totalorder %s23, 1
      %p198 = por %p196, %p197
      %p199 = scmp.ne.s32.totalorder %s190, %s191
      %p200 = scmp.eq.s32.totalorder %s23, 0
      %p201 = por %p199, %p200
      %p202 = scmp.ne.s32.totalorder %s190, %s191
      %p203 = scmp.eq.s32.totalorder %s24, 1
      %p204 = por %p202, %p203
      %p206 = scmp.ne.s32.totalorder %s191, %s205
      %p207 = scmp.eq.s32.totalorder %s24, 0
      %p208 = por %p206, %p207
      %s210 = sadd.s32 %s209, 1
      %p213 = scmp.eq.s32.totalorder %s18, 1
      %p214 = scmp.ne.s32.totalorder %s209, %s211
      %p215 = scmp.eq.s32.totalorder %s18, 0
      %p216 = por %p214, %p215
      %p217 = scmp.ne.s32.totalorder %s209, %s211
      %p218 = scmp.eq.s32.totalorder %s23, 1
      %p219 = por %p217, %p218
      %p220 = scmp.ne.s32.totalorder %s211, %s212
      %p221 = scmp.eq.s32.totalorder %s23, 0
      %p222 = por %p220, %p221
      %p223 = scmp.ne.s32.totalorder %s211, %s212
      %p224 = scmp.eq.s32.totalorder %s24, 1
      %p225 = por %p223, %p224
      %p227 = scmp.ne.s32.totalorder %s212, %s226
      %p228 = scmp.eq.s32.totalorder %s24, 0
      %p229 = por %p227, %p228
      %s230 = ssub.s32 %s18, %s25
      %p231 = scmp.eq.s32.totalorder %s230, 0
      %s233 = sadd.s32 %s232, 1
      %s234 = scalar_select %p231, %s232, %s233
      %p237 = pneg %p231
      %p238 = scmp.eq.s32.totalorder %s18, 1
      %p239 = por %p237, %p238
      %p240 = scmp.ne.s32.totalorder %s232, %s235
      %p241 = scmp.eq.s32.totalorder %s18, 0
      %p242 = por %p240, %p241
      %p243 = scmp.ne.s32.totalorder %s232, %s235
      %p244 = scmp.eq.s32.totalorder %s23, 1
      %p245 = por %p243, %p244
      %p246 = scmp.ne.s32.totalorder %s235, %s236
      %p247 = scmp.eq.s32.totalorder %s23, 0
      %p248 = por %p246, %p247
      %p249 = scmp.ne.s32.totalorder %s235, %s236
      %p250 = scmp.eq.s32.totalorder %s24, 1
      %p251 = por %p249, %p250
      %p253 = scmp.ne.s32.totalorder %s236, %s252
      %p254 = scmp.eq.s32.totalorder %s24, 0
      %p255 = por %p253, %p254
      %p256 = scmp.le.s32.totalorder 1, %s18
      %p257 = scmp.lt.s32.totalorder %s18, 3
      %p258 = pnand %p256, %p257
      %p259 = pneg %p258
      // Predicated region
      $region9: #{tpu_custom_call.1} parent=5 // pred_check
        _
      $region10: #{tpu_custom_call.1} parent=5 // pred_check_branch
        %261 = sbr.rel (%p258) target = $region12
      $region11: #{tpu_custom_call.1} parent=5 // pred_region
        %s262 = ssub.s32 %s18, 1
        // Predicated region
        $region13: #{tpu_custom_call.1} parent=11 // pred_check
          %p263 = pneg %p117
        $region14: #{tpu_custom_call.1} parent=11 // pred_check_branch
          %265 = sbr.rel (%p263) target = $region16
        $region15: #{tpu_custom_call.1} parent=11 // pred_region
          _
        $region16: #{tpu_custom_call.1} parent=11 // pred_fallthru
          _
        // Predicated region
        $region17: #{tpu_custom_call.1} parent=11 // pred_check
          %p266 = pneg %p138
        $region18: #{tpu_custom_call.1} parent=11 // pred_check_branch
          %268 = sbr.rel (%p266) target = $region20
        $region19: #{tpu_custom_call.1} parent=11 // pred_region
          _
        $region20: #{tpu_custom_call.1} parent=11 // pred_fallthru
          _
        // Predicated region
        $region21: #{tpu_custom_call.1} parent=11 // pred_check
          %p269 = pneg %p159
        $region22: #{tpu_custom_call.1} parent=11 // pred_check_branch
          %271 = sbr.rel (%p269) target = $region24
        $region23: #{tpu_custom_call.1} parent=11 // pred_region
          _
        $region24: #{tpu_custom_call.1} parent=11 // pred_fallthru
          _
        // Predicated region
        $region25: #{tpu_custom_call.1} parent=11 // pred_check
          %p272 = pneg %p180
        $region26: #{tpu_custom_call.1} parent=11 // pred_check_branch
          %274 = sbr.rel (%p272) target = $region28
        $region27: #{tpu_custom_call.1} parent=11 // pred_region
          _
        $region28: #{tpu_custom_call.1} parent=11 // pred_fallthru
          _
        // Predicated region
        $region29: #{tpu_custom_call.1} parent=11 // pred_check
          %p275 = pneg %p201
        $region30: #{tpu_custom_call.1} parent=11 // pred_check_branch
          %277 = sbr.rel (%p275) target = $region32
        $region31: #{tpu_custom_call.1} parent=11 // pred_region
          _
        $region32: #{tpu_custom_call.1} parent=11 // pred_fallthru
          _
        // Predicated region
        $region33: #{tpu_custom_call.1} parent=11 // pred_check
          %p278 = pneg %p222
        $region34: #{tpu_custom_call.1} parent=11 // pred_check_branch
          %280 = sbr.rel (%p278) target = $region36
        $region35: #{tpu_custom_call.1} parent=11 // pred_region
          _
        $region36: #{tpu_custom_call.1} parent=11 // pred_fallthru
          _
      $region12: #{tpu_custom_call.1} parent=5 // pred_fallthru
        _
      %p281 = scmp.lt.s32.totalorder %s18, 2
      // Predicated region
      $region37: #{tpu_custom_call.1} parent=5 // pred_check
        %p282 = pneg %p281
      $region38: #{tpu_custom_call.1} parent=5 // pred_check_branch
        %284 = sbr.rel (%p282) target = $region40
      $region39: #{tpu_custom_call.1} parent=5 // pred_region
        // Predicated region
        $region41: #{tpu_custom_call.1} parent=39 // pred_check
          %p285 = pneg %p38
        $region42: #{tpu_custom_call.1} parent=39 // pred_check_branch
          %287 = sbr.rel (%p285) target = $region44
        $region43: #{tpu_custom_call.1} parent=39 // pred_region
          %s288 = smul.u32 64, %s18
          %p289 = scmp.lt.s32.totalorder %s288, 127
          %s290 = scalar_select %p289, %s288, 127
          %s291 = smul.addr %s290, 8
          %s292 = scalar_lea.vmem %s0, %s291
          %s293 = smul.u32 64, %s18
        $region44: #{tpu_custom_call.1} parent=39 // pred_fallthru
          _
        // Predicated region
        $region45: #{tpu_custom_call.1} parent=39 // pred_check
          %p294 = pneg %p64
        $region46: #{tpu_custom_call.1} parent=39 // pred_check_branch
          %296 = sbr.rel (%p294) target = $region48
        $region47: #{tpu_custom_call.1} parent=39 // pred_region
          %s297 = smul.u32 64, %s18
          %p298 = scmp.lt.s32.totalorder %s297, 127
          %s299 = scalar_select %p298, %s297, 127
          %s300 = smul.addr %s299, 8
          %s301 = scalar_lea.vmem %s1, %s300
          %s302 = smul.u32 64, %s18
        $region48: #{tpu_custom_call.1} parent=39 // pred_fallthru
          _
        // Predicated region
        $region49: #{tpu_custom_call.1} parent=39 // pred_check
          %p303 = pneg %p90
        $region50: #{tpu_custom_call.1} parent=39 // pred_check_branch
          %305 = sbr.rel (%p303) target = $region52
        $region51: #{tpu_custom_call.1} parent=39 // pred_region
          %s306 = smul.u32 64, %s18
          %p307 = scmp.lt.s32.totalorder %s306, 127
          %s308 = scalar_select %p307, %s306, 127
          %s309 = smul.addr %s308, 8
          %s310 = scalar_lea.vmem %s2, %s309
          %s311 = smul.u32 64, %s18
        $region52: #{tpu_custom_call.1} parent=39 // pred_fallthru
          _
      $region40: #{tpu_custom_call.1} parent=5 // pred_fallthru
        _
      %p312 = scmp.le.s32.totalorder 1, %s18
      %p313 = scmp.lt.s32.totalorder %s18, 3
      %p314 = pnand %p312, %p313
      %p315 = pneg %p314
      // Predicated region
      $region53: #{tpu_custom_call.1} parent=5 // pred_check
        _
      $region54: #{tpu_custom_call.1} parent=5 // pred_check_branch
        %317 = sbr.rel (%p314) target = $region56
      $region55: #{tpu_custom_call.1} parent=5 // pred_region
        %s318 = ssub.s32 %s18, 1
        %s319 = smul.u32 64, %s23
        %p320 = scmp.lt.s32.totalorder %s319, 127
        %s321 = scalar_select %p320, %s319, 127
        %s322 = smul.addr %s321, 8
        %s323 = scalar_lea.vmem %s0, %s322
        %p324 = pneg %p44
        %p325 = pneg %p41
        %s326 = smul.u32 64, %s23
        %p327 = scmp.lt.s32.totalorder %s326, 127
        %s328 = scalar_select %p327, %s326, 127
        %s329 = smul.addr %s328, 8
        %s330 = scalar_lea.vmem %s1, %s329
        %p331 = pneg %p70
        %p332 = pneg %p67
        %s333 = smul.u32 64, %s23
        %p334 = scmp.lt.s32.totalorder %s333, 127
        %s335 = scalar_select %p334, %s333, 127
        %s336 = smul.addr %s335, 8
        %s337 = scalar_lea.vmem %s2, %s336
        %p338 = pneg %p96
        %p339 = pneg %p93
        %p340 = pneg %p117
        %p341 = pneg %p114
        %p342 = pneg %p138
        %p343 = pneg %p135
        %p344 = pneg %p159
        %p345 = pneg %p156
        %p346 = pneg %p180
        %p347 = pneg %p177
        %p348 = pneg %p201
        %p349 = pneg %p198
        %p350 = pneg %p222
        %p351 = pneg %p219
        %p352 = pneg %p248
        %p353 = pneg %p245
        %s354 = sand.u32 %s235, 1
        %s355 = scalar_lea.sflag [#allocation3], %s354
        %s356 = sand.u32 %s235, 1
        %s357 = smul.addr %s356, 512
        %s358 = scalar_lea.vmem [#allocation2], %s357
        %s359 = smul.u32 64, %s23
        %p360 = scmp.lt.s32.totalorder %s359, 127
        %s361 = scalar_select %p360, %s359, 127
        %s362 = smul.addr %s361, 8
        %s363 = scalar_lea.vmem %s0, %s362
        %s364 = smul.u32 64, %s23
        %s365 = smul.u32 64, %s23
        %p366 = scmp.lt.s32.totalorder %s365, 127
        %s367 = scalar_select %p366, %s365, 127
        %s368 = smul.addr %s367, 8
        %s369 = scalar_lea.vmem %s1, %s368
        %s370 = smul.u32 64, %s23
        %s371 = smul.u32 64, %s23
        %p372 = scmp.lt.s32.totalorder %s371, 127
        %s373 = scalar_select %p372, %s371, 127
        %s374 = smul.addr %s373, 8
        %s375 = scalar_lea.vmem %s2, %s374
        %s376 = smul.u32 64, %s23
        %s377 = smul.u32 64, %s23
        %v379 = vld [vmem:[%s363] sm:$0xff]
        %v380 = vld [vmem:[%s363 + $0x8] sm:$0xff]
        %v381 = vld [vmem:[%s363 + $0x10] sm:$0xff]
        %v382 = vld [vmem:[%s363 + $0x18] sm:$0xff]
        %v383 = vld [vmem:[%s363 + $0x20] sm:$0xff]
        %v384 = vld [vmem:[%s363 + $0x28] sm:$0xff]
        %v385 = vld [vmem:[%s363 + $0x30] sm:$0xff]
        %v386 = vld [vmem:[%s363 + $0x38] sm:$0xff]
        %v387 = vld [vmem:[%s363 + $0x40] sm:$0xff]
        %v388 = vld [vmem:[%s363 + $0x48] sm:$0xff]
        %v389 = vld [vmem:[%s363 + $0x50] sm:$0xff]
        %v390 = vld [vmem:[%s363 + $0x58] sm:$0xff]
        %v391 = vld [vmem:[%s363 + $0x60] sm:$0xff]
        %v392 = vld [vmem:[%s363 + $0x68] sm:$0xff]
        %v393 = vld [vmem:[%s363 + $0x70] sm:$0xff]
        %v394 = vld [vmem:[%s363 + $0x78] sm:$0xff]
        %v395 = vld [vmem:[%s363 + $0x80] sm:$0xff]
        %v396 = vld [vmem:[%s363 + $0x88] sm:$0xff]
        %v397 = vld [vmem:[%s363 + $0x90] sm:$0xff]
        %v398 = vld [vmem:[%s363 + $0x98] sm:$0xff]
        %v399 = vld [vmem:[%s363 + $0xa0] sm:$0xff]
        %v400 = vld [vmem:[%s363 + $0xa8] sm:$0xff]
        %v401 = vld [vmem:[%s363 + $0xb0] sm:$0xff]
        %v402 = vld [vmem:[%s363 + $0xb8] sm:$0xff]
        %v403 = vld [vmem:[%s363 + $0xc0] sm:$0xff]
        %v404 = vld [vmem:[%s363 + $0xc8] sm:$0xff]
        %v405 = vld [vmem:[%s363 + $0xd0] sm:$0xff]
        %v406 = vld [vmem:[%s363 + $0xd8] sm:$0xff]
        %v407 = vld [vmem:[%s363 + $0xe0] sm:$0xff]
        %v408 = vld [vmem:[%s363 + $0xe8] sm:$0xff]
        %v409 = vld [vmem:[%s363 + $0xf0] sm:$0xff]
        %v410 = vld [vmem:[%s363 + $0xf8] sm:$0xff]
        %v411 = vld [vmem:[%s363 + $0x100] sm:$0xff]
        %v412 = vld [vmem:[%s363 + $0x108] sm:$0xff]
        %v413 = vld [vmem:[%s363 + $0x110] sm:$0xff]
        %v414 = vld [vmem:[%s363 + $0x118] sm:$0xff]
        %v415 = vld [vmem:[%s363 + $0x120] sm:$0xff]
        %v416 = vld [vmem:[%s363 + $0x128] sm:$0xff]
        %v417 = vld [vmem:[%s363 + $0x130] sm:$0xff]
        %v418 = vld [vmem:[%s363 + $0x138] sm:$0xff]
        %v419 = vld [vmem:[%s363 + $0x140] sm:$0xff]
        %v420 = vld [vmem:[%s363 + $0x148] sm:$0xff]
        %v421 = vld [vmem:[%s363 + $0x150] sm:$0xff]
        %v422 = vld [vmem:[%s363 + $0x158] sm:$0xff]
        %v423 = vld [vmem:[%s363 + $0x160] sm:$0xff]
        %v424 = vld [vmem:[%s363 + $0x168] sm:$0xff]
        %v425 = vld [vmem:[%s363 + $0x170] sm:$0xff]
        %v426 = vld [vmem:[%s363 + $0x178] sm:$0xff]
        %v427 = vld [vmem:[%s363 + $0x180] sm:$0xff]
        %v428 = vld [vmem:[%s363 + $0x188] sm:$0xff]
        %v429 = vld [vmem:[%s363 + $0x190] sm:$0xff]
        %v430 = vld [vmem:[%s363 + $0x198] sm:$0xff]
        %v431 = vld [vmem:[%s363 + $0x1a0] sm:$0xff]
        %v432 = vld [vmem:[%s363 + $0x1a8] sm:$0xff]
        %v433 = vld [vmem:[%s363 + $0x1b0] sm:$0xff]
        %v434 = vld [vmem:[%s363 + $0x1b8] sm:$0xff]
        %v435 = vld [vmem:[%s363 + $0x1c0] sm:$0xff]
        %v436 = vld [vmem:[%s363 + $0x1c8] sm:$0xff]
        %v437 = vld [vmem:[%s363 + $0x1d0] sm:$0xff]
        %v438 = vld [vmem:[%s363 + $0x1d8] sm:$0xff]
        %v439 = vld [vmem:[%s363 + $0x1e0] sm:$0xff]
        %v440 = vld [vmem:[%s363 + $0x1e8] sm:$0xff]
        %v441 = vld [vmem:[%s363 + $0x1f0] sm:$0xff]
        %v442 = vld [vmem:[%s363 + $0x1f8] sm:$0xff]
        %v443 = vld [vmem:[%s369] sm:$0xff]
        %v444 = vld [vmem:[%s369 + $0x8] sm:$0xff]
        %v445 = vld [vmem:[%s369 + $0x10] sm:$0xff]
        %v446 = vld [vmem:[%s369 + $0x18] sm:$0xff]
        %v447 = vld [vmem:[%s369 + $0x20] sm:$0xff]
        %v448 = vld [vmem:[%s369 + $0x28] sm:$0xff]
        %v449 = vld [vmem:[%s369 + $0x30] sm:$0xff]
        %v450 = vld [vmem:[%s369 + $0x38] sm:$0xff]
        %v451 = vld [vmem:[%s369 + $0x40] sm:$0xff]
        %v452 = vld [vmem:[%s369 + $0x48] sm:$0xff]
        %v453 = vld [vmem:[%s369 + $0x50] sm:$0xff]
        %v454 = vld [vmem:[%s369 + $0x58] sm:$0xff]
        %v455 = vld [vmem:[%s369 + $0x60] sm:$0xff]
        %v456 = vld [vmem:[%s369 + $0x68] sm:$0xff]
        %v457 = vld [vmem:[%s369 + $0x70] sm:$0xff]
        %v458 = vld [vmem:[%s369 + $0x78] sm:$0xff]
        %v459 = vld [vmem:[%s369 + $0x80] sm:$0xff]
        %v460 = vld [vmem:[%s369 + $0x88] sm:$0xff]
        %v461 = vld [vmem:[%s369 + $0x90] sm:$0xff]
        %v462 = vld [vmem:[%s369 + $0x98] sm:$0xff]
        %v463 = vld [vmem:[%s369 + $0xa0] sm:$0xff]
        %v464 = vld [vmem:[%s369 + $0xa8] sm:$0xff]
        %v465 = vld [vmem:[%s369 + $0xb0] sm:$0xff]
        %v466 = vld [vmem:[%s369 + $0xb8] sm:$0xff]
        %v467 = vld [vmem:[%s369 + $0xc0] sm:$0xff]
        %v468 = vld [vmem:[%s369 + $0xc8] sm:$0xff]
        %v469 = vld [vmem:[%s369 + $0xd0] sm:$0xff]
        %v470 = vld [vmem:[%s369 + $0xd8] sm:$0xff]
        %v471 = vld [vmem:[%s369 + $0xe0] sm:$0xff]
        %v472 = vld [vmem:[%s369 + $0xe8] sm:$0xff]
        %v473 = vld [vmem:[%s369 + $0xf0] sm:$0xff]
        %v474 = vld [vmem:[%s369 + $0xf8] sm:$0xff]
        %v475 = vld [vmem:[%s369 + $0x100] sm:$0xff]
        %v476 = vld [vmem:[%s369 + $0x108] sm:$0xff]
        %v477 = vld [vmem:[%s369 + $0x110] sm:$0xff]
        %v478 = vld [vmem:[%s369 + $0x118] sm:$0xff]
        %v479 = vld [vmem:[%s369 + $0x120] sm:$0xff]
        %v480 = vld [vmem:[%s369 + $0x128] sm:$0xff]
        %v481 = vld [vmem:[%s369 + $0x130] sm:$0xff]
        %v482 = vld [vmem:[%s369 + $0x138] sm:$0xff]
        %v483 = vld [vmem:[%s369 + $0x140] sm:$0xff]
        %v484 = vld [vmem:[%s369 + $0x148] sm:$0xff]
        %v485 = vld [vmem:[%s369 + $0x150] sm:$0xff]
        %v486 = vld [vmem:[%s369 + $0x158] sm:$0xff]
        %v487 = vld [vmem:[%s369 + $0x160] sm:$0xff]
        %v488 = vld [vmem:[%s369 + $0x168] sm:$0xff]
        %v489 = vld [vmem:[%s369 + $0x170] sm:$0xff]
        %v490 = vld [vmem:[%s369 + $0x178] sm:$0xff]
        %v491 = vld [vmem:[%s369 + $0x180] sm:$0xff]
        %v492 = vld [vmem:[%s369 + $0x188] sm:$0xff]
        %v493 = vld [vmem:[%s369 + $0x190] sm:$0xff]
        %v494 = vld [vmem:[%s369 + $0x198] sm:$0xff]
        %v495 = vld [vmem:[%s369 + $0x1a0] sm:$0xff]
        %v496 = vld [vmem:[%s369 + $0x1a8] sm:$0xff]
        %v497 = vld [vmem:[%s369 + $0x1b0] sm:$0xff]
        %v498 = vld [vmem:[%s369 + $0x1b8] sm:$0xff]
        %v499 = vld [vmem:[%s369 + $0x1c0] sm:$0xff]
        %v500 = vld [vmem:[%s369 + $0x1c8] sm:$0xff]
        %v501 = vld [vmem:[%s369 + $0x1d0] sm:$0xff]
        %v502 = vld [vmem:[%s369 + $0x1d8] sm:$0xff]
        %v503 = vld [vmem:[%s369 + $0x1e0] sm:$0xff]
        %v504 = vld [vmem:[%s369 + $0x1e8] sm:$0xff]
        %v505 = vld [vmem:[%s369 + $0x1f0] sm:$0xff]
        %v506 = vld [vmem:[%s369 + $0x1f8] sm:$0xff]
        %v507 = vlaneseq
        %v508 = vand.u32 %v507, 127
        %509 = vset.pattern.permute.xlu0 0
        %510 = vperm.xlu0 %509, %v379
        %v511 = vpop.permute.xlu0 %510
        %512 = vset.pattern.permute.xlu0 0
        %513 = vperm.xlu0 %512, %v380
        %v514 = vpop.permute.xlu0 %513
        %515 = vset.pattern.permute.xlu0 0
        %516 = vperm.xlu0 %515, %v381
        %v517 = vpop.permute.xlu0 %516
        %518 = vset.pattern.permute.xlu0 0
        %519 = vperm.xlu0 %518, %v382
        %v520 = vpop.permute.xlu0 %519
        %521 = vset.pattern.permute.xlu0 0
        %522 = vperm.xlu0 %521, %v383
        %v523 = vpop.permute.xlu0 %522
        %524 = vset.pattern.permute.xlu0 0
        %525 = vperm.xlu0 %524, %v384
        %v526 = vpop.permute.xlu0 %525
        %527 = vset.pattern.permute.xlu0 0
        %528 = vperm.xlu0 %527, %v385
        %v529 = vpop.permute.xlu0 %528
        %530 = vset.pattern.permute.xlu0 0
        %531 = vperm.xlu0 %530, %v386
        %v532 = vpop.permute.xlu0 %531
        %533 = vset.pattern.permute.xlu0 0
        %534 = vperm.xlu0 %533, %v387
        %v535 = vpop.permute.xlu0 %534
        %536 = vset.pattern.permute.xlu0 0
        %537 = vperm.xlu0 %536, %v388
        %v538 = vpop.permute.xlu0 %537
        %539 = vset.pattern.permute.xlu0 0
        %540 = vperm.xlu0 %539, %v389
        %v541 = vpop.permute.xlu0 %540
        %542 = vset.pattern.permute.xlu0 0
        %543 = vperm.xlu0 %542, %v390
        %v544 = vpop.permute.xlu0 %543
        %545 = vset.pattern.permute.xlu0 0
        %546 = vperm.xlu0 %545, %v391
        %v547 = vpop.permute.xlu0 %546
        %548 = vset.pattern.permute.xlu0 0
        %549 = vperm.xlu0 %548, %v392
        %v550 = vpop.permute.xlu0 %549
        %551 = vset.pattern.permute.xlu0 0
        %552 = vperm.xlu0 %551, %v393
        %v553 = vpop.permute.xlu0 %552
        %554 = vset.pattern.permute.xlu0 0
        %555 = vperm.xlu0 %554, %v394
        %v556 = vpop.permute.xlu0 %555
        %557 = vset.pattern.permute.xlu0 0
        %558 = vperm.xlu0 %557, %v395
        %v559 = vpop.permute.xlu0 %558
        %560 = vset.pattern.permute.xlu0 0
        %561 = vperm.xlu0 %560, %v396
        %v562 = vpop.permute.xlu0 %561
        %563 = vset.pattern.permute.xlu0 0
        %564 = vperm.xlu0 %563, %v397
        %v565 = vpop.permute.xlu0 %564
        %566 = vset.pattern.permute.xlu0 0
        %567 = vperm.xlu0 %566, %v398
        %v568 = vpop.permute.xlu0 %567
        %569 = vset.pattern.permute.xlu0 0
        %570 = vperm.xlu0 %569, %v399
        %v571 = vpop.permute.xlu0 %570
        %572 = vset.pattern.permute.xlu0 0
        %573 = vperm.xlu0 %572, %v400
        %v574 = vpop.permute.xlu0 %573
        %575 = vset.pattern.permute.xlu0 0
        %576 = vperm.xlu0 %575, %v401
        %v577 = vpop.permute.xlu0 %576
        %578 = vset.pattern.permute.xlu0 0
        %579 = vperm.xlu0 %578, %v402
        %v580 = vpop.permute.xlu0 %579
        %581 = vset.pattern.permute.xlu0 0
        %582 = vperm.xlu0 %581, %v403
        %v583 = vpop.permute.xlu0 %582
        %584 = vset.pattern.permute.xlu0 0
        %585 = vperm.xlu0 %584, %v404
        %v586 = vpop.permute.xlu0 %585
        %587 = vset.pattern.permute.xlu0 0
        %588 = vperm.xlu0 %587, %v405
        %v589 = vpop.permute.xlu0 %588
        %590 = vset.pattern.permute.xlu0 0
        %591 = vperm.xlu0 %590, %v406
        %v592 = vpop.permute.xlu0 %591
        %593 = vset.pattern.permute.xlu0 0
        %594 = vperm.xlu0 %593, %v407
        %v595 = vpop.permute.xlu0 %594
        %596 = vset.pattern.permute.xlu0 0
        %597 = vperm.xlu0 %596, %v408
        %v598 = vpop.permute.xlu0 %597
        %599 = vset.pattern.permute.xlu0 0
        %600 = vperm.xlu0 %599, %v409
        %v601 = vpop.permute.xlu0 %600
        %602 = vset.pattern.permute.xlu0 0
        %603 = vperm.xlu0 %602, %v410
        %v604 = vpop.permute.xlu0 %603
        %605 = vset.pattern.permute.xlu0 0
        %606 = vperm.xlu0 %605, %v411
        %v607 = vpop.permute.xlu0 %606
        %608 = vset.pattern.permute.xlu0 0
        %609 = vperm.xlu0 %608, %v412
        %v610 = vpop.permute.xlu0 %609
        %611 = vset.pattern.permute.xlu0 0
        %612 = vperm.xlu0 %611, %v413
        %v613 = vpop.permute.xlu0 %612
        %614 = vset.pattern.permute.xlu0 0
        %615 = vperm.xlu0 %614, %v414
        %v616 = vpop.permute.xlu0 %615
        %617 = vset.pattern.permute.xlu0 0
        %618 = vperm.xlu0 %617, %v415
        %v619 = vpop.permute.xlu0 %618
        %620 = vset.pattern.permute.xlu0 0
        %621 = vperm.xlu0 %620, %v416
        %v622 = vpop.permute.xlu0 %621
        %623 = vset.pattern.permute.xlu0 0
        %624 = vperm.xlu0 %623, %v417
        %v625 = vpop.permute.xlu0 %624
        %626 = vset.pattern.permute.xlu0 0
        %627 = vperm.xlu0 %626, %v418
        %v628 = vpop.permute.xlu0 %627
        %629 = vset.pattern.permute.xlu0 0
        %630 = vperm.xlu0 %629, %v419
        %v631 = vpop.permute.xlu0 %630
        %632 = vset.pattern.permute.xlu0 0
        %633 = vperm.xlu0 %632, %v420
        %v634 = vpop.permute.xlu0 %633
        %635 = vset.pattern.permute.xlu0 0
        %636 = vperm.xlu0 %635, %v421
        %v637 = vpop.permute.xlu0 %636
        %638 = vset.pattern.permute.xlu0 0
        %639 = vperm.xlu0 %638, %v422
        %v640 = vpop.permute.xlu0 %639
        %641 = vset.pattern.permute.xlu0 0
        %642 = vperm.xlu0 %641, %v423
        %v643 = vpop.permute.xlu0 %642
        %644 = vset.pattern.permute.xlu0 0
        %645 = vperm.xlu0 %644, %v424
        %v646 = vpop.permute.xlu0 %645
        %647 = vset.pattern.permute.xlu0 0
        %648 = vperm.xlu0 %647, %v425
        %v649 = vpop.permute.xlu0 %648
        %650 = vset.pattern.permute.xlu0 0
        %651 = vperm.xlu0 %650, %v426
        %v652 = vpop.permute.xlu0 %651
        %653 = vset.pattern.permute.xlu0 0
        %654 = vperm.xlu0 %653, %v427
        %v655 = vpop.permute.xlu0 %654
        %656 = vset.pattern.permute.xlu0 0
        %657 = vperm.xlu0 %656, %v428
        %v658 = vpop.permute.xlu0 %657
        %659 = vset.pattern.permute.xlu0 0
        %660 = vperm.xlu0 %659, %v429
        %v661 = vpop.permute.xlu0 %660
        %662 = vset.pattern.permute.xlu0 0
        %663 = vperm.xlu0 %662, %v430
        %v664 = vpop.permute.xlu0 %663
        %665 = vset.pattern.permute.xlu0 0
        %666 = vperm.xlu0 %665, %v431
        %v667 = vpop.permute.xlu0 %666
        %668 = vset.pattern.permute.xlu0 0
        %669 = vperm.xlu0 %668, %v432
        %v670 = vpop.permute.xlu0 %669
        %671 = vset.pattern.permute.xlu0 0
        %672 = vperm.xlu0 %671, %v433
        %v673 = vpop.permute.xlu0 %672
        %674 = vset.pattern.permute.xlu0 0
        %675 = vperm.xlu0 %674, %v434
        %v676 = vpop.permute.xlu0 %675
        %677 = vset.pattern.permute.xlu0 0
        %678 = vperm.xlu0 %677, %v435
        %v679 = vpop.permute.xlu0 %678
        %680 = vset.pattern.permute.xlu0 0
        %681 = vperm.xlu0 %680, %v436
        %v682 = vpop.permute.xlu0 %681
        %683 = vset.pattern.permute.xlu0 0
        %684 = vperm.xlu0 %683, %v437
        %v685 = vpop.permute.xlu0 %684
        %686 = vset.pattern.permute.xlu0 0
        %687 = vperm.xlu0 %686, %v438
        %v688 = vpop.permute.xlu0 %687
        %689 = vset.pattern.permute.xlu0 0
        %690 = vperm.xlu0 %689, %v439
        %v691 = vpop.permute.xlu0 %690
        %692 = vset.pattern.permute.xlu0 0
        %693 = vperm.xlu0 %692, %v440
        %v694 = vpop.permute.xlu0 %693
        %695 = vset.pattern.permute.xlu0 0
        %696 = vperm.xlu0 %695, %v441
        %v697 = vpop.permute.xlu0 %696
        %698 = vset.pattern.permute.xlu0 0
        %699 = vperm.xlu0 %698, %v442
        %v700 = vpop.permute.xlu0 %699
        %vm701 = vcmp.eq.s32.totalorder %v511, %v508
        %vm702 = vcmp.eq.s32.totalorder %v514, %v508
        %vm703 = vcmp.eq.s32.totalorder %v517, %v508
        %vm704 = vcmp.eq.s32.totalorder %v520, %v508
        %vm705 = vcmp.eq.s32.totalorder %v523, %v508
        %vm706 = vcmp.eq.s32.totalorder %v526, %v508
        %vm707 = vcmp.eq.s32.totalorder %v529, %v508
        %vm708 = vcmp.eq.s32.totalorder %v532, %v508
        %vm709 = vcmp.eq.s32.totalorder %v535, %v508
        %vm710 = vcmp.eq.s32.totalorder %v538, %v508
        %vm711 = vcmp.eq.s32.totalorder %v541, %v508
        %vm712 = vcmp.eq.s32.totalorder %v544, %v508
        %vm713 = vcmp.eq.s32.totalorder %v547, %v508
        %vm714 = vcmp.eq.s32.totalorder %v550, %v508
        %vm715 = vcmp.eq.s32.totalorder %v553, %v508
        %vm716 = vcmp.eq.s32.totalorder %v556, %v508
        %vm717 = vcmp.eq.s32.totalorder %v559, %v508
        %vm718 = vcmp.eq.s32.totalorder %v562, %v508
        %vm719 = vcmp.eq.s32.totalorder %v565, %v508
        %vm720 = vcmp.eq.s32.totalorder %v568, %v508
        %vm721 = vcmp.eq.s32.totalorder %v571, %v508
        %vm722 = vcmp.eq.s32.totalorder %v574, %v508
        %vm723 = vcmp.eq.s32.totalorder %v577, %v508
        %vm724 = vcmp.eq.s32.totalorder %v580, %v508
        %vm725 = vcmp.eq.s32.totalorder %v583, %v508
        %vm726 = vcmp.eq.s32.totalorder %v586, %v508
        %vm727 = vcmp.eq.s32.totalorder %v589, %v508
        %vm728 = vcmp.eq.s32.totalorder %v592, %v508
        %vm729 = vcmp.eq.s32.totalorder %v595, %v508
        %vm730 = vcmp.eq.s32.totalorder %v598, %v508
        %vm731 = vcmp.eq.s32.totalorder %v601, %v508
        %vm732 = vcmp.eq.s32.totalorder %v604, %v508
        %vm733 = vcmp.eq.s32.totalorder %v607, %v508
        %vm734 = vcmp.eq.s32.totalorder %v610, %v508
        %vm735 = vcmp.eq.s32.totalorder %v613, %v508
        %vm736 = vcmp.eq.s32.totalorder %v616, %v508
        %vm737 = vcmp.eq.s32.totalorder %v619, %v508
        %vm738 = vcmp.eq.s32.totalorder %v622, %v508
        %vm739 = vcmp.eq.s32.totalorder %v625, %v508
        %vm740 = vcmp.eq.s32.totalorder %v628, %v508
        %vm741 = vcmp.eq.s32.totalorder %v631, %v508
        %vm742 = vcmp.eq.s32.totalorder %v634, %v508
        %vm743 = vcmp.eq.s32.totalorder %v637, %v508
        %vm744 = vcmp.eq.s32.totalorder %v640, %v508
        %vm745 = vcmp.eq.s32.totalorder %v643, %v508
        %vm746 = vcmp.eq.s32.totalorder %v646, %v508
        %vm747 = vcmp.eq.s32.totalorder %v649, %v508
        %vm748 = vcmp.eq.s32.totalorder %v652, %v508
        %vm749 = vcmp.eq.s32.totalorder %v655, %v508
        %vm750 = vcmp.eq.s32.totalorder %v658, %v508
        %vm751 = vcmp.eq.s32.totalorder %v661, %v508
        %vm752 = vcmp.eq.s32.totalorder %v664, %v508
        %vm753 = vcmp.eq.s32.totalorder %v667, %v508
        %vm754 = vcmp.eq.s32.totalorder %v670, %v508
        %vm755 = vcmp.eq.s32.totalorder %v673, %v508
        %vm756 = vcmp.eq.s32.totalorder %v676, %v508
        %vm757 = vcmp.eq.s32.totalorder %v679, %v508
        %vm758 = vcmp.eq.s32.totalorder %v682, %v508
        %vm759 = vcmp.eq.s32.totalorder %v685, %v508
        %vm760 = vcmp.eq.s32.totalorder %v688, %v508
        %vm761 = vcmp.eq.s32.totalorder %v691, %v508
        %vm762 = vcmp.eq.s32.totalorder %v694, %v508
        %vm763 = vcmp.eq.s32.totalorder %v697, %v508
        %vm764 = vcmp.eq.s32.totalorder %v700, %v508
        %v765 = vsel %vm701, 1, 0
        %v766 = vsel %vm702, 1, 0
        %v767 = vsel %vm703, 1, 0
        %v768 = vsel %vm704, 1, 0
        %v769 = vsel %vm705, 1, 0
        %v770 = vsel %vm706, 1, 0
        %v771 = vsel %vm707, 1, 0
        %v772 = vsel %vm708, 1, 0
        %v773 = vsel %vm709, 1, 0
        %v774 = vsel %vm710, 1, 0
        %v775 = vsel %vm711, 1, 0
        %v776 = vsel %vm712, 1, 0
        %v777 = vsel %vm713, 1, 0
        %v778 = vsel %vm714, 1, 0
        %v779 = vsel %vm715, 1, 0
        %v780 = vsel %vm716, 1, 0
        %v781 = vsel %vm717, 1, 0
        %v782 = vsel %vm718, 1, 0
        %v783 = vsel %vm719, 1, 0
        %v784 = vsel %vm720, 1, 0
        %v785 = vsel %vm721, 1, 0
        %v786 = vsel %vm722, 1, 0
        %v787 = vsel %vm723, 1, 0
        %v788 = vsel %vm724, 1, 0
        %v789 = vsel %vm725, 1, 0
        %v790 = vsel %vm726, 1, 0
        %v791 = vsel %vm727, 1, 0
        %v792 = vsel %vm728, 1, 0
        %v793 = vsel %vm729, 1, 0
        %v794 = vsel %vm730, 1, 0
        %v795 = vsel %vm731, 1, 0
        %v796 = vsel %vm732, 1, 0
        %v797 = vsel %vm733, 1, 0
        %v798 = vsel %vm734, 1, 0
        %v799 = vsel %vm735, 1, 0
        %v800 = vsel %vm736, 1, 0
        %v801 = vsel %vm737, 1, 0
        %v802 = vsel %vm738, 1, 0
        %v803 = vsel %vm739, 1, 0
        %v804 = vsel %vm740, 1, 0
        %v805 = vsel %vm741, 1, 0
        %v806 = vsel %vm742, 1, 0
        %v807 = vsel %vm743, 1, 0
        %v808 = vsel %vm744, 1, 0
        %v809 = vsel %vm745, 1, 0
        %v810 = vsel %vm746, 1, 0
        %v811 = vsel %vm747, 1, 0
        %v812 = vsel %vm748, 1, 0
        %v813 = vsel %vm749, 1, 0
        %v814 = vsel %vm750, 1, 0
        %v815 = vsel %vm751, 1, 0
        %v816 = vsel %vm752, 1, 0
        %v817 = vsel %vm753, 1, 0
        %v818 = vsel %vm754, 1, 0
        %v819 = vsel %vm755, 1, 0
        %v820 = vsel %vm756, 1, 0
        %v821 = vsel %vm757, 1, 0
        %v822 = vsel %vm758, 1, 0
        %v823 = vsel %vm759, 1, 0
        %v824 = vsel %vm760, 1, 0
        %v825 = vsel %vm761, 1, 0
        %v826 = vsel %vm762, 1, 0
        %v827 = vsel %vm763, 1, 0
        %v828 = vsel %vm764, 1, 0
        %v829 = vcvt.s32.f32 %v765
        %v830 = vcvt.s32.f32 %v766
        %v831 = vcvt.s32.f32 %v767
        %v832 = vcvt.s32.f32 %v768
        %v833 = vcvt.s32.f32 %v769
        %v834 = vcvt.s32.f32 %v770
        %v835 = vcvt.s32.f32 %v771
        %v836 = vcvt.s32.f32 %v772
        %v837 = vcvt.s32.f32 %v773
        %v838 = vcvt.s32.f32 %v774
        %v839 = vcvt.s32.f32 %v775
        %v840 = vcvt.s32.f32 %v776
        %v841 = vcvt.s32.f32 %v777
        %v842 = vcvt.s32.f32 %v778
        %v843 = vcvt.s32.f32 %v779
        %v844 = vcvt.s32.f32 %v780
        %v845 = vcvt.s32.f32 %v781
        %v846 = vcvt.s32.f32 %v782
        %v847 = vcvt.s32.f32 %v783
        %v848 = vcvt.s32.f32 %v784
        %v849 = vcvt.s32.f32 %v785
        %v850 = vcvt.s32.f32 %v786
        %v851 = vcvt.s32.f32 %v787
        %v852 = vcvt.s32.f32 %v788
        %v853 = vcvt.s32.f32 %v789
        %v854 = vcvt.s32.f32 %v790
        %v855 = vcvt.s32.f32 %v791
        %v856 = vcvt.s32.f32 %v792
        %v857 = vcvt.s32.f32 %v793
        %v858 = vcvt.s32.f32 %v794
        %v859 = vcvt.s32.f32 %v795
        %v860 = vcvt.s32.f32 %v796
        %v861 = vcvt.s32.f32 %v797
        %v862 = vcvt.s32.f32 %v798
        %v863 = vcvt.s32.f32 %v799
        %v864 = vcvt.s32.f32 %v800
        %v865 = vcvt.s32.f32 %v801
        %v866 = vcvt.s32.f32 %v802
        %v867 = vcvt.s32.f32 %v803
        %v868 = vcvt.s32.f32 %v804
        %v869 = vcvt.s32.f32 %v805
        %v870 = vcvt.s32.f32 %v806
        %v871 = vcvt.s32.f32 %v807
        %v872 = vcvt.s32.f32 %v808
        %v873 = vcvt.s32.f32 %v809
        %v874 = vcvt.s32.f32 %v810
        %v875 = vcvt.s32.f32 %v811
        %v876 = vcvt.s32.f32 %v812
        %v877 = vcvt.s32.f32 %v813
        %v878 = vcvt.s32.f32 %v814
        %v879 = vcvt.s32.f32 %v815
        %v880 = vcvt.s32.f32 %v816
        %v881 = vcvt.s32.f32 %v817
        %v882 = vcvt.s32.f32 %v818
        %v883 = vcvt.s32.f32 %v819
        %v884 = vcvt.s32.f32 %v820
        %v885 = vcvt.s32.f32 %v821
        %v886 = vcvt.s32.f32 %v822
        %v887 = vcvt.s32.f32 %v823
        %v888 = vcvt.s32.f32 %v824
        %v889 = vcvt.s32.f32 %v825
        %v890 = vcvt.s32.f32 %v826
        %v891 = vcvt.s32.f32 %v827
        %v892 = vcvt.s32.f32 %v828
        %893 = vset.pattern.permute.xlu0 0
        %894 = vperm.xlu0 %893, %v443
        %v895 = vpop.permute.xlu0 %894
        %896 = vset.pattern.permute.xlu0 0
        %897 = vperm.xlu0 %896, %v444
        %v898 = vpop.permute.xlu0 %897
        %899 = vset.pattern.permute.xlu0 0
        %900 = vperm.xlu0 %899, %v445
        %v901 = vpop.permute.xlu0 %900
        %902 = vset.pattern.permute.xlu0 0
        %903 = vperm.xlu0 %902, %v446
        %v904 = vpop.permute.xlu0 %903
        %905 = vset.pattern.permute.xlu0 0
        %906 = vperm.xlu0 %905, %v447
        %v907 = vpop.permute.xlu0 %906
        %908 = vset.pattern.permute.xlu0 0
        %909 = vperm.xlu0 %908, %v448
        %v910 = vpop.permute.xlu0 %909
        %911 = vset.pattern.permute.xlu0 0
        %912 = vperm.xlu0 %911, %v449
        %v913 = vpop.permute.xlu0 %912
        %914 = vset.pattern.permute.xlu0 0
        %915 = vperm.xlu0 %914, %v450
        %v916 = vpop.permute.xlu0 %915
        %917 = vset.pattern.permute.xlu0 0
        %918 = vperm.xlu0 %917, %v451
        %v919 = vpop.permute.xlu0 %918
        %920 = vset.pattern.permute.xlu0 0
        %921 = vperm.xlu0 %920, %v452
        %v922 = vpop.permute.xlu0 %921
        %923 = vset.pattern.permute.xlu0 0
        %924 = vperm.xlu0 %923, %v453
        %v925 = vpop.permute.xlu0 %924
        %926 = vset.pattern.permute.xlu0 0
        %927 = vperm.xlu0 %926, %v454
        %v928 = vpop.permute.xlu0 %927
        %929 = vset.pattern.permute.xlu0 0
        %930 = vperm.xlu0 %929, %v455
        %v931 = vpop.permute.xlu0 %930
        %932 = vset.pattern.permute.xlu0 0
        %933 = vperm.xlu0 %932, %v456
        %v934 = vpop.permute.xlu0 %933
        %935 = vset.pattern.permute.xlu0 0
        %936 = vperm.xlu0 %935, %v457
        %v937 = vpop.permute.xlu0 %936
        %938 = vset.pattern.permute.xlu0 0
        %939 = vperm.xlu0 %938, %v458
        %v940 = vpop.permute.xlu0 %939
        %941 = vset.pattern.permute.xlu0 0
        %942 = vperm.xlu0 %941, %v459
        %v943 = vpop.permute.xlu0 %942
        %944 = vset.pattern.permute.xlu0 0
        %945 = vperm.xlu0 %944, %v460
        %v946 = vpop.permute.xlu0 %945
        %947 = vset.pattern.permute.xlu0 0
        %948 = vperm.xlu0 %947, %v461
        %v949 = vpop.permute.xlu0 %948
        %950 = vset.pattern.permute.xlu0 0
        %951 = vperm.xlu0 %950, %v462
        %v952 = vpop.permute.xlu0 %951
        %953 = vset.pattern.permute.xlu0 0
        %954 = vperm.xlu0 %953, %v463
        %v955 = vpop.permute.xlu0 %954
        %956 = vset.pattern.permute.xlu0 0
        %957 = vperm.xlu0 %956, %v464
        %v958 = vpop.permute.xlu0 %957
        %959 = vset.pattern.permute.xlu0 0
        %960 = vperm.xlu0 %959, %v465
        %v961 = vpop.permute.xlu0 %960
        %962 = vset.pattern.permute.xlu0 0
        %963 = vperm.xlu0 %962, %v466
        %v964 = vpop.permute.xlu0 %963
        %965 = vset.pattern.permute.xlu0 0
        %966 = vperm.xlu0 %965, %v467
        %v967 = vpop.permute.xlu0 %966
        %968 = vset.pattern.permute.xlu0 0
        %969 = vperm.xlu0 %968, %v468
        %v970 = vpop.permute.xlu0 %969
        %971 = vset.pattern.permute.xlu0 0
        %972 = vperm.xlu0 %971, %v469
        %v973 = vpop.permute.xlu0 %972
        %974 = vset.pattern.permute.xlu0 0
        %975 = vperm.xlu0 %974, %v470
        %v976 = vpop.permute.xlu0 %975
        %977 = vset.pattern.permute.xlu0 0
        %978 = vperm.xlu0 %977, %v471
        %v979 = vpop.permute.xlu0 %978
        %980 = vset.pattern.permute.xlu0 0
        %981 = vperm.xlu0 %980, %v472
        %v982 = vpop.permute.xlu0 %981
        %983 = vset.pattern.permute.xlu0 0
        %984 = vperm.xlu0 %983, %v473
        %v985 = vpop.permute.xlu0 %984
        %986 = vset.pattern.permute.xlu0 0
        %987 = vperm.xlu0 %986, %v474
        %v988 = vpop.permute.xlu0 %987
        %989 = vset.pattern.permute.xlu0 0
        %990 = vperm.xlu0 %989, %v475
        %v991 = vpop.permute.xlu0 %990
        %992 = vset.pattern.permute.xlu0 0
        %993 = vperm.xlu0 %992, %v476
        %v994 = vpop.permute.xlu0 %993
        %995 = vset.pattern.permute.xlu0 0
        %996 = vperm.xlu0 %995, %v477
        %v997 = vpop.permute.xlu0 %996
        %998 = vset.pattern.permute.xlu0 0
        %999 = vperm.xlu0 %998, %v478
        %v1000 = vpop.permute.xlu0 %999
        %1001 = vset.pattern.permute.xlu0 0
        %1002 = vperm.xlu0 %1001, %v479
        %v1003 = vpop.permute.xlu0 %1002
        %1004 = vset.pattern.permute.xlu0 0
        %1005 = vperm.xlu0 %1004, %v480
        %v1006 = vpop.permute.xlu0 %1005
        %1007 = vset.pattern.permute.xlu0 0
        %1008 = vperm.xlu0 %1007, %v481
        %v1009 = vpop.permute.xlu0 %1008
        %1010 = vset.pattern.permute.xlu0 0
        %1011 = vperm.xlu0 %1010, %v482
        %v1012 = vpop.permute.xlu0 %1011
        %1013 = vset.pattern.permute.xlu0 0
        %1014 = vperm.xlu0 %1013, %v483
        %v1015 = vpop.permute.xlu0 %1014
        %1016 = vset.pattern.permute.xlu0 0
        %1017 = vperm.xlu0 %1016, %v484
        %v1018 = vpop.permute.xlu0 %1017
        %1019 = vset.pattern.permute.xlu0 0
        %1020 = vperm.xlu0 %1019, %v485
        %v1021 = vpop.permute.xlu0 %1020
        %1022 = vset.pattern.permute.xlu0 0
        %1023 = vperm.xlu0 %1022, %v486
        %v1024 = vpop.permute.xlu0 %1023
        %1025 = vset.pattern.permute.xlu0 0
        %1026 = vperm.xlu0 %1025, %v487
        %v1027 = vpop.permute.xlu0 %1026
        %1028 = vset.pattern.permute.xlu0 0
        %1029 = vperm.xlu0 %1028, %v488
        %v1030 = vpop.permute.xlu0 %1029
        %1031 = vset.pattern.permute.xlu0 0
        %1032 = vperm.xlu0 %1031, %v489
        %v1033 = vpop.permute.xlu0 %1032
        %1034 = vset.pattern.permute.xlu0 0
        %1035 = vperm.xlu0 %1034, %v490
        %v1036 = vpop.permute.xlu0 %1035
        %1037 = vset.pattern.permute.xlu0 0
        %1038 = vperm.xlu0 %1037, %v491
        %v1039 = vpop.permute.xlu0 %1038
        %1040 = vset.pattern.permute.xlu0 0
        %1041 = vperm.xlu0 %1040, %v492
        %v1042 = vpop.permute.xlu0 %1041
        %1043 = vset.pattern.permute.xlu0 0
        %1044 = vperm.xlu0 %1043, %v493
        %v1045 = vpop.permute.xlu0 %1044
        %1046 = vset.pattern.permute.xlu0 0
        %1047 = vperm.xlu0 %1046, %v494
        %v1048 = vpop.permute.xlu0 %1047
        %1049 = vset.pattern.permute.xlu0 0
        %1050 = vperm.xlu0 %1049, %v495
        %v1051 = vpop.permute.xlu0 %1050
        %1052 = vset.pattern.permute.xlu0 0
        %1053 = vperm.xlu0 %1052, %v496
        %v1054 = vpop.permute.xlu0 %1053
        %1055 = vset.pattern.permute.xlu0 0
        %1056 = vperm.xlu0 %1055, %v497
        %v1057 = vpop.permute.xlu0 %1056
        %1058 = vset.pattern.permute.xlu0 0
        %1059 = vperm.xlu0 %1058, %v498
        %v1060 = vpop.permute.xlu0 %1059
        %1061 = vset.pattern.permute.xlu0 0
        %1062 = vperm.xlu0 %1061, %v499
        %v1063 = vpop.permute.xlu0 %1062
        %1064 = vset.pattern.permute.xlu0 0
        %1065 = vperm.xlu0 %1064, %v500
        %v1066 = vpop.permute.xlu0 %1065
        %1067 = vset.pattern.permute.xlu0 0
        %1068 = vperm.xlu0 %1067, %v501
        %v1069 = vpop.permute.xlu0 %1068
        %1070 = vset.pattern.permute.xlu0 0
        %1071 = vperm.xlu0 %1070, %v502
        %v1072 = vpop.permute.xlu0 %1071
        %1073 = vset.pattern.permute.xlu0 0
        %1074 = vperm.xlu0 %1073, %v503
        %v1075 = vpop.permute.xlu0 %1074
        %1076 = vset.pattern.permute.xlu0 0
        %1077 = vperm.xlu0 %1076, %v504
        %v1078 = vpop.permute.xlu0 %1077
        %1079 = vset.pattern.permute.xlu0 0
        %1080 = vperm.xlu0 %1079, %v505
        %v1081 = vpop.permute.xlu0 %1080
        %1082 = vset.pattern.permute.xlu0 0
        %1083 = vperm.xlu0 %1082, %v506
        %v1084 = vpop.permute.xlu0 %1083
        %vm1085 = vcmp.eq.s32.totalorder %v895, %v508
        %vm1086 = vcmp.eq.s32.totalorder %v898, %v508
        %vm1087 = vcmp.eq.s32.totalorder %v901, %v508
        %vm1088 = vcmp.eq.s32.totalorder %v904, %v508
        %vm1089 = vcmp.eq.s32.totalorder %v907, %v508
        %vm1090 = vcmp.eq.s32.totalorder %v910, %v508
        %vm1091 = vcmp.eq.s32.totalorder %v913, %v508
        %vm1092 = vcmp.eq.s32.totalorder %v916, %v508
        %vm1093 = vcmp.eq.s32.totalorder %v919, %v508
        %vm1094 = vcmp.eq.s32.totalorder %v922, %v508
        %vm1095 = vcmp.eq.s32.totalorder %v925, %v508
        %vm1096 = vcmp.eq.s32.totalorder %v928, %v508
        %vm1097 = vcmp.eq.s32.totalorder %v931, %v508
        %vm1098 = vcmp.eq.s32.totalorder %v934, %v508
        %vm1099 = vcmp.eq.s32.totalorder %v937, %v508
        %vm1100 = vcmp.eq.s32.totalorder %v940, %v508
        %vm1101 = vcmp.eq.s32.totalorder %v943, %v508
        %vm1102 = vcmp.eq.s32.totalorder %v946, %v508
        %vm1103 = vcmp.eq.s32.totalorder %v949, %v508
        %vm1104 = vcmp.eq.s32.totalorder %v952, %v508
        %vm1105 = vcmp.eq.s32.totalorder %v955, %v508
        %vm1106 = vcmp.eq.s32.totalorder %v958, %v508
        %vm1107 = vcmp.eq.s32.totalorder %v961, %v508
        %vm1108 = vcmp.eq.s32.totalorder %v964, %v508
        %vm1109 = vcmp.eq.s32.totalorder %v967, %v508
        %vm1110 = vcmp.eq.s32.totalorder %v970, %v508
        %vm1111 = vcmp.eq.s32.totalorder %v973, %v508
        %vm1112 = vcmp.eq.s32.totalorder %v976, %v508
        %vm1113 = vcmp.eq.s32.totalorder %v979, %v508
        %vm1114 = vcmp.eq.s32.totalorder %v982, %v508
        %vm1115 = vcmp.eq.s32.totalorder %v985, %v508
        %vm1116 = vcmp.eq.s32.totalorder %v988, %v508
        %vm1117 = vcmp.eq.s32.totalorder %v991, %v508
        %vm1118 = vcmp.eq.s32.totalorder %v994, %v508
        %vm1119 = vcmp.eq.s32.totalorder %v997, %v508
        %vm1120 = vcmp.eq.s32.totalorder %v1000, %v508
        %vm1121 = vcmp.eq.s32.totalorder %v1003, %v508
        %vm1122 = vcmp.eq.s32.totalorder %v1006, %v508
        %vm1123 = vcmp.eq.s32.totalorder %v1009, %v508
        %vm1124 = vcmp.eq.s32.totalorder %v1012, %v508
        %vm1125 = vcmp.eq.s32.totalorder %v1015, %v508
        %vm1126 = vcmp.eq.s32.totalorder %v1018, %v508
        %vm1127 = vcmp.eq.s32.totalorder %v1021, %v508
        %vm1128 = vcmp.eq.s32.totalorder %v1024, %v508
        %vm1129 = vcmp.eq.s32.totalorder %v1027, %v508
        %vm1130 = vcmp.eq.s32.totalorder %v1030, %v508
        %vm1131 = vcmp.eq.s32.totalorder %v1033, %v508
        %vm1132 = vcmp.eq.s32.totalorder %v1036, %v508
        %vm1133 = vcmp.eq.s32.totalorder %v1039, %v508
        %vm1134 = vcmp.eq.s32.totalorder %v1042, %v508
        %vm1135 = vcmp.eq.s32.totalorder %v1045, %v508
        %vm1136 = vcmp.eq.s32.totalorder %v1048, %v508
        %vm1137 = vcmp.eq.s32.totalorder %v1051, %v508
        %vm1138 = vcmp.eq.s32.totalorder %v1054, %v508
        %vm1139 = vcmp.eq.s32.totalorder %v1057, %v508
        %vm1140 = vcmp.eq.s32.totalorder %v1060, %v508
        %vm1141 = vcmp.eq.s32.totalorder %v1063, %v508
        %vm1142 = vcmp.eq.s32.totalorder %v1066, %v508
        %vm1143 = vcmp.eq.s32.totalorder %v1069, %v508
        %vm1144 = vcmp.eq.s32.totalorder %v1072, %v508
        %vm1145 = vcmp.eq.s32.totalorder %v1075, %v508
        %vm1146 = vcmp.eq.s32.totalorder %v1078, %v508
        %vm1147 = vcmp.eq.s32.totalorder %v1081, %v508
        %vm1148 = vcmp.eq.s32.totalorder %v1084, %v508
        %v1149 = vsel %vm1085, 1, 0
        %v1150 = vsel %vm1086, 1, 0
        %v1151 = vsel %vm1087, 1, 0
        %v1152 = vsel %vm1088, 1, 0
        %v1153 = vsel %vm1089, 1, 0
        %v1154 = vsel %vm1090, 1, 0
        %v1155 = vsel %vm1091, 1, 0
        %v1156 = vsel %vm1092, 1, 0
        %v1157 = vsel %vm1093, 1, 0
        %v1158 = vsel %vm1094, 1, 0
        %v1159 = vsel %vm1095, 1, 0
        %v1160 = vsel %vm1096, 1, 0
        %v1161 = vsel %vm1097, 1, 0
        %v1162 = vsel %vm1098, 1, 0
        %v1163 = vsel %vm1099, 1, 0
        %v1164 = vsel %vm1100, 1, 0
        %v1165 = vsel %vm1101, 1, 0
        %v1166 = vsel %vm1102, 1, 0
        %v1167 = vsel %vm1103, 1, 0
        %v1168 = vsel %vm1104, 1, 0
        %v1169 = vsel %vm1105, 1, 0
        %v1170 = vsel %vm1106, 1, 0
        %v1171 = vsel %vm1107, 1, 0
        %v1172 = vsel %vm1108, 1, 0
        %v1173 = vsel %vm1109, 1, 0
        %v1174 = vsel %vm1110, 1, 0
        %v1175 = vsel %vm1111, 1, 0
        %v1176 = vsel %vm1112, 1, 0
        %v1177 = vsel %vm1113, 1, 0
        %v1178 = vsel %vm1114, 1, 0
        %v1179 = vsel %vm1115, 1, 0
        %v1180 = vsel %vm1116, 1, 0
        %v1181 = vsel %vm1117, 1, 0
        %v1182 = vsel %vm1118, 1, 0
        %v1183 = vsel %vm1119, 1, 0
        %v1184 = vsel %vm1120, 1, 0
        %v1185 = vsel %vm1121, 1, 0
        %v1186 = vsel %vm1122, 1, 0
        %v1187 = vsel %vm1123, 1, 0
        %v1188 = vsel %vm1124, 1, 0
        %v1189 = vsel %vm1125, 1, 0
        %v1190 = vsel %vm1126, 1, 0
        %v1191 = vsel %vm1127, 1, 0
        %v1192 = vsel %vm1128, 1, 0
        %v1193 = vsel %vm1129, 1, 0
        %v1194 = vsel %vm1130, 1, 0
        %v1195 = vsel %vm1131, 1, 0
        %v1196 = vsel %vm1132, 1, 0
        %v1197 = vsel %vm1133, 1, 0
        %v1198 = vsel %vm1134, 1, 0
        %v1199 = vsel %vm1135, 1, 0
        %v1200 = vsel %vm1136, 1, 0
        %v1201 = vsel %vm1137, 1, 0
        %v1202 = vsel %vm1138, 1, 0
        %v1203 = vsel %vm1139, 1, 0
        %v1204 = vsel %vm1140, 1, 0
        %v1205 = vsel %vm1141, 1, 0
        %v1206 = vsel %vm1142, 1, 0
        %v1207 = vsel %vm1143, 1, 0
        %v1208 = vsel %vm1144, 1, 0
        %v1209 = vsel %vm1145, 1, 0
        %v1210 = vsel %vm1146, 1, 0
        %v1211 = vsel %vm1147, 1, 0
        %v1212 = vsel %vm1148, 1, 0
        %v1213 = vcvt.s32.f32 %v1149
        %v1214 = vcvt.s32.f32 %v1150
        %v1215 = vcvt.s32.f32 %v1151
        %v1216 = vcvt.s32.f32 %v1152
        %v1217 = vcvt.s32.f32 %v1153
        %v1218 = vcvt.s32.f32 %v1154
        %v1219 = vcvt.s32.f32 %v1155
        %v1220 = vcvt.s32.f32 %v1156
        %v1221 = vcvt.s32.f32 %v1157
        %v1222 = vcvt.s32.f32 %v1158
        %v1223 = vcvt.s32.f32 %v1159
        %v1224 = vcvt.s32.f32 %v1160
        %v1225 = vcvt.s32.f32 %v1161
        %v1226 = vcvt.s32.f32 %v1162
        %v1227 = vcvt.s32.f32 %v1163
        %v1228 = vcvt.s32.f32 %v1164
        %v1229 = vcvt.s32.f32 %v1165
        %v1230 = vcvt.s32.f32 %v1166
        %v1231 = vcvt.s32.f32 %v1167
        %v1232 = vcvt.s32.f32 %v1168
        %v1233 = vcvt.s32.f32 %v1169
        %v1234 = vcvt.s32.f32 %v1170
        %v1235 = vcvt.s32.f32 %v1171
        %v1236 = vcvt.s32.f32 %v1172
        %v1237 = vcvt.s32.f32 %v1173
        %v1238 = vcvt.s32.f32 %v1174
        %v1239 = vcvt.s32.f32 %v1175
        %v1240 = vcvt.s32.f32 %v1176
        %v1241 = vcvt.s32.f32 %v1177
        %v1242 = vcvt.s32.f32 %v1178
        %v1243 = vcvt.s32.f32 %v1179
        %v1244 = vcvt.s32.f32 %v1180
        %v1245 = vcvt.s32.f32 %v1181
        %v1246 = vcvt.s32.f32 %v1182
        %v1247 = vcvt.s32.f32 %v1183
        %v1248 = vcvt.s32.f32 %v1184
        %v1249 = vcvt.s32.f32 %v1185
        %v1250 = vcvt.s32.f32 %v1186
        %v1251 = vcvt.s32.f32 %v1187
        %v1252 = vcvt.s32.f32 %v1188
        %v1253 = vcvt.s32.f32 %v1189
        %v1254 = vcvt.s32.f32 %v1190
        %v1255 = vcvt.s32.f32 %v1191
        %v1256 = vcvt.s32.f32 %v1192
        %v1257 = vcvt.s32.f32 %v1193
        %v1258 = vcvt.s32.f32 %v1194
        %v1259 = vcvt.s32.f32 %v1195
        %v1260 = vcvt.s32.f32 %v1196
        %v1261 = vcvt.s32.f32 %v1197
        %v1262 = vcvt.s32.f32 %v1198
        %v1263 = vcvt.s32.f32 %v1199
        %v1264 = vcvt.s32.f32 %v1200
        %v1265 = vcvt.s32.f32 %v1201
        %v1266 = vcvt.s32.f32 %v1202
        %v1267 = vcvt.s32.f32 %v1203
        %v1268 = vcvt.s32.f32 %v1204
        %v1269 = vcvt.s32.f32 %v1205
        %v1270 = vcvt.s32.f32 %v1206
        %v1271 = vcvt.s32.f32 %v1207
        %v1272 = vcvt.s32.f32 %v1208
        %v1273 = vcvt.s32.f32 %v1209
        %v1274 = vcvt.s32.f32 %v1210
        %v1275 = vcvt.s32.f32 %v1211
        %v1276 = vcvt.s32.f32 %v1212
        %v1277 = vpack.c.bf16 %v1214, %v1213
        %v1278 = vpack.c.bf16 %v1216, %v1215
        %v1279 = vpack.c.bf16 %v1218, %v1217
        %v1280 = vpack.c.bf16 %v1220, %v1219
        %v1281 = vpack.c.bf16 %v1222, %v1221
        %v1282 = vpack.c.bf16 %v1224, %v1223
        %v1283 = vpack.c.bf16 %v1226, %v1225
        %v1284 = vpack.c.bf16 %v1228, %v1227
        %v1285 = vpack.c.bf16 %v1230, %v1229
        %v1286 = vpack.c.bf16 %v1232, %v1231
        %v1287 = vpack.c.bf16 %v1234, %v1233
        %v1288 = vpack.c.bf16 %v1236, %v1235
        %v1289 = vpack.c.bf16 %v1238, %v1237
        %v1290 = vpack.c.bf16 %v1240, %v1239
        %v1291 = vpack.c.bf16 %v1242, %v1241
        %v1292 = vpack.c.bf16 %v1244, %v1243
        %v1293 = vpack.c.bf16 %v1246, %v1245
        %v1294 = vpack.c.bf16 %v1248, %v1247
        %v1295 = vpack.c.bf16 %v1250, %v1249
        %v1296 = vpack.c.bf16 %v1252, %v1251
        %v1297 = vpack.c.bf16 %v1254, %v1253
        %v1298 = vpack.c.bf16 %v1256, %v1255
        %v1299 = vpack.c.bf16 %v1258, %v1257
        %v1300 = vpack.c.bf16 %v1260, %v1259
        %v1301 = vpack.c.bf16 %v1262, %v1261
        %v1302 = vpack.c.bf16 %v1264, %v1263
        %v1303 = vpack.c.bf16 %v1266, %v1265
        %v1304 = vpack.c.bf16 %v1268, %v1267
        %v1305 = vpack.c.bf16 %v1270, %v1269
        %v1306 = vpack.c.bf16 %v1272, %v1271
        %v1307 = vpack.c.bf16 %v1274, %v1273
        %v1308 = vpack.c.bf16 %v1276, %v1275
        %v1309 = vld [vmem:[%s3] sm:$0xf]
        %vm1310 = vcmask 31744
        %v1312 = vsel %vm1310, %v829, 0
        %v1315 = vsel %vm1310, %v830, 0
        %v1318 = vsel %vm1310, %v831, 0
        %v1321 = vsel %vm1310, %v832, 0
        %v1324 = vsel %vm1310, %v833, 0
        %v1327 = vsel %vm1310, %v834, 0
        %v1330 = vsel %vm1310, %v835, 0
        %v1333 = vsel %vm1310, %v836, 0
        %v1336 = vsel %vm1310, %v837, 0
        %v1339 = vsel %vm1310, %v838, 0
        %v1342 = vsel %vm1310, %v839, 0
        %v1345 = vsel %vm1310, %v840, 0
        %v1348 = vsel %vm1310, %v841, 0
        %v1351 = vsel %vm1310, %v842, 0
        %v1354 = vsel %vm1310, %v843, 0
        %v1357 = vsel %vm1310, %v844, 0
        %v1360 = vsel %vm1310, %v845, 0
        %v1363 = vsel %vm1310, %v846, 0
        %v1366 = vsel %vm1310, %v847, 0
        %v1369 = vsel %vm1310, %v848, 0
        %v1372 = vsel %vm1310, %v849, 0
        %v1375 = vsel %vm1310, %v850, 0
        %v1378 = vsel %vm1310, %v851, 0
        %v1381 = vsel %vm1310, %v852, 0
        %v1384 = vsel %vm1310, %v853, 0
        %v1387 = vsel %vm1310, %v854, 0
        %v1390 = vsel %vm1310, %v855, 0
        %v1393 = vsel %vm1310, %v856, 0
        %v1396 = vsel %vm1310, %v857, 0
        %v1399 = vsel %vm1310, %v858, 0
        %v1402 = vsel %vm1310, %v859, 0
        %v1405 = vsel %vm1310, %v860, 0
        %v1408 = vsel %vm1310, %v861, 0
        %v1411 = vsel %vm1310, %v862, 0
        %v1414 = vsel %vm1310, %v863, 0
        %v1417 = vsel %vm1310, %v864, 0
        %v1420 = vsel %vm1310, %v865, 0
        %v1423 = vsel %vm1310, %v866, 0
        %v1426 = vsel %vm1310, %v867, 0
        %v1429 = vsel %vm1310, %v868, 0
        %v1432 = vsel %vm1310, %v869, 0
        %v1435 = vsel %vm1310, %v870, 0
        %v1438 = vsel %vm1310, %v871, 0
        %v1441 = vsel %vm1310, %v872, 0
        %v1444 = vsel %vm1310, %v873, 0
        %v1447 = vsel %vm1310, %v874, 0
        %v1450 = vsel %vm1310, %v875, 0
        %v1453 = vsel %vm1310, %v876, 0
        %v1456 = vsel %vm1310, %v877, 0
        %v1459 = vsel %vm1310, %v878, 0
        %v1462 = vsel %vm1310, %v879, 0
        %v1465 = vsel %vm1310, %v880, 0
        %v1468 = vsel %vm1310, %v881, 0
        %v1471 = vsel %vm1310, %v882, 0
        %v1474 = vsel %vm1310, %v883, 0
        %v1477 = vsel %vm1310, %v884, 0
        %v1480 = vsel %vm1310, %v885, 0
        %v1483 = vsel %vm1310, %v886, 0
        %v1486 = vsel %vm1310, %v887, 0
        %v1489 = vsel %vm1310, %v888, 0
        %v1492 = vsel %vm1310, %v889, 0
        %v1495 = vsel %vm1310, %v890, 0
        %v1498 = vsel %vm1310, %v891, 0
        %v1501 = vsel %vm1310, %v892, 0
        %vm1503 = vcmask 1043456
        %v1505 = vsel %vm1503, %v1309, 0
        %1507 = vmatpush.msra.mxu0 0.0
        %1508 = vmatpush.msra.mxu0 0.0
        %1509 = vmatpush.msra.mxu0 0.0
        %1510 = vmatpush.msra.mxu0 0.0
        %1511 = vmatpush.msra.mxu0 0.0
        %1512 = vmatpush.msra.mxu0 0.0
        %1513 = vmatpush.msra.mxu0 0.0
        %1514 = vmatpush.msra.mxu0 0.0
        %1515 = vmatpush.msra.mxu0 0.0
        %1516 = vmatpush.msra.mxu0 0.0
        %1517 = vmatpush.msra.mxu0 0.0
        %1518 = vmatpush.msra.mxu0 0.0
        %1519 = vmatpush.msra.mxu0 0.0
        %1520 = vmatpush.msra.mxu0 0.0
        %1521 = vmatpush.msra.mxu0 0.0
        %1522 = vmatpush.msra.mxu0 %v1505
        %1523 = vmatmul.f32.gmra.mxu0 %v1312
        %v1524 = vpop.f32.mrf.mxu0
        %v1525 = vadd.f32 0.0, %v1524
        %1526 = vmatmul.f32.gmra.mxu0 %v1315
        %v1527 = vpop.f32.mrf.mxu0
        %v1528 = vadd.f32 0.0, %v1527
        %1529 = vmatmul.f32.gmra.mxu0 %v1318
        %v1530 = vpop.f32.mrf.mxu0
        %v1531 = vadd.f32 0.0, %v1530
        %1532 = vmatmul.f32.gmra.mxu0 %v1321
        %v1533 = vpop.f32.mrf.mxu0
        %v1534 = vadd.f32 0.0, %v1533
        %1535 = vmatmul.f32.gmra.mxu0 %v1324
        %v1536 = vpop.f32.mrf.mxu0
        %v1537 = vadd.f32 0.0, %v1536
        %1538 = vmatmul.f32.gmra.mxu0 %v1327
        %v1539 = vpop.f32.mrf.mxu0
        %v1540 = vadd.f32 0.0, %v1539
        %1541 = vmatmul.f32.gmra.mxu0 %v1330
        %v1542 = vpop.f32.mrf.mxu0
        %v1543 = vadd.f32 0.0, %v1542
        %1544 = vmatmul.f32.gmra.mxu0 %v1333
        %v1545 = vpop.f32.mrf.mxu0
        %v1546 = vadd.f32 0.0, %v1545
        %1547 = vmatmul.f32.gmra.mxu0 %v1336
        %v1548 = vpop.f32.mrf.mxu0
        %v1549 = vadd.f32 0.0, %v1548
        %1550 = vmatmul.f32.gmra.mxu0 %v1339
        %v1551 = vpop.f32.mrf.mxu0
        %v1552 = vadd.f32 0.0, %v1551
        %1553 = vmatmul.f32.gmra.mxu0 %v1342
        %v1554 = vpop.f32.mrf.mxu0
        %v1555 = vadd.f32 0.0, %v1554
        %1556 = vmatmul.f32.gmra.mxu0 %v1345
        %v1557 = vpop.f32.mrf.mxu0
        %v1558 = vadd.f32 0.0, %v1557
        %1559 = vmatmul.f32.gmra.mxu0 %v1348
        %v1560 = vpop.f32.mrf.mxu0
        %v1561 = vadd.f32 0.0, %v1560
        %1562 = vmatmul.f32.gmra.mxu0 %v1351
        %v1563 = vpop.f32.mrf.mxu0
        %v1564 = vadd.f32 0.0, %v1563
        %1565 = vmatmul.f32.gmra.mxu0 %v1354
        %v1566 = vpop.f32.mrf.mxu0
        %v1567 = vadd.f32 0.0, %v1566
        %1568 = vmatmul.f32.gmra.mxu0 %v1357
        %v1569 = vpop.f32.mrf.mxu0
        %v1570 = vadd.f32 0.0, %v1569
        %1571 = vmatmul.f32.gmra.mxu0 %v1360
        %v1572 = vpop.f32.mrf.mxu0
        %v1573 = vadd.f32 0.0, %v1572
        %1574 = vmatmul.f32.gmra.mxu0 %v1363
        %v1575 = vpop.f32.mrf.mxu0
        %v1576 = vadd.f32 0.0, %v1575
        %1577 = vmatmul.f32.gmra.mxu0 %v1366
        %v1578 = vpop.f32.mrf.mxu0
        %v1579 = vadd.f32 0.0, %v1578
        %1580 = vmatmul.f32.gmra.mxu0 %v1369
        %v1581 = vpop.f32.mrf.mxu0
        %v1582 = vadd.f32 0.0, %v1581
        %1583 = vmatmul.f32.gmra.mxu0 %v1372
        %v1584 = vpop.f32.mrf.mxu0
        %v1585 = vadd.f32 0.0, %v1584
        %1586 = vmatmul.f32.gmra.mxu0 %v1375
        %v1587 = vpop.f32.mrf.mxu0
        %v1588 = vadd.f32 0.0, %v1587
        %1589 = vmatmul.f32.gmra.mxu0 %v1378
        %v1590 = vpop.f32.mrf.mxu0
        %v1591 = vadd.f32 0.0, %v1590
        %1592 = vmatmul.f32.gmra.mxu0 %v1381
        %v1593 = vpop.f32.mrf.mxu0
        %v1594 = vadd.f32 0.0, %v1593
        %1595 = vmatmul.f32.gmra.mxu0 %v1384
        %v1596 = vpop.f32.mrf.mxu0
        %v1597 = vadd.f32 0.0, %v1596
        %1598 = vmatmul.f32.gmra.mxu0 %v1387
        %v1599 = vpop.f32.mrf.mxu0
        %v1600 = vadd.f32 0.0, %v1599
        %1601 = vmatmul.f32.gmra.mxu0 %v1390
        %v1602 = vpop.f32.mrf.mxu0
        %v1603 = vadd.f32 0.0, %v1602
        %1604 = vmatmul.f32.gmra.mxu0 %v1393
        %v1605 = vpop.f32.mrf.mxu0
        %v1606 = vadd.f32 0.0, %v1605
        %1607 = vmatmul.f32.gmra.mxu0 %v1396
        %v1608 = vpop.f32.mrf.mxu0
        %v1609 = vadd.f32 0.0, %v1608
        %1610 = vmatmul.f32.gmra.mxu0 %v1399
        %v1611 = vpop.f32.mrf.mxu0
        %v1612 = vadd.f32 0.0, %v1611
        %1613 = vmatmul.f32.gmra.mxu0 %v1402
        %v1614 = vpop.f32.mrf.mxu0
        %v1615 = vadd.f32 0.0, %v1614
        %1616 = vmatmul.f32.gmra.mxu0 %v1405
        %v1617 = vpop.f32.mrf.mxu0
        %v1618 = vadd.f32 0.0, %v1617
        %1619 = vmatmul.f32.gmra.mxu0 %v1408
        %v1620 = vpop.f32.mrf.mxu0
        %v1621 = vadd.f32 0.0, %v1620
        %1622 = vmatmul.f32.gmra.mxu0 %v1411
        %v1623 = vpop.f32.mrf.mxu0
        %v1624 = vadd.f32 0.0, %v1623
        %1625 = vmatmul.f32.gmra.mxu0 %v1414
        %v1626 = vpop.f32.mrf.mxu0
        %v1627 = vadd.f32 0.0, %v1626
        %1628 = vmatmul.f32.gmra.mxu0 %v1417
        %v1629 = vpop.f32.mrf.mxu0
        %v1630 = vadd.f32 0.0, %v1629
        %1631 = vmatmul.f32.gmra.mxu0 %v1420
        %v1632 = vpop.f32.mrf.mxu0
        %v1633 = vadd.f32 0.0, %v1632
        %1634 = vmatmul.f32.gmra.mxu0 %v1423
        %v1635 = vpop.f32.mrf.mxu0
        %v1636 = vadd.f32 0.0, %v1635
        %1637 = vmatmul.f32.gmra.mxu0 %v1426
        %v1638 = vpop.f32.mrf.mxu0
        %v1639 = vadd.f32 0.0, %v1638
        %1640 = vmatmul.f32.gmra.mxu0 %v1429
        %v1641 = vpop.f32.mrf.mxu0
        %v1642 = vadd.f32 0.0, %v1641
        %1643 = vmatmul.f32.gmra.mxu0 %v1432
        %v1644 = vpop.f32.mrf.mxu0
        %v1645 = vadd.f32 0.0, %v1644
        %1646 = vmatmul.f32.gmra.mxu0 %v1435
        %v1647 = vpop.f32.mrf.mxu0
        %v1648 = vadd.f32 0.0, %v1647
        %1649 = vmatmul.f32.gmra.mxu0 %v1438
        %v1650 = vpop.f32.mrf.mxu0
        %v1651 = vadd.f32 0.0, %v1650
        %1652 = vmatmul.f32.gmra.mxu0 %v1441
        %v1653 = vpop.f32.mrf.mxu0
        %v1654 = vadd.f32 0.0, %v1653
        %1655 = vmatmul.f32.gmra.mxu0 %v1444
        %v1656 = vpop.f32.mrf.mxu0
        %v1657 = vadd.f32 0.0, %v1656
        %1658 = vmatmul.f32.gmra.mxu0 %v1447
        %v1659 = vpop.f32.mrf.mxu0
        %v1660 = vadd.f32 0.0, %v1659
        %1661 = vmatmul.f32.gmra.mxu0 %v1450
        %v1662 = vpop.f32.mrf.mxu0
        %v1663 = vadd.f32 0.0, %v1662
        %1664 = vmatmul.f32.gmra.mxu0 %v1453
        %v1665 = vpop.f32.mrf.mxu0
        %v1666 = vadd.f32 0.0, %v1665
        %1667 = vmatmul.f32.gmra.mxu0 %v1456
        %v1668 = vpop.f32.mrf.mxu0
        %v1669 = vadd.f32 0.0, %v1668
        %1670 = vmatmul.f32.gmra.mxu0 %v1459
        %v1671 = vpop.f32.mrf.mxu0
        %v1672 = vadd.f32 0.0, %v1671
        %1673 = vmatmul.f32.gmra.mxu0 %v1462
        %v1674 = vpop.f32.mrf.mxu0
        %v1675 = vadd.f32 0.0, %v1674
        %1676 = vmatmul.f32.gmra.mxu0 %v1465
        %v1677 = vpop.f32.mrf.mxu0
        %v1678 = vadd.f32 0.0, %v1677
        %1679 = vmatmul.f32.gmra.mxu0 %v1468
        %v1680 = vpop.f32.mrf.mxu0
        %v1681 = vadd.f32 0.0, %v1680
        %1682 = vmatmul.f32.gmra.mxu0 %v1471
        %v1683 = vpop.f32.mrf.mxu0
        %v1684 = vadd.f32 0.0, %v1683
        %1685 = vmatmul.f32.gmra.mxu0 %v1474
        %v1686 = vpop.f32.mrf.mxu0
        %v1687 = vadd.f32 0.0, %v1686
        %1688 = vmatmul.f32.gmra.mxu0 %v1477
        %v1689 = vpop.f32.mrf.mxu0
        %v1690 = vadd.f32 0.0, %v1689
        %1691 = vmatmul.f32.gmra.mxu0 %v1480
        %v1692 = vpop.f32.mrf.mxu0
        %v1693 = vadd.f32 0.0, %v1692
        %1694 = vmatmul.f32.gmra.mxu0 %v1483
        %v1695 = vpop.f32.mrf.mxu0
        %v1696 = vadd.f32 0.0, %v1695
        %1697 = vmatmul.f32.gmra.mxu0 %v1486
        %v1698 = vpop.f32.mrf.mxu0
        %v1699 = vadd.f32 0.0, %v1698
        %1700 = vmatmul.f32.gmra.mxu0 %v1489
        %v1701 = vpop.f32.mrf.mxu0
        %v1702 = vadd.f32 0.0, %v1701
        %1703 = vmatmul.f32.gmra.mxu0 %v1492
        %v1704 = vpop.f32.mrf.mxu0
        %v1705 = vadd.f32 0.0, %v1704
        %1706 = vmatmul.f32.gmra.mxu0 %v1495
        %v1707 = vpop.f32.mrf.mxu0
        %v1708 = vadd.f32 0.0, %v1707
        %1709 = vmatmul.f32.gmra.mxu0 %v1498
        %v1710 = vpop.f32.mrf.mxu0
        %v1711 = vadd.f32 0.0, %v1710
        %1712 = vmatmul.f32.gmra.mxu0 %v1501
        %v1713 = vpop.f32.mrf.mxu0
        %v1714 = vadd.f32 0.0, %v1713
        %1715 = vdwg.mxu0
        %v1716 = vld [vmem:[%s4] sm:$0xff]
        %v1717 = vld [vmem:[%s4 + $0x8] sm:$0xff]
        %v1718 = vld [vmem:[%s4 + $0x10] sm:$0xff]
        %v1719 = vld [vmem:[%s4 + $0x18] sm:$0xff]
        %v1720 = vld [vmem:[%s4 + $0x20] sm:$0xff]
        %v1721 = vld [vmem:[%s4 + $0x28] sm:$0xff]
        %v1728 = vunpack.c.l.b16 %v1716
        %v1729 = vunpack.c.h.b16 %v1716
        %v1730 = vunpack.c.l.b16 %v1717
        %v1731 = vunpack.c.h.b16 %v1717
        %v1732 = vunpack.c.l.b16 %v1718
        %v1733 = vunpack.c.h.b16 %v1718
        %v1734 = vunpack.c.l.b16 %v1719
        %v1735 = vunpack.c.h.b16 %v1719
        %v1736 = vunpack.c.l.b16 %v1720
        %v1737 = vunpack.c.h.b16 %v1720
        %v1738 = vunpack.c.l.b16 %v1721
        %v1739 = vunpack.c.h.b16 %v1721
        %v1740 = vpack.c.b16 %v1734, %v1728
        %v1741 = vpack.c.b16 %v1735, %v1729
        %v1742 = vpack.c.b16 %v1736, %v1730
        %v1743 = vpack.c.b16 %v1737, %v1731
        %v1744 = vpack.c.b16 %v1738, %v1732
        %v1745 = vpack.c.b16 %v1739, %v1733
        %vm1752 = vcmask 130048
        %v1754 = vsel %vm1752, %v1277, 0
        %v1757 = vsel %vm1752, %v1278, 0
        %v1760 = vsel %vm1752, %v1279, 0
        %v1763 = vsel %vm1752, %v1280, 0
        %v1766 = vsel %vm1752, %v1281, 0
        %v1769 = vsel %vm1752, %v1282, 0
        %v1772 = vsel %vm1752, %v1283, 0
        %v1775 = vsel %vm1752, %v1284, 0
        %v1778 = vsel %vm1752, %v1285, 0
        %v1781 = vsel %vm1752, %v1286, 0
        %v1784 = vsel %vm1752, %v1287, 0
        %v1787 = vsel %vm1752, %v1288, 0
        %v1790 = vsel %vm1752, %v1289, 0
        %v1793 = vsel %vm1752, %v1290, 0
        %v1796 = vsel %vm1752, %v1291, 0
        %v1799 = vsel %vm1752, %v1292, 0
        %v1802 = vsel %vm1752, %v1293, 0
        %v1805 = vsel %vm1752, %v1294, 0
        %v1808 = vsel %vm1752, %v1295, 0
        %v1811 = vsel %vm1752, %v1296, 0
        %v1814 = vsel %vm1752, %v1297, 0
        %v1817 = vsel %vm1752, %v1298, 0
        %v1820 = vsel %vm1752, %v1299, 0
        %v1823 = vsel %vm1752, %v1300, 0
        %v1826 = vsel %vm1752, %v1301, 0
        %v1829 = vsel %vm1752, %v1302, 0
        %v1832 = vsel %vm1752, %v1303, 0
        %v1835 = vsel %vm1752, %v1304, 0
        %v1838 = vsel %vm1752, %v1305, 0
        %v1841 = vsel %vm1752, %v1306, 0
        %v1844 = vsel %vm1752, %v1307, 0
        %v1847 = vsel %vm1752, %v1308, 0
        %1849 = vmatpush.bf16.msra.mxu0 0
        %1850 = vmatpush.bf16.msra.mxu0 0
        %1851 = vmatpush.bf16.msra.mxu0 0
        %1852 = vmatpush.bf16.msra.mxu0 0
        %1853 = vmatpush.bf16.msra.mxu0 0
        %1854 = vmatpush.bf16.msra.mxu0 0
        %1855 = vmatpush.bf16.msra.mxu0 0
        %1856 = vmatpush.bf16.msra.mxu0 %v1740
        %1857 = vmatmul.bf16.gmra.mxu0 %v1754
        %v1858 = vpop.f32.mrf.mxu0
        %v1859 = vadd.f32 0.0, %v1858
        %v1860 = vpop.f32.mrf.mxu0
        %v1861 = vadd.f32 0.0, %v1860
        %1862 = vmatmul.bf16.gmra.mxu0 %v1757
        %v1863 = vpop.f32.mrf.mxu0
        %v1864 = vadd.f32 0.0, %v1863
        %v1865 = vpop.f32.mrf.mxu0
        %v1866 = vadd.f32 0.0, %v1865
        %1867 = vmatmul.bf16.gmra.mxu0 %v1760
        %v1868 = vpop.f32.mrf.mxu0
        %v1869 = vadd.f32 0.0, %v1868
        %v1870 = vpop.f32.mrf.mxu0
        %v1871 = vadd.f32 0.0, %v1870
        %1872 = vmatmul.bf16.gmra.mxu0 %v1763
        %v1873 = vpop.f32.mrf.mxu0
        %v1874 = vadd.f32 0.0, %v1873
        %v1875 = vpop.f32.mrf.mxu0
        %v1876 = vadd.f32 0.0, %v1875
        %1877 = vmatmul.bf16.gmra.mxu0 %v1766
        %v1878 = vpop.f32.mrf.mxu0
        %v1879 = vadd.f32 0.0, %v1878
        %v1880 = vpop.f32.mrf.mxu0
        %v1881 = vadd.f32 0.0, %v1880
        %1882 = vmatmul.bf16.gmra.mxu0 %v1769
        %v1883 = vpop.f32.mrf.mxu0
        %v1884 = vadd.f32 0.0, %v1883
        %v1885 = vpop.f32.mrf.mxu0
        %v1886 = vadd.f32 0.0, %v1885
        %1887 = vmatmul.bf16.gmra.mxu0 %v1772
        %v1888 = vpop.f32.mrf.mxu0
        %v1889 = vadd.f32 0.0, %v1888
        %v1890 = vpop.f32.mrf.mxu0
        %v1891 = vadd.f32 0.0, %v1890
        %1892 = vmatmul.bf16.gmra.mxu0 %v1775
        %v1893 = vpop.f32.mrf.mxu0
        %v1894 = vadd.f32 0.0, %v1893
        %v1895 = vpop.f32.mrf.mxu0
        %v1896 = vadd.f32 0.0, %v1895
        %1897 = vmatmul.bf16.gmra.mxu0 %v1778
        %v1898 = vpop.f32.mrf.mxu0
        %v1899 = vadd.f32 0.0, %v1898
        %v1900 = vpop.f32.mrf.mxu0
        %v1901 = vadd.f32 0.0, %v1900
        %1902 = vmatmul.bf16.gmra.mxu0 %v1781
        %v1903 = vpop.f32.mrf.mxu0
        %v1904 = vadd.f32 0.0, %v1903
        %v1905 = vpop.f32.mrf.mxu0
        %v1906 = vadd.f32 0.0, %v1905
        %1907 = vmatmul.bf16.gmra.mxu0 %v1784
        %v1908 = vpop.f32.mrf.mxu0
        %v1909 = vadd.f32 0.0, %v1908
        %v1910 = vpop.f32.mrf.mxu0
        %v1911 = vadd.f32 0.0, %v1910
        %1912 = vmatmul.bf16.gmra.mxu0 %v1787
        %v1913 = vpop.f32.mrf.mxu0
        %v1914 = vadd.f32 0.0, %v1913
        %v1915 = vpop.f32.mrf.mxu0
        %v1916 = vadd.f32 0.0, %v1915
        %1917 = vmatmul.bf16.gmra.mxu0 %v1790
        %v1918 = vpop.f32.mrf.mxu0
        %v1919 = vadd.f32 0.0, %v1918
        %v1920 = vpop.f32.mrf.mxu0
        %v1921 = vadd.f32 0.0, %v1920
        %1922 = vmatmul.bf16.gmra.mxu0 %v1793
        %v1923 = vpop.f32.mrf.mxu0
        %v1924 = vadd.f32 0.0, %v1923
        %v1925 = vpop.f32.mrf.mxu0
        %v1926 = vadd.f32 0.0, %v1925
        %1927 = vmatmul.bf16.gmra.mxu0 %v1796
        %v1928 = vpop.f32.mrf.mxu0
        %v1929 = vadd.f32 0.0, %v1928
        %v1930 = vpop.f32.mrf.mxu0
        %v1931 = vadd.f32 0.0, %v1930
        %1932 = vmatmul.bf16.gmra.mxu0 %v1799
        %v1933 = vpop.f32.mrf.mxu0
        %v1934 = vadd.f32 0.0, %v1933
        %v1935 = vpop.f32.mrf.mxu0
        %v1936 = vadd.f32 0.0, %v1935
        %1937 = vmatmul.bf16.gmra.mxu0 %v1802
        %v1938 = vpop.f32.mrf.mxu0
        %v1939 = vadd.f32 0.0, %v1938
        %v1940 = vpop.f32.mrf.mxu0
        %v1941 = vadd.f32 0.0, %v1940
        %1942 = vmatmul.bf16.gmra.mxu0 %v1805
        %v1943 = vpop.f32.mrf.mxu0
        %v1944 = vadd.f32 0.0, %v1943
        %v1945 = vpop.f32.mrf.mxu0
        %v1946 = vadd.f32 0.0, %v1945
        %1947 = vmatmul.bf16.gmra.mxu0 %v1808
        %v1948 = vpop.f32.mrf.mxu0
        %v1949 = vadd.f32 0.0, %v1948
        %v1950 = vpop.f32.mrf.mxu0
        %v1951 = vadd.f32 0.0, %v1950
        %1952 = vmatmul.bf16.gmra.mxu0 %v1811
        %v1953 = vpop.f32.mrf.mxu0
        %v1954 = vadd.f32 0.0, %v1953
        %v1955 = vpop.f32.mrf.mxu0
        %v1956 = vadd.f32 0.0, %v1955
        %1957 = vmatmul.bf16.gmra.mxu0 %v1814
        %v1958 = vpop.f32.mrf.mxu0
        %v1959 = vadd.f32 0.0, %v1958
        %v1960 = vpop.f32.mrf.mxu0
        %v1961 = vadd.f32 0.0, %v1960
        %1962 = vmatmul.bf16.gmra.mxu0 %v1817
        %v1963 = vpop.f32.mrf.mxu0
        %v1964 = vadd.f32 0.0, %v1963
        %v1965 = vpop.f32.mrf.mxu0
        %v1966 = vadd.f32 0.0, %v1965
        %1967 = vmatmul.bf16.gmra.mxu0 %v1820
        %v1968 = vpop.f32.mrf.mxu0
        %v1969 = vadd.f32 0.0, %v1968
        %v1970 = vpop.f32.mrf.mxu0
        %v1971 = vadd.f32 0.0, %v1970
        %1972 = vmatmul.bf16.gmra.mxu0 %v1823
        %v1973 = vpop.f32.mrf.mxu0
        %v1974 = vadd.f32 0.0, %v1973
        %v1975 = vpop.f32.mrf.mxu0
        %v1976 = vadd.f32 0.0, %v1975
        %1977 = vmatmul.bf16.gmra.mxu0 %v1826
        %v1978 = vpop.f32.mrf.mxu0
        %v1979 = vadd.f32 0.0, %v1978
        %v1980 = vpop.f32.mrf.mxu0
        %v1981 = vadd.f32 0.0, %v1980
        %1982 = vmatmul.bf16.gmra.mxu0 %v1829
        %v1983 = vpop.f32.mrf.mxu0
        %v1984 = vadd.f32 0.0, %v1983
        %v1985 = vpop.f32.mrf.mxu0
        %v1986 = vadd.f32 0.0, %v1985
        %1987 = vmatmul.bf16.gmra.mxu0 %v1832
        %v1988 = vpop.f32.mrf.mxu0
        %v1989 = vadd.f32 0.0, %v1988
        %v1990 = vpop.f32.mrf.mxu0
        %v1991 = vadd.f32 0.0, %v1990
        %1992 = vmatmul.bf16.gmra.mxu0 %v1835
        %v1993 = vpop.f32.mrf.mxu0
        %v1994 = vadd.f32 0.0, %v1993
        %v1995 = vpop.f32.mrf.mxu0
        %v1996 = vadd.f32 0.0, %v1995
        %1997 = vmatmul.bf16.gmra.mxu0 %v1838
        %v1998 = vpop.f32.mrf.mxu0
        %v1999 = vadd.f32 0.0, %v1998
        %v2000 = vpop.f32.mrf.mxu0
        %v2001 = vadd.f32 0.0, %v2000
        %2002 = vmatmul.bf16.gmra.mxu0 %v1841
        %v2003 = vpop.f32.mrf.mxu0
        %v2004 = vadd.f32 0.0, %v2003
        %v2005 = vpop.f32.mrf.mxu0
        %v2006 = vadd.f32 0.0, %v2005
        %2007 = vmatmul.bf16.gmra.mxu0 %v1844
        %v2008 = vpop.f32.mrf.mxu0
        %v2009 = vadd.f32 0.0, %v2008
        %v2010 = vpop.f32.mrf.mxu0
        %v2011 = vadd.f32 0.0, %v2010
        %2012 = vmatmul.bf16.gmra.mxu0 %v1847
        %v2013 = vpop.f32.mrf.mxu0
        %v2014 = vadd.f32 0.0, %v2013
        %v2015 = vpop.f32.mrf.mxu0
        %v2016 = vadd.f32 0.0, %v2015
        %2017 = vdwg.mxu0
        %2018 = vmatpush.bf16.msra.mxu0 0
        %2019 = vmatpush.bf16.msra.mxu0 0
        %2020 = vmatpush.bf16.msra.mxu0 0
        %2021 = vmatpush.bf16.msra.mxu0 0
        %2022 = vmatpush.bf16.msra.mxu0 0
        %2023 = vmatpush.bf16.msra.mxu0 0
        %2024 = vmatpush.bf16.msra.mxu0 0
        %2025 = vmatpush.bf16.msra.mxu0 %v1741
        %2026 = vmatmul.bf16.gmra.mxu0 %v1754
        %v2027 = vpop.f32.mrf.mxu0
        %v2028 = vadd.f32 0.0, %v2027
        %v2029 = vpop.f32.mrf.mxu0
        %v2030 = vadd.f32 0.0, %v2029
        %2031 = vmatmul.bf16.gmra.mxu0 %v1757
        %v2032 = vpop.f32.mrf.mxu0
        %v2033 = vadd.f32 0.0, %v2032
        %v2034 = vpop.f32.mrf.mxu0
        %v2035 = vadd.f32 0.0, %v2034
        %2036 = vmatmul.bf16.gmra.mxu0 %v1760
        %v2037 = vpop.f32.mrf.mxu0
        %v2038 = vadd.f32 0.0, %v2037
        %v2039 = vpop.f32.mrf.mxu0
        %v2040 = vadd.f32 0.0, %v2039
        %2041 = vmatmul.bf16.gmra.mxu0 %v1763
        %v2042 = vpop.f32.mrf.mxu0
        %v2043 = vadd.f32 0.0, %v2042
        %v2044 = vpop.f32.mrf.mxu0
        %v2045 = vadd.f32 0.0, %v2044
        %2046 = vmatmul.bf16.gmra.mxu0 %v1766
        %v2047 = vpop.f32.mrf.mxu0
        %v2048 = vadd.f32 0.0, %v2047
        %v2049 = vpop.f32.mrf.mxu0
        %v2050 = vadd.f32 0.0, %v2049
        %2051 = vmatmul.bf16.gmra.mxu0 %v1769
        %v2052 = vpop.f32.mrf.mxu0
        %v2053 = vadd.f32 0.0, %v2052
        %v2054 = vpop.f32.mrf.mxu0
        %v2055 = vadd.f32 0.0, %v2054
        %2056 = vmatmul.bf16.gmra.mxu0 %v1772
        %v2057 = vpop.f32.mrf.mxu0
        %v2058 = vadd.f32 0.0, %v2057
        %v2059 = vpop.f32.mrf.mxu0
        %v2060 = vadd.f32 0.0, %v2059
        %2061 = vmatmul.bf16.gmra.mxu0 %v1775
        %v2062 = vpop.f32.mrf.mxu0
        %v2063 = vadd.f32 0.0, %v2062
        %v2064 = vpop.f32.mrf.mxu0
        %v2065 = vadd.f32 0.0, %v2064
        %2066 = vmatmul.bf16.gmra.mxu0 %v1778
        %v2067 = vpop.f32.mrf.mxu0
        %v2068 = vadd.f32 0.0, %v2067
        %v2069 = vpop.f32.mrf.mxu0
        %v2070 = vadd.f32 0.0, %v2069
        %2071 = vmatmul.bf16.gmra.mxu0 %v1781
        %v2072 = vpop.f32.mrf.mxu0
        %v2073 = vadd.f32 0.0, %v2072
        %v2074 = vpop.f32.mrf.mxu0
        %v2075 = vadd.f32 0.0, %v2074
        %2076 = vmatmul.bf16.gmra.mxu0 %v1784
        %v2077 = vpop.f32.mrf.mxu0
        %v2078 = vadd.f32 0.0, %v2077
        %v2079 = vpop.f32.mrf.mxu0
        %v2080 = vadd.f32 0.0, %v2079
        %2081 = vmatmul.bf16.gmra.mxu0 %v1787
        %v2082 = vpop.f32.mrf.mxu0
        %v2083 = vadd.f32 0.0, %v2082
        %v2084 = vpop.f32.mrf.mxu0
        %v2085 = vadd.f32 0.0, %v2084
        %2086 = vmatmul.bf16.gmra.mxu0 %v1790
        %v2087 = vpop.f32.mrf.mxu0
        %v2088 = vadd.f32 0.0, %v2087
        %v2089 = vpop.f32.mrf.mxu0
        %v2090 = vadd.f32 0.0, %v2089
        %2091 = vmatmul.bf16.gmra.mxu0 %v1793
        %v2092 = vpop.f32.mrf.mxu0
        %v2093 = vadd.f32 0.0, %v2092
        %v2094 = vpop.f32.mrf.mxu0
        %v2095 = vadd.f32 0.0, %v2094
        %2096 = vmatmul.bf16.gmra.mxu0 %v1796
        %v2097 = vpop.f32.mrf.mxu0
        %v2098 = vadd.f32 0.0, %v2097
        %v2099 = vpop.f32.mrf.mxu0
        %v2100 = vadd.f32 0.0, %v2099
        %2101 = vmatmul.bf16.gmra.mxu0 %v1799
        %v2102 = vpop.f32.mrf.mxu0
        %v2103 = vadd.f32 0.0, %v2102
        %v2104 = vpop.f32.mrf.mxu0
        %v2105 = vadd.f32 0.0, %v2104
        %2106 = vmatmul.bf16.gmra.mxu0 %v1802
        %v2107 = vpop.f32.mrf.mxu0
        %v2108 = vadd.f32 0.0, %v2107
        %v2109 = vpop.f32.mrf.mxu0
        %v2110 = vadd.f32 0.0, %v2109
        %2111 = vmatmul.bf16.gmra.mxu0 %v1805
        %v2112 = vpop.f32.mrf.mxu0
        %v2113 = vadd.f32 0.0, %v2112
        %v2114 = vpop.f32.mrf.mxu0
        %v2115 = vadd.f32 0.0, %v2114
        %2116 = vmatmul.bf16.gmra.mxu0 %v1808
        %v2117 = vpop.f32.mrf.mxu0
        %v2118 = vadd.f32 0.0, %v2117
        %v2119 = vpop.f32.mrf.mxu0
        %v2120 = vadd.f32 0.0, %v2119
        %2121 = vmatmul.bf16.gmra.mxu0 %v1811
        %v2122 = vpop.f32.mrf.mxu0
        %v2123 = vadd.f32 0.0, %v2122
        %v2124 = vpop.f32.mrf.mxu0
        %v2125 = vadd.f32 0.0, %v2124
        %2126 = vmatmul.bf16.gmra.mxu0 %v1814
        %v2127 = vpop.f32.mrf.mxu0
        %v2128 = vadd.f32 0.0, %v2127
        %v2129 = vpop.f32.mrf.mxu0
        %v2130 = vadd.f32 0.0, %v2129
        %2131 = vmatmul.bf16.gmra.mxu0 %v1817
        %v2132 = vpop.f32.mrf.mxu0
        %v2133 = vadd.f32 0.0, %v2132
        %v2134 = vpop.f32.mrf.mxu0
        %v2135 = vadd.f32 0.0, %v2134
        %2136 = vmatmul.bf16.gmra.mxu0 %v1820
        %v2137 = vpop.f32.mrf.mxu0
        %v2138 = vadd.f32 0.0, %v2137
        %v2139 = vpop.f32.mrf.mxu0
        %v2140 = vadd.f32 0.0, %v2139
        %2141 = vmatmul.bf16.gmra.mxu0 %v1823
        %v2142 = vpop.f32.mrf.mxu0
        %v2143 = vadd.f32 0.0, %v2142
        %v2144 = vpop.f32.mrf.mxu0
        %v2145 = vadd.f32 0.0, %v2144
        %2146 = vmatmul.bf16.gmra.mxu0 %v1826
        %v2147 = vpop.f32.mrf.mxu0
        %v2148 = vadd.f32 0.0, %v2147
        %v2149 = vpop.f32.mrf.mxu0
        %v2150 = vadd.f32 0.0, %v2149
        %2151 = vmatmul.bf16.gmra.mxu0 %v1829
        %v2152 = vpop.f32.mrf.mxu0
        %v2153 = vadd.f32 0.0, %v2152
        %v2154 = vpop.f32.mrf.mxu0
        %v2155 = vadd.f32 0.0, %v2154
        %2156 = vmatmul.bf16.gmra.mxu0 %v1832
        %v2157 = vpop.f32.mrf.mxu0
        %v2158 = vadd.f32 0.0, %v2157
        %v2159 = vpop.f32.mrf.mxu0
        %v2160 = vadd.f32 0.0, %v2159
        %2161 = vmatmul.bf16.gmra.mxu0 %v1835
        %v2162 = vpop.f32.mrf.mxu0
        %v2163 = vadd.f32 0.0, %v2162
        %v2164 = vpop.f32.mrf.mxu0
        %v2165 = vadd.f32 0.0, %v2164
        %2166 = vmatmul.bf16.gmra.mxu0 %v1838
        %v2167 = vpop.f32.mrf.mxu0
        %v2168 = vadd.f32 0.0, %v2167
        %v2169 = vpop.f32.mrf.mxu0
        %v2170 = vadd.f32 0.0, %v2169
        %2171 = vmatmul.bf16.gmra.mxu0 %v1841
        %v2172 = vpop.f32.mrf.mxu0
        %v2173 = vadd.f32 0.0, %v2172
        %v2174 = vpop.f32.mrf.mxu0
        %v2175 = vadd.f32 0.0, %v2174
        %2176 = vmatmul.bf16.gmra.mxu0 %v1844
        %v2177 = vpop.f32.mrf.mxu0
        %v2178 = vadd.f32 0.0, %v2177
        %v2179 = vpop.f32.mrf.mxu0
        %v2180 = vadd.f32 0.0, %v2179
        %2181 = vmatmul.bf16.gmra.mxu0 %v1847
        %v2182 = vpop.f32.mrf.mxu0
        %v2183 = vadd.f32 0.0, %v2182
        %v2184 = vpop.f32.mrf.mxu0
        %v2185 = vadd.f32 0.0, %v2184
        %2186 = vdwg.mxu0
        %2187 = vmatpush.bf16.msra.mxu0 0
        %2188 = vmatpush.bf16.msra.mxu0 0
        %2189 = vmatpush.bf16.msra.mxu0 0
        %2190 = vmatpush.bf16.msra.mxu0 0
        %2191 = vmatpush.bf16.msra.mxu0 0
        %2192 = vmatpush.bf16.msra.mxu0 0
        %2193 = vmatpush.bf16.msra.mxu0 0
        %2194 = vmatpush.bf16.msra.mxu0 %v1742
        %2195 = vmatmul.bf16.gmra.mxu0 %v1754
        %v2196 = vpop.f32.mrf.mxu0
        %v2197 = vadd.f32 0.0, %v2196
        %v2198 = vpop.f32.mrf.mxu0
        %v2199 = vadd.f32 0.0, %v2198
        %2200 = vmatmul.bf16.gmra.mxu0 %v1757
        %v2201 = vpop.f32.mrf.mxu0
        %v2202 = vadd.f32 0.0, %v2201
        %v2203 = vpop.f32.mrf.mxu0
        %v2204 = vadd.f32 0.0, %v2203
        %2205 = vmatmul.bf16.gmra.mxu0 %v1760
        %v2206 = vpop.f32.mrf.mxu0
        %v2207 = vadd.f32 0.0, %v2206
        %v2208 = vpop.f32.mrf.mxu0
        %v2209 = vadd.f32 0.0, %v2208
        %2210 = vmatmul.bf16.gmra.mxu0 %v1763
        %v2211 = vpop.f32.mrf.mxu0
        %v2212 = vadd.f32 0.0, %v2211
        %v2213 = vpop.f32.mrf.mxu0
        %v2214 = vadd.f32 0.0, %v2213
        %2215 = vmatmul.bf16.gmra.mxu0 %v1766
        %v2216 = vpop.f32.mrf.mxu0
        %v2217 = vadd.f32 0.0, %v2216
        %v2218 = vpop.f32.mrf.mxu0
        %v2219 = vadd.f32 0.0, %v2218
        %2220 = vmatmul.bf16.gmra.mxu0 %v1769
        %v2221 = vpop.f32.mrf.mxu0
        %v2222 = vadd.f32 0.0, %v2221
        %v2223 = vpop.f32.mrf.mxu0
        %v2224 = vadd.f32 0.0, %v2223
        %2225 = vmatmul.bf16.gmra.mxu0 %v1772
        %v2226 = vpop.f32.mrf.mxu0
        %v2227 = vadd.f32 0.0, %v2226
        %v2228 = vpop.f32.mrf.mxu0
        %v2229 = vadd.f32 0.0, %v2228
        %2230 = vmatmul.bf16.gmra.mxu0 %v1775
        %v2231 = vpop.f32.mrf.mxu0
        %v2232 = vadd.f32 0.0, %v2231
        %v2233 = vpop.f32.mrf.mxu0
        %v2234 = vadd.f32 0.0, %v2233
        %2235 = vmatmul.bf16.gmra.mxu0 %v1778
        %v2236 = vpop.f32.mrf.mxu0
        %v2237 = vadd.f32 0.0, %v2236
        %v2238 = vpop.f32.mrf.mxu0
        %v2239 = vadd.f32 0.0, %v2238
        %2240 = vmatmul.bf16.gmra.mxu0 %v1781
        %v2241 = vpop.f32.mrf.mxu0
        %v2242 = vadd.f32 0.0, %v2241
        %v2243 = vpop.f32.mrf.mxu0
        %v2244 = vadd.f32 0.0, %v2243
        %2245 = vmatmul.bf16.gmra.mxu0 %v1784
        %v2246 = vpop.f32.mrf.mxu0
        %v2247 = vadd.f32 0.0, %v2246
        %v2248 = vpop.f32.mrf.mxu0
        %v2249 = vadd.f32 0.0, %v2248
        %2250 = vmatmul.bf16.gmra.mxu0 %v1787
        %v2251 = vpop.f32.mrf.mxu0
        %v2252 = vadd.f32 0.0, %v2251
        %v2253 = vpop.f32.mrf.mxu0
        %v2254 = vadd.f32 0.0, %v2253
        %2255 = vmatmul.bf16.gmra.mxu0 %v1790
        %v2256 = vpop.f32.mrf.mxu0
        %v2257 = vadd.f32 0.0, %v2256
        %v2258 = vpop.f32.mrf.mxu0
        %v2259 = vadd.f32 0.0, %v2258
        %2260 = vmatmul.bf16.gmra.mxu0 %v1793
        %v2261 = vpop.f32.mrf.mxu0
        %v2262 = vadd.f32 0.0, %v2261
        %v2263 = vpop.f32.mrf.mxu0
        %v2264 = vadd.f32 0.0, %v2263
        %2265 = vmatmul.bf16.gmra.mxu0 %v1796
        %v2266 = vpop.f32.mrf.mxu0
        %v2267 = vadd.f32 0.0, %v2266
        %v2268 = vpop.f32.mrf.mxu0
        %v2269 = vadd.f32 0.0, %v2268
        %2270 = vmatmul.bf16.gmra.mxu0 %v1799
        %v2271 = vpop.f32.mrf.mxu0
        %v2272 = vadd.f32 0.0, %v2271
        %v2273 = vpop.f32.mrf.mxu0
        %v2274 = vadd.f32 0.0, %v2273
        %2275 = vmatmul.bf16.gmra.mxu0 %v1802
        %v2276 = vpop.f32.mrf.mxu0
        %v2277 = vadd.f32 0.0, %v2276
        %v2278 = vpop.f32.mrf.mxu0
        %v2279 = vadd.f32 0.0, %v2278
        %2280 = vmatmul.bf16.gmra.mxu0 %v1805
        %v2281 = vpop.f32.mrf.mxu0
        %v2282 = vadd.f32 0.0, %v2281
        %v2283 = vpop.f32.mrf.mxu0
        %v2284 = vadd.f32 0.0, %v2283
        %2285 = vmatmul.bf16.gmra.mxu0 %v1808
        %v2286 = vpop.f32.mrf.mxu0
        %v2287 = vadd.f32 0.0, %v2286
        %v2288 = vpop.f32.mrf.mxu0
        %v2289 = vadd.f32 0.0, %v2288
        %2290 = vmatmul.bf16.gmra.mxu0 %v1811
        %v2291 = vpop.f32.mrf.mxu0
        %v2292 = vadd.f32 0.0, %v2291
        %v2293 = vpop.f32.mrf.mxu0
        %v2294 = vadd.f32 0.0, %v2293
        %2295 = vmatmul.bf16.gmra.mxu0 %v1814
        %v2296 = vpop.f32.mrf.mxu0
        %v2297 = vadd.f32 0.0, %v2296
        %v2298 = vpop.f32.mrf.mxu0
        %v2299 = vadd.f32 0.0, %v2298
        %2300 = vmatmul.bf16.gmra.mxu0 %v1817
        %v2301 = vpop.f32.mrf.mxu0
        %v2302 = vadd.f32 0.0, %v2301
        %v2303 = vpop.f32.mrf.mxu0
        %v2304 = vadd.f32 0.0, %v2303
        %2305 = vmatmul.bf16.gmra.mxu0 %v1820
        %v2306 = vpop.f32.mrf.mxu0
        %v2307 = vadd.f32 0.0, %v2306
        %v2308 = vpop.f32.mrf.mxu0
        %v2309 = vadd.f32 0.0, %v2308
        %2310 = vmatmul.bf16.gmra.mxu0 %v1823
        %v2311 = vpop.f32.mrf.mxu0
        %v2312 = vadd.f32 0.0, %v2311
        %v2313 = vpop.f32.mrf.mxu0
        %v2314 = vadd.f32 0.0, %v2313
        %2315 = vmatmul.bf16.gmra.mxu0 %v1826
        %v2316 = vpop.f32.mrf.mxu0
        %v2317 = vadd.f32 0.0, %v2316
        %v2318 = vpop.f32.mrf.mxu0
        %v2319 = vadd.f32 0.0, %v2318
        %2320 = vmatmul.bf16.gmra.mxu0 %v1829
        %v2321 = vpop.f32.mrf.mxu0
        %v2322 = vadd.f32 0.0, %v2321
        %v2323 = vpop.f32.mrf.mxu0
        %v2324 = vadd.f32 0.0, %v2323
        %2325 = vmatmul.bf16.gmra.mxu0 %v1832
        %v2326 = vpop.f32.mrf.mxu0
        %v2327 = vadd.f32 0.0, %v2326
        %v2328 = vpop.f32.mrf.mxu0
        %v2329 = vadd.f32 0.0, %v2328
        %2330 = vmatmul.bf16.gmra.mxu0 %v1835
        %v2331 = vpop.f32.mrf.mxu0
        %v2332 = vadd.f32 0.0, %v2331
        %v2333 = vpop.f32.mrf.mxu0
        %v2334 = vadd.f32 0.0, %v2333
        %2335 = vmatmul.bf16.gmra.mxu0 %v1838
        %v2336 = vpop.f32.mrf.mxu0
        %v2337 = vadd.f32 0.0, %v2336
        %v2338 = vpop.f32.mrf.mxu0
        %v2339 = vadd.f32 0.0, %v2338
        %2340 = vmatmul.bf16.gmra.mxu0 %v1841
        %v2341 = vpop.f32.mrf.mxu0
        %v2342 = vadd.f32 0.0, %v2341
        %v2343 = vpop.f32.mrf.mxu0
        %v2344 = vadd.f32 0.0, %v2343
        %2345 = vmatmul.bf16.gmra.mxu0 %v1844
        %v2346 = vpop.f32.mrf.mxu0
        %v2347 = vadd.f32 0.0, %v2346
        %v2348 = vpop.f32.mrf.mxu0
        %v2349 = vadd.f32 0.0, %v2348
        %2350 = vmatmul.bf16.gmra.mxu0 %v1847
        %v2351 = vpop.f32.mrf.mxu0
        %v2352 = vadd.f32 0.0, %v2351
        %v2353 = vpop.f32.mrf.mxu0
        %v2354 = vadd.f32 0.0, %v2353
        %2355 = vdwg.mxu0
        %2356 = vmatpush.bf16.msra.mxu0 0
        %2357 = vmatpush.bf16.msra.mxu0 0
        %2358 = vmatpush.bf16.msra.mxu0 0
        %2359 = vmatpush.bf16.msra.mxu0 0
        %2360 = vmatpush.bf16.msra.mxu0 0
        %2361 = vmatpush.bf16.msra.mxu0 0
        %2362 = vmatpush.bf16.msra.mxu0 0
        %2363 = vmatpush.bf16.msra.mxu0 %v1743
        %2364 = vmatmul.bf16.gmra.mxu0 %v1754
        %v2365 = vpop.f32.mrf.mxu0
        %v2366 = vadd.f32 0.0, %v2365
        %v2367 = vpop.f32.mrf.mxu0
        %v2368 = vadd.f32 0.0, %v2367
        %2369 = vmatmul.bf16.gmra.mxu0 %v1757
        %v2370 = vpop.f32.mrf.mxu0
        %v2371 = vadd.f32 0.0, %v2370
        %v2372 = vpop.f32.mrf.mxu0
        %v2373 = vadd.f32 0.0, %v2372
        %2374 = vmatmul.bf16.gmra.mxu0 %v1760
        %v2375 = vpop.f32.mrf.mxu0
        %v2376 = vadd.f32 0.0, %v2375
        %v2377 = vpop.f32.mrf.mxu0
        %v2378 = vadd.f32 0.0, %v2377
        %2379 = vmatmul.bf16.gmra.mxu0 %v1763
        %v2380 = vpop.f32.mrf.mxu0
        %v2381 = vadd.f32 0.0, %v2380
        %v2382 = vpop.f32.mrf.mxu0
        %v2383 = vadd.f32 0.0, %v2382
        %2384 = vmatmul.bf16.gmra.mxu0 %v1766
        %v2385 = vpop.f32.mrf.mxu0
        %v2386 = vadd.f32 0.0, %v2385
        %v2387 = vpop.f32.mrf.mxu0
        %v2388 = vadd.f32 0.0, %v2387
        %2389 = vmatmul.bf16.gmra.mxu0 %v1769
        %v2390 = vpop.f32.mrf.mxu0
        %v2391 = vadd.f32 0.0, %v2390
        %v2392 = vpop.f32.mrf.mxu0
        %v2393 = vadd.f32 0.0, %v2392
        %2394 = vmatmul.bf16.gmra.mxu0 %v1772
        %v2395 = vpop.f32.mrf.mxu0
        %v2396 = vadd.f32 0.0, %v2395
        %v2397 = vpop.f32.mrf.mxu0
        %v2398 = vadd.f32 0.0, %v2397
        %2399 = vmatmul.bf16.gmra.mxu0 %v1775
        %v2400 = vpop.f32.mrf.mxu0
        %v2401 = vadd.f32 0.0, %v2400
        %v2402 = vpop.f32.mrf.mxu0
        %v2403 = vadd.f32 0.0, %v2402
        %2404 = vmatmul.bf16.gmra.mxu0 %v1778
        %v2405 = vpop.f32.mrf.mxu0
        %v2406 = vadd.f32 0.0, %v2405
        %v2407 = vpop.f32.mrf.mxu0
        %v2408 = vadd.f32 0.0, %v2407
        %2409 = vmatmul.bf16.gmra.mxu0 %v1781
        %v2410 = vpop.f32.mrf.mxu0
        %v2411 = vadd.f32 0.0, %v2410
        %v2412 = vpop.f32.mrf.mxu0
        %v2413 = vadd.f32 0.0, %v2412
        %2414 = vmatmul.bf16.gmra.mxu0 %v1784
        %v2415 = vpop.f32.mrf.mxu0
        %v2416 = vadd.f32 0.0, %v2415
        %v2417 = vpop.f32.mrf.mxu0
        %v2418 = vadd.f32 0.0, %v2417
        %2419 = vmatmul.bf16.gmra.mxu0 %v1787
        %v2420 = vpop.f32.mrf.mxu0
        %v2421 = vadd.f32 0.0, %v2420
        %v2422 = vpop.f32.mrf.mxu0
        %v2423 = vadd.f32 0.0, %v2422
        %2424 = vmatmul.bf16.gmra.mxu0 %v1790
        %v2425 = vpop.f32.mrf.mxu0
        %v2426 = vadd.f32 0.0, %v2425
        %v2427 = vpop.f32.mrf.mxu0
        %v2428 = vadd.f32 0.0, %v2427
        %2429 = vmatmul.bf16.gmra.mxu0 %v1793
        %v2430 = vpop.f32.mrf.mxu0
        %v2431 = vadd.f32 0.0, %v2430
        %v2432 = vpop.f32.mrf.mxu0
        %v2433 = vadd.f32 0.0, %v2432
        %2434 = vmatmul.bf16.gmra.mxu0 %v1796
        %v2435 = vpop.f32.mrf.mxu0
        %v2436 = vadd.f32 0.0, %v2435
        %v2437 = vpop.f32.mrf.mxu0
        %v2438 = vadd.f32 0.0, %v2437
        %2439 = vmatmul.bf16.gmra.mxu0 %v1799
        %v2440 = vpop.f32.mrf.mxu0
        %v2441 = vadd.f32 0.0, %v2440
        %v2442 = vpop.f32.mrf.mxu0
        %v2443 = vadd.f32 0.0, %v2442
        %2444 = vmatmul.bf16.gmra.mxu0 %v1802
        %v2445 = vpop.f32.mrf.mxu0
        %v2446 = vadd.f32 0.0, %v2445
        %v2447 = vpop.f32.mrf.mxu0
        %v2448 = vadd.f32 0.0, %v2447
        %2449 = vmatmul.bf16.gmra.mxu0 %v1805
        %v2450 = vpop.f32.mrf.mxu0
        %v2451 = vadd.f32 0.0, %v2450
        %v2452 = vpop.f32.mrf.mxu0
        %v2453 = vadd.f32 0.0, %v2452
        %2454 = vmatmul.bf16.gmra.mxu0 %v1808
        %v2455 = vpop.f32.mrf.mxu0
        %v2456 = vadd.f32 0.0, %v2455
        %v2457 = vpop.f32.mrf.mxu0
        %v2458 = vadd.f32 0.0, %v2457
        %2459 = vmatmul.bf16.gmra.mxu0 %v1811
        %v2460 = vpop.f32.mrf.mxu0
        %v2461 = vadd.f32 0.0, %v2460
        %v2462 = vpop.f32.mrf.mxu0
        %v2463 = vadd.f32 0.0, %v2462
        %2464 = vmatmul.bf16.gmra.mxu0 %v1814
        %v2465 = vpop.f32.mrf.mxu0
        %v2466 = vadd.f32 0.0, %v2465
        %v2467 = vpop.f32.mrf.mxu0
        %v2468 = vadd.f32 0.0, %v2467
        %2469 = vmatmul.bf16.gmra.mxu0 %v1817
        %v2470 = vpop.f32.mrf.mxu0
        %v2471 = vadd.f32 0.0, %v2470
        %v2472 = vpop.f32.mrf.mxu0
        %v2473 = vadd.f32 0.0, %v2472
        %2474 = vmatmul.bf16.gmra.mxu0 %v1820
        %v2475 = vpop.f32.mrf.mxu0
        %v2476 = vadd.f32 0.0, %v2475
        %v2477 = vpop.f32.mrf.mxu0
        %v2478 = vadd.f32 0.0, %v2477
        %2479 = vmatmul.bf16.gmra.mxu0 %v1823
        %v2480 = vpop.f32.mrf.mxu0
        %v2481 = vadd.f32 0.0, %v2480
        %v2482 = vpop.f32.mrf.mxu0
        %v2483 = vadd.f32 0.0, %v2482
        %2484 = vmatmul.bf16.gmra.mxu0 %v1826
        %v2485 = vpop.f32.mrf.mxu0
        %v2486 = vadd.f32 0.0, %v2485
        %v2487 = vpop.f32.mrf.mxu0
        %v2488 = vadd.f32 0.0, %v2487
        %2489 = vmatmul.bf16.gmra.mxu0 %v1829
        %v2490 = vpop.f32.mrf.mxu0
        %v2491 = vadd.f32 0.0, %v2490
        %v2492 = vpop.f32.mrf.mxu0
        %v2493 = vadd.f32 0.0, %v2492
        %2494 = vmatmul.bf16.gmra.mxu0 %v1832
        %v2495 = vpop.f32.mrf.mxu0
        %v2496 = vadd.f32 0.0, %v2495
        %v2497 = vpop.f32.mrf.mxu0
        %v2498 = vadd.f32 0.0, %v2497
        %2499 = vmatmul.bf16.gmra.mxu0 %v1835
        %v2500 = vpop.f32.mrf.mxu0
        %v2501 = vadd.f32 0.0, %v2500
        %v2502 = vpop.f32.mrf.mxu0
        %v2503 = vadd.f32 0.0, %v2502
        %2504 = vmatmul.bf16.gmra.mxu0 %v1838
        %v2505 = vpop.f32.mrf.mxu0
        %v2506 = vadd.f32 0.0, %v2505
        %v2507 = vpop.f32.mrf.mxu0
        %v2508 = vadd.f32 0.0, %v2507
        %2509 = vmatmul.bf16.gmra.mxu0 %v1841
        %v2510 = vpop.f32.mrf.mxu0
        %v2511 = vadd.f32 0.0, %v2510
        %v2512 = vpop.f32.mrf.mxu0
        %v2513 = vadd.f32 0.0, %v2512
        %2514 = vmatmul.bf16.gmra.mxu0 %v1844
        %v2515 = vpop.f32.mrf.mxu0
        %v2516 = vadd.f32 0.0, %v2515
        %v2517 = vpop.f32.mrf.mxu0
        %v2518 = vadd.f32 0.0, %v2517
        %2519 = vmatmul.bf16.gmra.mxu0 %v1847
        %v2520 = vpop.f32.mrf.mxu0
        %v2521 = vadd.f32 0.0, %v2520
        %v2522 = vpop.f32.mrf.mxu0
        %v2523 = vadd.f32 0.0, %v2522
        %2524 = vdwg.mxu0
        %2525 = vmatpush.bf16.msra.mxu0 0
        %2526 = vmatpush.bf16.msra.mxu0 0
        %2527 = vmatpush.bf16.msra.mxu0 0
        %2528 = vmatpush.bf16.msra.mxu0 0
        %2529 = vmatpush.bf16.msra.mxu0 0
        %2530 = vmatpush.bf16.msra.mxu0 0
        %2531 = vmatpush.bf16.msra.mxu0 0
        %2532 = vmatpush.bf16.msra.mxu0 %v1744
        %2533 = vmatmul.bf16.gmra.mxu0 %v1754
        %v2534 = vpop.f32.mrf.mxu0
        %v2535 = vadd.f32 0.0, %v2534
        %v2536 = vpop.f32.mrf.mxu0
        %v2537 = vadd.f32 0.0, %v2536
        %2538 = vmatmul.bf16.gmra.mxu0 %v1757
        %v2539 = vpop.f32.mrf.mxu0
        %v2540 = vadd.f32 0.0, %v2539
        %v2541 = vpop.f32.mrf.mxu0
        %v2542 = vadd.f32 0.0, %v2541
        %2543 = vmatmul.bf16.gmra.mxu0 %v1760
        %v2544 = vpop.f32.mrf.mxu0
        %v2545 = vadd.f32 0.0, %v2544
        %v2546 = vpop.f32.mrf.mxu0
        %v2547 = vadd.f32 0.0, %v2546
        %2548 = vmatmul.bf16.gmra.mxu0 %v1763
        %v2549 = vpop.f32.mrf.mxu0
        %v2550 = vadd.f32 0.0, %v2549
        %v2551 = vpop.f32.mrf.mxu0
        %v2552 = vadd.f32 0.0, %v2551
        %2553 = vmatmul.bf16.gmra.mxu0 %v1766
        %v2554 = vpop.f32.mrf.mxu0
        %v2555 = vadd.f32 0.0, %v2554
        %v2556 = vpop.f32.mrf.mxu0
        %v2557 = vadd.f32 0.0, %v2556
        %2558 = vmatmul.bf16.gmra.mxu0 %v1769
        %v2559 = vpop.f32.mrf.mxu0
        %v2560 = vadd.f32 0.0, %v2559
        %v2561 = vpop.f32.mrf.mxu0
        %v2562 = vadd.f32 0.0, %v2561
        %2563 = vmatmul.bf16.gmra.mxu0 %v1772
        %v2564 = vpop.f32.mrf.mxu0
        %v2565 = vadd.f32 0.0, %v2564
        %v2566 = vpop.f32.mrf.mxu0
        %v2567 = vadd.f32 0.0, %v2566
        %2568 = vmatmul.bf16.gmra.mxu0 %v1775
        %v2569 = vpop.f32.mrf.mxu0
        %v2570 = vadd.f32 0.0, %v2569
        %v2571 = vpop.f32.mrf.mxu0
        %v2572 = vadd.f32 0.0, %v2571
        %2573 = vmatmul.bf16.gmra.mxu0 %v1778
        %v2574 = vpop.f32.mrf.mxu0
        %v2575 = vadd.f32 0.0, %v2574
        %v2576 = vpop.f32.mrf.mxu0
        %v2577 = vadd.f32 0.0, %v2576
        %2578 = vmatmul.bf16.gmra.mxu0 %v1781
        %v2579 = vpop.f32.mrf.mxu0
        %v2580 = vadd.f32 0.0, %v2579
        %v2581 = vpop.f32.mrf.mxu0
        %v2582 = vadd.f32 0.0, %v2581
        %2583 = vmatmul.bf16.gmra.mxu0 %v1784
        %v2584 = vpop.f32.mrf.mxu0
        %v2585 = vadd.f32 0.0, %v2584
        %v2586 = vpop.f32.mrf.mxu0
        %v2587 = vadd.f32 0.0, %v2586
        %2588 = vmatmul.bf16.gmra.mxu0 %v1787
        %v2589 = vpop.f32.mrf.mxu0
        %v2590 = vadd.f32 0.0, %v2589
        %v2591 = vpop.f32.mrf.mxu0
        %v2592 = vadd.f32 0.0, %v2591
        %2593 = vmatmul.bf16.gmra.mxu0 %v1790
        %v2594 = vpop.f32.mrf.mxu0
        %v2595 = vadd.f32 0.0, %v2594
        %v2596 = vpop.f32.mrf.mxu0
        %v2597 = vadd.f32 0.0, %v2596
        %2598 = vmatmul.bf16.gmra.mxu0 %v1793
        %v2599 = vpop.f32.mrf.mxu0
        %v2600 = vadd.f32 0.0, %v2599
        %v2601 = vpop.f32.mrf.mxu0
        %v2602 = vadd.f32 0.0, %v2601
        %2603 = vmatmul.bf16.gmra.mxu0 %v1796
        %v2604 = vpop.f32.mrf.mxu0
        %v2605 = vadd.f32 0.0, %v2604
        %v2606 = vpop.f32.mrf.mxu0
        %v2607 = vadd.f32 0.0, %v2606
        %2608 = vmatmul.bf16.gmra.mxu0 %v1799
        %v2609 = vpop.f32.mrf.mxu0
        %v2610 = vadd.f32 0.0, %v2609
        %v2611 = vpop.f32.mrf.mxu0
        %v2612 = vadd.f32 0.0, %v2611
        %2613 = vmatmul.bf16.gmra.mxu0 %v1802
        %v2614 = vpop.f32.mrf.mxu0
        %v2615 = vadd.f32 0.0, %v2614
        %v2616 = vpop.f32.mrf.mxu0
        %v2617 = vadd.f32 0.0, %v2616
        %2618 = vmatmul.bf16.gmra.mxu0 %v1805
        %v2619 = vpop.f32.mrf.mxu0
        %v2620 = vadd.f32 0.0, %v2619
        %v2621 = vpop.f32.mrf.mxu0
        %v2622 = vadd.f32 0.0, %v2621
        %2623 = vmatmul.bf16.gmra.mxu0 %v1808
        %v2624 = vpop.f32.mrf.mxu0
        %v2625 = vadd.f32 0.0, %v2624
        %v2626 = vpop.f32.mrf.mxu0
        %v2627 = vadd.f32 0.0, %v2626
        %2628 = vmatmul.bf16.gmra.mxu0 %v1811
        %v2629 = vpop.f32.mrf.mxu0
        %v2630 = vadd.f32 0.0, %v2629
        %v2631 = vpop.f32.mrf.mxu0
        %v2632 = vadd.f32 0.0, %v2631
        %2633 = vmatmul.bf16.gmra.mxu0 %v1814
        %v2634 = vpop.f32.mrf.mxu0
        %v2635 = vadd.f32 0.0, %v2634
        %v2636 = vpop.f32.mrf.mxu0
        %v2637 = vadd.f32 0.0, %v2636
        %2638 = vmatmul.bf16.gmra.mxu0 %v1817
        %v2639 = vpop.f32.mrf.mxu0
        %v2640 = vadd.f32 0.0, %v2639
        %v2641 = vpop.f32.mrf.mxu0
        %v2642 = vadd.f32 0.0, %v2641
        %2643 = vmatmul.bf16.gmra.mxu0 %v1820
        %v2644 = vpop.f32.mrf.mxu0
        %v2645 = vadd.f32 0.0, %v2644
        %v2646 = vpop.f32.mrf.mxu0
        %v2647 = vadd.f32 0.0, %v2646
        %2648 = vmatmul.bf16.gmra.mxu0 %v1823
        %v2649 = vpop.f32.mrf.mxu0
        %v2650 = vadd.f32 0.0, %v2649
        %v2651 = vpop.f32.mrf.mxu0
        %v2652 = vadd.f32 0.0, %v2651
        %2653 = vmatmul.bf16.gmra.mxu0 %v1826
        %v2654 = vpop.f32.mrf.mxu0
        %v2655 = vadd.f32 0.0, %v2654
        %v2656 = vpop.f32.mrf.mxu0
        %v2657 = vadd.f32 0.0, %v2656
        %2658 = vmatmul.bf16.gmra.mxu0 %v1829
        %v2659 = vpop.f32.mrf.mxu0
        %v2660 = vadd.f32 0.0, %v2659
        %v2661 = vpop.f32.mrf.mxu0
        %v2662 = vadd.f32 0.0, %v2661
        %2663 = vmatmul.bf16.gmra.mxu0 %v1832
        %v2664 = vpop.f32.mrf.mxu0
        %v2665 = vadd.f32 0.0, %v2664
        %v2666 = vpop.f32.mrf.mxu0
        %v2667 = vadd.f32 0.0, %v2666
        %2668 = vmatmul.bf16.gmra.mxu0 %v1835
        %v2669 = vpop.f32.mrf.mxu0
        %v2670 = vadd.f32 0.0, %v2669
        %v2671 = vpop.f32.mrf.mxu0
        %v2672 = vadd.f32 0.0, %v2671
        %2673 = vmatmul.bf16.gmra.mxu0 %v1838
        %v2674 = vpop.f32.mrf.mxu0
        %v2675 = vadd.f32 0.0, %v2674
        %v2676 = vpop.f32.mrf.mxu0
        %v2677 = vadd.f32 0.0, %v2676
        %2678 = vmatmul.bf16.gmra.mxu0 %v1841
        %v2679 = vpop.f32.mrf.mxu0
        %v2680 = vadd.f32 0.0, %v2679
        %v2681 = vpop.f32.mrf.mxu0
        %v2682 = vadd.f32 0.0, %v2681
        %2683 = vmatmul.bf16.gmra.mxu0 %v1844
        %v2684 = vpop.f32.mrf.mxu0
        %v2685 = vadd.f32 0.0, %v2684
        %v2686 = vpop.f32.mrf.mxu0
        %v2687 = vadd.f32 0.0, %v2686
        %2688 = vmatmul.bf16.gmra.mxu0 %v1847
        %v2689 = vpop.f32.mrf.mxu0
        %v2690 = vadd.f32 0.0, %v2689
        %v2691 = vpop.f32.mrf.mxu0
        %v2692 = vadd.f32 0.0, %v2691
        %2693 = vdwg.mxu0
        %2694 = vmatpush.bf16.msra.mxu0 0
        %2695 = vmatpush.bf16.msra.mxu0 0
        %2696 = vmatpush.bf16.msra.mxu0 0
        %2697 = vmatpush.bf16.msra.mxu0 0
        %2698 = vmatpush.bf16.msra.mxu0 0
        %2699 = vmatpush.bf16.msra.mxu0 0
        %2700 = vmatpush.bf16.msra.mxu0 0
        %2701 = vmatpush.bf16.msra.mxu0 %v1745
        %2702 = vmatmul.bf16.gmra.mxu0 %v1754
        %v2703 = vpop.f32.mrf.mxu0
        %v2704 = vadd.f32 0.0, %v2703
        %v2705 = vpop.f32.mrf.mxu0
        %v2706 = vadd.f32 0.0, %v2705
        %2707 = vmatmul.bf16.gmra.mxu0 %v1757
        %v2708 = vpop.f32.mrf.mxu0
        %v2709 = vadd.f32 0.0, %v2708
        %v2710 = vpop.f32.mrf.mxu0
        %v2711 = vadd.f32 0.0, %v2710
        %2712 = vmatmul.bf16.gmra.mxu0 %v1760
        %v2713 = vpop.f32.mrf.mxu0
        %v2714 = vadd.f32 0.0, %v2713
        %v2715 = vpop.f32.mrf.mxu0
        %v2716 = vadd.f32 0.0, %v2715
        %2717 = vmatmul.bf16.gmra.mxu0 %v1763
        %v2718 = vpop.f32.mrf.mxu0
        %v2719 = vadd.f32 0.0, %v2718
        %v2720 = vpop.f32.mrf.mxu0
        %v2721 = vadd.f32 0.0, %v2720
        %2722 = vmatmul.bf16.gmra.mxu0 %v1766
        %v2723 = vpop.f32.mrf.mxu0
        %v2724 = vadd.f32 0.0, %v2723
        %v2725 = vpop.f32.mrf.mxu0
        %v2726 = vadd.f32 0.0, %v2725
        %2727 = vmatmul.bf16.gmra.mxu0 %v1769
        %v2728 = vpop.f32.mrf.mxu0
        %v2729 = vadd.f32 0.0, %v2728
        %v2730 = vpop.f32.mrf.mxu0
        %v2731 = vadd.f32 0.0, %v2730
        %2732 = vmatmul.bf16.gmra.mxu0 %v1772
        %v2733 = vpop.f32.mrf.mxu0
        %v2734 = vadd.f32 0.0, %v2733
        %v2735 = vpop.f32.mrf.mxu0
        %v2736 = vadd.f32 0.0, %v2735
        %2737 = vmatmul.bf16.gmra.mxu0 %v1775
        %v2738 = vpop.f32.mrf.mxu0
        %v2739 = vadd.f32 0.0, %v2738
        %v2740 = vpop.f32.mrf.mxu0
        %v2741 = vadd.f32 0.0, %v2740
        %2742 = vmatmul.bf16.gmra.mxu0 %v1778
        %v2743 = vpop.f32.mrf.mxu0
        %v2744 = vadd.f32 0.0, %v2743
        %v2745 = vpop.f32.mrf.mxu0
        %v2746 = vadd.f32 0.0, %v2745
        %2747 = vmatmul.bf16.gmra.mxu0 %v1781
        %v2748 = vpop.f32.mrf.mxu0
        %v2749 = vadd.f32 0.0, %v2748
        %v2750 = vpop.f32.mrf.mxu0
        %v2751 = vadd.f32 0.0, %v2750
        %2752 = vmatmul.bf16.gmra.mxu0 %v1784
        %v2753 = vpop.f32.mrf.mxu0
        %v2754 = vadd.f32 0.0, %v2753
        %v2755 = vpop.f32.mrf.mxu0
        %v2756 = vadd.f32 0.0, %v2755
        %2757 = vmatmul.bf16.gmra.mxu0 %v1787
        %v2758 = vpop.f32.mrf.mxu0
        %v2759 = vadd.f32 0.0, %v2758
        %v2760 = vpop.f32.mrf.mxu0
        %v2761 = vadd.f32 0.0, %v2760
        %2762 = vmatmul.bf16.gmra.mxu0 %v1790
        %v2763 = vpop.f32.mrf.mxu0
        %v2764 = vadd.f32 0.0, %v2763
        %v2765 = vpop.f32.mrf.mxu0
        %v2766 = vadd.f32 0.0, %v2765
        %2767 = vmatmul.bf16.gmra.mxu0 %v1793
        %v2768 = vpop.f32.mrf.mxu0
        %v2769 = vadd.f32 0.0, %v2768
        %v2770 = vpop.f32.mrf.mxu0
        %v2771 = vadd.f32 0.0, %v2770
        %2772 = vmatmul.bf16.gmra.mxu0 %v1796
        %v2773 = vpop.f32.mrf.mxu0
        %v2774 = vadd.f32 0.0, %v2773
        %v2775 = vpop.f32.mrf.mxu0
        %v2776 = vadd.f32 0.0, %v2775
        %2777 = vmatmul.bf16.gmra.mxu0 %v1799
        %v2778 = vpop.f32.mrf.mxu0
        %v2779 = vadd.f32 0.0, %v2778
        %v2780 = vpop.f32.mrf.mxu0
        %v2781 = vadd.f32 0.0, %v2780
        %2782 = vmatmul.bf16.gmra.mxu0 %v1802
        %v2783 = vpop.f32.mrf.mxu0
        %v2784 = vadd.f32 0.0, %v2783
        %v2785 = vpop.f32.mrf.mxu0
        %v2786 = vadd.f32 0.0, %v2785
        %2787 = vmatmul.bf16.gmra.mxu0 %v1805
        %v2788 = vpop.f32.mrf.mxu0
        %v2789 = vadd.f32 0.0, %v2788
        %v2790 = vpop.f32.mrf.mxu0
        %v2791 = vadd.f32 0.0, %v2790
        %2792 = vmatmul.bf16.gmra.mxu0 %v1808
        %v2793 = vpop.f32.mrf.mxu0
        %v2794 = vadd.f32 0.0, %v2793
        %v2795 = vpop.f32.mrf.mxu0
        %v2796 = vadd.f32 0.0, %v2795
        %2797 = vmatmul.bf16.gmra.mxu0 %v1811
        %v2798 = vpop.f32.mrf.mxu0
        %v2799 = vadd.f32 0.0, %v2798
        %v2800 = vpop.f32.mrf.mxu0
        %v2801 = vadd.f32 0.0, %v2800
        %2802 = vmatmul.bf16.gmra.mxu0 %v1814
        %v2803 = vpop.f32.mrf.mxu0
        %v2804 = vadd.f32 0.0, %v2803
        %v2805 = vpop.f32.mrf.mxu0
        %v2806 = vadd.f32 0.0, %v2805
        %2807 = vmatmul.bf16.gmra.mxu0 %v1817
        %v2808 = vpop.f32.mrf.mxu0
        %v2809 = vadd.f32 0.0, %v2808
        %v2810 = vpop.f32.mrf.mxu0
        %v2811 = vadd.f32 0.0, %v2810
        %2812 = vmatmul.bf16.gmra.mxu0 %v1820
        %v2813 = vpop.f32.mrf.mxu0
        %v2814 = vadd.f32 0.0, %v2813
        %v2815 = vpop.f32.mrf.mxu0
        %v2816 = vadd.f32 0.0, %v2815
        %2817 = vmatmul.bf16.gmra.mxu0 %v1823
        %v2818 = vpop.f32.mrf.mxu0
        %v2819 = vadd.f32 0.0, %v2818
        %v2820 = vpop.f32.mrf.mxu0
        %v2821 = vadd.f32 0.0, %v2820
        %2822 = vmatmul.bf16.gmra.mxu0 %v1826
        %v2823 = vpop.f32.mrf.mxu0
        %v2824 = vadd.f32 0.0, %v2823
        %v2825 = vpop.f32.mrf.mxu0
        %v2826 = vadd.f32 0.0, %v2825
        %2827 = vmatmul.bf16.gmra.mxu0 %v1829
        %v2828 = vpop.f32.mrf.mxu0
        %v2829 = vadd.f32 0.0, %v2828
        %v2830 = vpop.f32.mrf.mxu0
        %v2831 = vadd.f32 0.0, %v2830
        %2832 = vmatmul.bf16.gmra.mxu0 %v1832
        %v2833 = vpop.f32.mrf.mxu0
        %v2834 = vadd.f32 0.0, %v2833
        %v2835 = vpop.f32.mrf.mxu0
        %v2836 = vadd.f32 0.0, %v2835
        %2837 = vmatmul.bf16.gmra.mxu0 %v1835
        %v2838 = vpop.f32.mrf.mxu0
        %v2839 = vadd.f32 0.0, %v2838
        %v2840 = vpop.f32.mrf.mxu0
        %v2841 = vadd.f32 0.0, %v2840
        %2842 = vmatmul.bf16.gmra.mxu0 %v1838
        %v2843 = vpop.f32.mrf.mxu0
        %v2844 = vadd.f32 0.0, %v2843
        %v2845 = vpop.f32.mrf.mxu0
        %v2846 = vadd.f32 0.0, %v2845
        %2847 = vmatmul.bf16.gmra.mxu0 %v1841
        %v2848 = vpop.f32.mrf.mxu0
        %v2849 = vadd.f32 0.0, %v2848
        %v2850 = vpop.f32.mrf.mxu0
        %v2851 = vadd.f32 0.0, %v2850
        %2852 = vmatmul.bf16.gmra.mxu0 %v1844
        %v2853 = vpop.f32.mrf.mxu0
        %v2854 = vadd.f32 0.0, %v2853
        %v2855 = vpop.f32.mrf.mxu0
        %v2856 = vadd.f32 0.0, %v2855
        %2857 = vmatmul.bf16.gmra.mxu0 %v1847
        %v2858 = vpop.f32.mrf.mxu0
        %v2859 = vadd.f32 0.0, %v2858
        %v2860 = vpop.f32.mrf.mxu0
        %v2861 = vadd.f32 0.0, %v2860
        %2862 = vdwg.mxu0
        %v2863 = vpack.c.bf16 %v1861, %v1859
        %v2864 = vpack.c.bf16 %v2030, %v2028
        %v2865 = vpack.c.bf16 %v2199, %v2197
        %v2866 = vpack.c.bf16 %v2368, %v2366
        %v2867 = vpack.c.bf16 %v2537, %v2535
        %v2868 = vpack.c.bf16 %v2706, %v2704
        %v2869 = vpack.c.bf16 %v1866, %v1864
        %v2870 = vpack.c.bf16 %v2035, %v2033
        %v2871 = vpack.c.bf16 %v2204, %v2202
        %v2872 = vpack.c.bf16 %v2373, %v2371
        %v2873 = vpack.c.bf16 %v2542, %v2540
        %v2874 = vpack.c.bf16 %v2711, %v2709
        %v2875 = vpack.c.bf16 %v1871, %v1869
        %v2876 = vpack.c.bf16 %v2040, %v2038
        %v2877 = vpack.c.bf16 %v2209, %v2207
        %v2878 = vpack.c.bf16 %v2378, %v2376
        %v2879 = vpack.c.bf16 %v2547, %v2545
        %v2880 = vpack.c.bf16 %v2716, %v2714
        %v2881 = vpack.c.bf16 %v1876, %v1874
        %v2882 = vpack.c.bf16 %v2045, %v2043
        %v2883 = vpack.c.bf16 %v2214, %v2212
        %v2884 = vpack.c.bf16 %v2383, %v2381
        %v2885 = vpack.c.bf16 %v2552, %v2550
        %v2886 = vpack.c.bf16 %v2721, %v2719
        %v2887 = vpack.c.bf16 %v1881, %v1879
        %v2888 = vpack.c.bf16 %v2050, %v2048
        %v2889 = vpack.c.bf16 %v2219, %v2217
        %v2890 = vpack.c.bf16 %v2388, %v2386
        %v2891 = vpack.c.bf16 %v2557, %v2555
        %v2892 = vpack.c.bf16 %v2726, %v2724
        %v2893 = vpack.c.bf16 %v1886, %v1884
        %v2894 = vpack.c.bf16 %v2055, %v2053
        %v2895 = vpack.c.bf16 %v2224, %v2222
        %v2896 = vpack.c.bf16 %v2393, %v2391
        %v2897 = vpack.c.bf16 %v2562, %v2560
        %v2898 = vpack.c.bf16 %v2731, %v2729
        %v2899 = vpack.c.bf16 %v1891, %v1889
        %v2900 = vpack.c.bf16 %v2060, %v2058
        %v2901 = vpack.c.bf16 %v2229, %v2227
        %v2902 = vpack.c.bf16 %v2398, %v2396
        %v2903 = vpack.c.bf16 %v2567, %v2565
        %v2904 = vpack.c.bf16 %v2736, %v2734
        %v2905 = vpack.c.bf16 %v1896, %v1894
        %v2906 = vpack.c.bf16 %v2065, %v2063
        %v2907 = vpack.c.bf16 %v2234, %v2232
        %v2908 = vpack.c.bf16 %v2403, %v2401
        %v2909 = vpack.c.bf16 %v2572, %v2570
        %v2910 = vpack.c.bf16 %v2741, %v2739
        %v2911 = vpack.c.bf16 %v1901, %v1899
        %v2912 = vpack.c.bf16 %v2070, %v2068
        %v2913 = vpack.c.bf16 %v2239, %v2237
        %v2914 = vpack.c.bf16 %v2408, %v2406
        %v2915 = vpack.c.bf16 %v2577, %v2575
        %v2916 = vpack.c.bf16 %v2746, %v2744
        %v2917 = vpack.c.bf16 %v1906, %v1904
        %v2918 = vpack.c.bf16 %v2075, %v2073
        %v2919 = vpack.c.bf16 %v2244, %v2242
        %v2920 = vpack.c.bf16 %v2413, %v2411
        %v2921 = vpack.c.bf16 %v2582, %v2580
        %v2922 = vpack.c.bf16 %v2751, %v2749
        %v2923 = vpack.c.bf16 %v1911, %v1909
        %v2924 = vpack.c.bf16 %v2080, %v2078
        %v2925 = vpack.c.bf16 %v2249, %v2247
        %v2926 = vpack.c.bf16 %v2418, %v2416
        %v2927 = vpack.c.bf16 %v2587, %v2585
        %v2928 = vpack.c.bf16 %v2756, %v2754
        %v2929 = vpack.c.bf16 %v1916, %v1914
        %v2930 = vpack.c.bf16 %v2085, %v2083
        %v2931 = vpack.c.bf16 %v2254, %v2252
        %v2932 = vpack.c.bf16 %v2423, %v2421
        %v2933 = vpack.c.bf16 %v2592, %v2590
        %v2934 = vpack.c.bf16 %v2761, %v2759
        %v2935 = vpack.c.bf16 %v1921, %v1919
        %v2936 = vpack.c.bf16 %v2090, %v2088
        %v2937 = vpack.c.bf16 %v2259, %v2257
        %v2938 = vpack.c.bf16 %v2428, %v2426
        %v2939 = vpack.c.bf16 %v2597, %v2595
        %v2940 = vpack.c.bf16 %v2766, %v2764
        %v2941 = vpack.c.bf16 %v1926, %v1924
        %v2942 = vpack.c.bf16 %v2095, %v2093
        %v2943 = vpack.c.bf16 %v2264, %v2262
        %v2944 = vpack.c.bf16 %v2433, %v2431
        %v2945 = vpack.c.bf16 %v2602, %v2600
        %v2946 = vpack.c.bf16 %v2771, %v2769
        %v2947 = vpack.c.bf16 %v1931, %v1929
        %v2948 = vpack.c.bf16 %v2100, %v2098
        %v2949 = vpack.c.bf16 %v2269, %v2267
        %v2950 = vpack.c.bf16 %v2438, %v2436
        %v2951 = vpack.c.bf16 %v2607, %v2605
        %v2952 = vpack.c.bf16 %v2776, %v2774
        %v2953 = vpack.c.bf16 %v1936, %v1934
        %v2954 = vpack.c.bf16 %v2105, %v2103
        %v2955 = vpack.c.bf16 %v2274, %v2272
        %v2956 = vpack.c.bf16 %v2443, %v2441
        %v2957 = vpack.c.bf16 %v2612, %v2610
        %v2958 = vpack.c.bf16 %v2781, %v2779
        %v2959 = vpack.c.bf16 %v1941, %v1939
        %v2960 = vpack.c.bf16 %v2110, %v2108
        %v2961 = vpack.c.bf16 %v2279, %v2277
        %v2962 = vpack.c.bf16 %v2448, %v2446
        %v2963 = vpack.c.bf16 %v2617, %v2615
        %v2964 = vpack.c.bf16 %v2786, %v2784
        %v2965 = vpack.c.bf16 %v1946, %v1944
        %v2966 = vpack.c.bf16 %v2115, %v2113
        %v2967 = vpack.c.bf16 %v2284, %v2282
        %v2968 = vpack.c.bf16 %v2453, %v2451
        %v2969 = vpack.c.bf16 %v2622, %v2620
        %v2970 = vpack.c.bf16 %v2791, %v2789
        %v2971 = vpack.c.bf16 %v1951, %v1949
        %v2972 = vpack.c.bf16 %v2120, %v2118
        %v2973 = vpack.c.bf16 %v2289, %v2287
        %v2974 = vpack.c.bf16 %v2458, %v2456
        %v2975 = vpack.c.bf16 %v2627, %v2625
        %v2976 = vpack.c.bf16 %v2796, %v2794
        %v2977 = vpack.c.bf16 %v1956, %v1954
        %v2978 = vpack.c.bf16 %v2125, %v2123
        %v2979 = vpack.c.bf16 %v2294, %v2292
        %v2980 = vpack.c.bf16 %v2463, %v2461
        %v2981 = vpack.c.bf16 %v2632, %v2630
        %v2982 = vpack.c.bf16 %v2801, %v2799
        %v2983 = vpack.c.bf16 %v1961, %v1959
        %v2984 = vpack.c.bf16 %v2130, %v2128
        %v2985 = vpack.c.bf16 %v2299, %v2297
        %v2986 = vpack.c.bf16 %v2468, %v2466
        %v2987 = vpack.c.bf16 %v2637, %v2635
        %v2988 = vpack.c.bf16 %v2806, %v2804
        %v2989 = vpack.c.bf16 %v1966, %v1964
        %v2990 = vpack.c.bf16 %v2135, %v2133
        %v2991 = vpack.c.bf16 %v2304, %v2302
        %v2992 = vpack.c.bf16 %v2473, %v2471
        %v2993 = vpack.c.bf16 %v2642, %v2640
        %v2994 = vpack.c.bf16 %v2811, %v2809
        %v2995 = vpack.c.bf16 %v1971, %v1969
        %v2996 = vpack.c.bf16 %v2140, %v2138
        %v2997 = vpack.c.bf16 %v2309, %v2307
        %v2998 = vpack.c.bf16 %v2478, %v2476
        %v2999 = vpack.c.bf16 %v2647, %v2645
        %v3000 = vpack.c.bf16 %v2816, %v2814
        %v3001 = vpack.c.bf16 %v1976, %v1974
        %v3002 = vpack.c.bf16 %v2145, %v2143
        %v3003 = vpack.c.bf16 %v2314, %v2312
        %v3004 = vpack.c.bf16 %v2483, %v2481
        %v3005 = vpack.c.bf16 %v2652, %v2650
        %v3006 = vpack.c.bf16 %v2821, %v2819
        %v3007 = vpack.c.bf16 %v1981, %v1979
        %v3008 = vpack.c.bf16 %v2150, %v2148
        %v3009 = vpack.c.bf16 %v2319, %v2317
        %v3010 = vpack.c.bf16 %v2488, %v2486
        %v3011 = vpack.c.bf16 %v2657, %v2655
        %v3012 = vpack.c.bf16 %v2826, %v2824
        %v3013 = vpack.c.bf16 %v1986, %v1984
        %v3014 = vpack.c.bf16 %v2155, %v2153
        %v3015 = vpack.c.bf16 %v2324, %v2322
        %v3016 = vpack.c.bf16 %v2493, %v2491
        %v3017 = vpack.c.bf16 %v2662, %v2660
        %v3018 = vpack.c.bf16 %v2831, %v2829
        %v3019 = vpack.c.bf16 %v1991, %v1989
        %v3020 = vpack.c.bf16 %v2160, %v2158
        %v3021 = vpack.c.bf16 %v2329, %v2327
        %v3022 = vpack.c.bf16 %v2498, %v2496
        %v3023 = vpack.c.bf16 %v2667, %v2665
        %v3024 = vpack.c.bf16 %v2836, %v2834
        %v3025 = vpack.c.bf16 %v1996, %v1994
        %v3026 = vpack.c.bf16 %v2165, %v2163
        %v3027 = vpack.c.bf16 %v2334, %v2332
        %v3028 = vpack.c.bf16 %v2503, %v2501
        %v3029 = vpack.c.bf16 %v2672, %v2670
        %v3030 = vpack.c.bf16 %v2841, %v2839
        %v3031 = vpack.c.bf16 %v2001, %v1999
        %v3032 = vpack.c.bf16 %v2170, %v2168
        %v3033 = vpack.c.bf16 %v2339, %v2337
        %v3034 = vpack.c.bf16 %v2508, %v2506
        %v3035 = vpack.c.bf16 %v2677, %v2675
        %v3036 = vpack.c.bf16 %v2846, %v2844
        %v3037 = vpack.c.bf16 %v2006, %v2004
        %v3038 = vpack.c.bf16 %v2175, %v2173
        %v3039 = vpack.c.bf16 %v2344, %v2342
        %v3040 = vpack.c.bf16 %v2513, %v2511
        %v3041 = vpack.c.bf16 %v2682, %v2680
        %v3042 = vpack.c.bf16 %v2851, %v2849
        %v3043 = vpack.c.bf16 %v2011, %v2009
        %v3044 = vpack.c.bf16 %v2180, %v2178
        %v3045 = vpack.c.bf16 %v2349, %v2347
        %v3046 = vpack.c.bf16 %v2518, %v2516
        %v3047 = vpack.c.bf16 %v2687, %v2685
        %v3048 = vpack.c.bf16 %v2856, %v2854
        %v3049 = vpack.c.bf16 %v2016, %v2014
        %v3050 = vpack.c.bf16 %v2185, %v2183
        %v3051 = vpack.c.bf16 %v2354, %v2352
        %v3052 = vpack.c.bf16 %v2523, %v2521
        %v3053 = vpack.c.bf16 %v2692, %v2690
        %v3054 = vpack.c.bf16 %v2861, %v2859
        %v3055 = vld [vmem:[%s5] sm:$0xf]
        %v3056 = vld [vmem:[%s5 + $0x4] sm:$0xf]
        %v3057 = vld [vmem:[%s5 + $0x8] sm:$0xf]
        %v3058 = vld [vmem:[%s5 + $0xc] sm:$0xf]
        %v3059 = vld [vmem:[%s5 + $0x10] sm:$0xf]
        %v3060 = vld [vmem:[%s5 + $0x14] sm:$0xf]
        %v3061 = vld [vmem:[%s5 + $0x18] sm:$0xf]
        %v3062 = vld [vmem:[%s5 + $0x1c] sm:$0xf]
        %v3063 = vld [vmem:[%s5 + $0x20] sm:$0xf]
        %v3064 = vld [vmem:[%s5 + $0x24] sm:$0xf]
        %v3065 = vld [vmem:[%s5 + $0x28] sm:$0xf]
        %v3066 = vld [vmem:[%s5 + $0x2c] sm:$0xf]
        %v3067 = vld [vmem:[%s5 + $0x30] sm:$0xf]
        %v3068 = vld [vmem:[%s5 + $0x34] sm:$0xf]
        %v3069 = vld [vmem:[%s5 + $0x38] sm:$0xf]
        %v3070 = vld [vmem:[%s5 + $0x3c] sm:$0xf]
        %v3071 = vld [vmem:[%s5 + $0x40] sm:$0xf]
        %v3072 = vld [vmem:[%s5 + $0x44] sm:$0xf]
        %v3073 = vld [vmem:[%s5 + $0x48] sm:$0xf]
        %v3074 = vld [vmem:[%s5 + $0x4c] sm:$0xf]
        %v3075 = vld [vmem:[%s5 + $0x50] sm:$0xf]
        %v3076 = vld [vmem:[%s5 + $0x54] sm:$0xf]
        %v3077 = vld [vmem:[%s5 + $0x58] sm:$0xf]
        %v3078 = vld [vmem:[%s5 + $0x5c] sm:$0xf]
        %v3079 = vld [vmem:[%s5 + $0x60] sm:$0xf]
        %v3080 = vld [vmem:[%s5 + $0x64] sm:$0xf]
        %v3081 = vld [vmem:[%s5 + $0x68] sm:$0xf]
        %v3082 = vld [vmem:[%s5 + $0x6c] sm:$0xf]
        %v3083 = vld [vmem:[%s5 + $0x70] sm:$0xf]
        %v3084 = vld [vmem:[%s5 + $0x74] sm:$0xf]
        %v3085 = vld [vmem:[%s5 + $0x78] sm:$0xf]
        %v3086 = vld [vmem:[%s5 + $0x7c] sm:$0xf]
        %v3087 = vld [vmem:[%s5 + $0x80] sm:$0xf]
        %v3088 = vld [vmem:[%s5 + $0x84] sm:$0xf]
        %v3089 = vld [vmem:[%s5 + $0x88] sm:$0xf]
        %v3090 = vld [vmem:[%s5 + $0x8c] sm:$0xf]
        %v3091 = vld [vmem:[%s5 + $0x90] sm:$0xf]
        %v3092 = vld [vmem:[%s5 + $0x94] sm:$0xf]
        %v3093 = vld [vmem:[%s5 + $0x98] sm:$0xf]
        %v3094 = vld [vmem:[%s5 + $0x9c] sm:$0xf]
        %v3095 = vld [vmem:[%s5 + $0xa0] sm:$0xf]
        %v3096 = vld [vmem:[%s5 + $0xa4] sm:$0xf]
        %v3097 = vld [vmem:[%s5 + $0xa8] sm:$0xf]
        %v3098 = vld [vmem:[%s5 + $0xac] sm:$0xf]
        %v3099 = vld [vmem:[%s5 + $0xb0] sm:$0xf]
        %v3100 = vld [vmem:[%s5 + $0xb4] sm:$0xf]
        %v3101 = vld [vmem:[%s5 + $0xb8] sm:$0xf]
        %v3102 = vld [vmem:[%s5 + $0xbc] sm:$0xf]
        %v3103 = vld [vmem:[%s5 + $0xc0] sm:$0xf]
        %v3104 = vld [vmem:[%s5 + $0xc4] sm:$0xf]
        %v3105 = vld [vmem:[%s5 + $0xc8] sm:$0xf]
        %v3106 = vld [vmem:[%s5 + $0xcc] sm:$0xf]
        %v3107 = vld [vmem:[%s5 + $0xd0] sm:$0xf]
        %v3108 = vld [vmem:[%s5 + $0xd4] sm:$0xf]
        %v3109 = vld [vmem:[%s5 + $0xd8] sm:$0xf]
        %v3110 = vld [vmem:[%s5 + $0xdc] sm:$0xf]
        %v3111 = vld [vmem:[%s5 + $0xe0] sm:$0xf]
        %v3112 = vld [vmem:[%s5 + $0xe4] sm:$0xf]
        %v3113 = vld [vmem:[%s5 + $0xe8] sm:$0xf]
        %v3114 = vld [vmem:[%s5 + $0xec] sm:$0xf]
        %v3115 = vld [vmem:[%s5 + $0xf0] sm:$0xf]
        %v3116 = vld [vmem:[%s5 + $0xf4] sm:$0xf]
        %v3117 = vld [vmem:[%s5 + $0xf8] sm:$0xf]
        %v3118 = vld [vmem:[%s5 + $0xfc] sm:$0xf]
        %v3119 = vld [vmem:[%s5 + $0x100] sm:$0xf]
        %v3120 = vld [vmem:[%s5 + $0x104] sm:$0xf]
        %v3121 = vld [vmem:[%s5 + $0x108] sm:$0xf]
        %v3122 = vld [vmem:[%s5 + $0x10c] sm:$0xf]
        %v3123 = vld [vmem:[%s5 + $0x110] sm:$0xf]
        %v3124 = vld [vmem:[%s5 + $0x114] sm:$0xf]
        %v3125 = vld [vmem:[%s5 + $0x118] sm:$0xf]
        %v3126 = vld [vmem:[%s5 + $0x11c] sm:$0xf]
        %v3127 = vld [vmem:[%s5 + $0x120] sm:$0xf]
        %v3128 = vld [vmem:[%s5 + $0x124] sm:$0xf]
        %v3129 = vld [vmem:[%s5 + $0x128] sm:$0xf]
        %v3130 = vld [vmem:[%s5 + $0x12c] sm:$0xf]
        %v3131 = vld [vmem:[%s5 + $0x130] sm:$0xf]
        %v3132 = vld [vmem:[%s5 + $0x134] sm:$0xf]
        %v3133 = vld [vmem:[%s5 + $0x138] sm:$0xf]
        %v3134 = vld [vmem:[%s5 + $0x13c] sm:$0xf]
        %v3135 = vld [vmem:[%s5 + $0x140] sm:$0xf]
        %v3136 = vld [vmem:[%s5 + $0x144] sm:$0xf]
        %v3137 = vld [vmem:[%s5 + $0x148] sm:$0xf]
        %v3138 = vld [vmem:[%s5 + $0x14c] sm:$0xf]
        %v3139 = vld [vmem:[%s5 + $0x150] sm:$0xf]
        %v3140 = vld [vmem:[%s5 + $0x154] sm:$0xf]
        %v3141 = vld [vmem:[%s5 + $0x158] sm:$0xf]
        %v3142 = vld [vmem:[%s5 + $0x15c] sm:$0xf]
        %v3143 = vld [vmem:[%s5 + $0x160] sm:$0xf]
        %v3144 = vld [vmem:[%s5 + $0x164] sm:$0xf]
        %v3145 = vld [vmem:[%s5 + $0x168] sm:$0xf]
        %v3146 = vld [vmem:[%s5 + $0x16c] sm:$0xf]
        %v3147 = vld [vmem:[%s5 + $0x170] sm:$0xf]
        %v3148 = vld [vmem:[%s5 + $0x174] sm:$0xf]
        %v3149 = vld [vmem:[%s5 + $0x178] sm:$0xf]
        %v3150 = vld [vmem:[%s5 + $0x17c] sm:$0xf]
        %v3151 = vld [vmem:[%s6] sm:$0x1]
        %v3153 = vperm.slane %v3151, 0
        %v3251 = vunpack.c.l.b16 %v3055
        %v3252 = vunpack.c.l.b16 %v3056
        %v3253 = vunpack.c.l.b16 %v3057
        %v3254 = vunpack.c.l.b16 %v3058
        %v3255 = vunpack.c.l.b16 %v3059
        %v3256 = vunpack.c.l.b16 %v3060
        %v3257 = vunpack.c.l.b16 %v3061
        %v3258 = vunpack.c.l.b16 %v3062
        %v3259 = vunpack.c.l.b16 %v3063
        %v3260 = vunpack.c.l.b16 %v3064
        %v3261 = vunpack.c.l.b16 %v3065
        %v3262 = vunpack.c.l.b16 %v3066
        %v3263 = vunpack.c.l.b16 %v3067
        %v3264 = vunpack.c.l.b16 %v3068
        %v3265 = vunpack.c.l.b16 %v3069
        %v3266 = vunpack.c.l.b16 %v3070
        %v3267 = vunpack.c.l.b16 %v3071
        %v3268 = vunpack.c.l.b16 %v3072
        %v3269 = vunpack.c.l.b16 %v3073
        %v3270 = vunpack.c.l.b16 %v3074
        %v3271 = vunpack.c.l.b16 %v3075
        %v3272 = vunpack.c.l.b16 %v3076
        %v3273 = vunpack.c.l.b16 %v3077
        %v3274 = vunpack.c.l.b16 %v3078
        %v3275 = vunpack.c.l.b16 %v3079
        %v3276 = vunpack.c.l.b16 %v3080
        %v3277 = vunpack.c.l.b16 %v3081
        %v3278 = vunpack.c.l.b16 %v3082
        %v3279 = vunpack.c.l.b16 %v3083
        %v3280 = vunpack.c.l.b16 %v3084
        %v3281 = vunpack.c.l.b16 %v3085
        %v3282 = vunpack.c.l.b16 %v3086
        %v3283 = vunpack.c.l.b16 %v3087
        %v3284 = vunpack.c.l.b16 %v3088
        %v3285 = vunpack.c.l.b16 %v3089
        %v3286 = vunpack.c.l.b16 %v3090
        %v3287 = vunpack.c.l.b16 %v3091
        %v3288 = vunpack.c.l.b16 %v3092
        %v3289 = vunpack.c.l.b16 %v3093
        %v3290 = vunpack.c.l.b16 %v3094
        %v3291 = vunpack.c.l.b16 %v3095
        %v3292 = vunpack.c.l.b16 %v3096
        %v3293 = vunpack.c.l.b16 %v3097
        %v3294 = vunpack.c.l.b16 %v3098
        %v3295 = vunpack.c.l.b16 %v3099
        %v3296 = vunpack.c.l.b16 %v3100
        %v3297 = vunpack.c.l.b16 %v3101
        %v3298 = vunpack.c.l.b16 %v3102
        %v3299 = vunpack.c.l.b16 %v3103
        %v3300 = vunpack.c.l.b16 %v3104
        %v3301 = vunpack.c.l.b16 %v3105
        %v3302 = vunpack.c.l.b16 %v3106
        %v3303 = vunpack.c.l.b16 %v3107
        %v3304 = vunpack.c.l.b16 %v3108
        %v3305 = vunpack.c.l.b16 %v3109
        %v3306 = vunpack.c.l.b16 %v3110
        %v3307 = vunpack.c.l.b16 %v3111
        %v3308 = vunpack.c.l.b16 %v3112
        %v3309 = vunpack.c.l.b16 %v3113
        %v3310 = vunpack.c.l.b16 %v3114
        %v3311 = vunpack.c.l.b16 %v3115
        %v3312 = vunpack.c.l.b16 %v3116
        %v3313 = vunpack.c.l.b16 %v3117
        %v3314 = vunpack.c.l.b16 %v3118
        %v3315 = vunpack.c.l.b16 %v3119
        %v3316 = vunpack.c.l.b16 %v3120
        %v3317 = vunpack.c.l.b16 %v3121
        %v3318 = vunpack.c.l.b16 %v3122
        %v3319 = vunpack.c.l.b16 %v3123
        %v3320 = vunpack.c.l.b16 %v3124
        %v3321 = vunpack.c.l.b16 %v3125
        %v3322 = vunpack.c.l.b16 %v3126
        %v3323 = vunpack.c.l.b16 %v3127
        %v3324 = vunpack.c.l.b16 %v3128
        %v3325 = vunpack.c.l.b16 %v3129
        %v3326 = vunpack.c.l.b16 %v3130
        %v3327 = vunpack.c.l.b16 %v3131
        %v3328 = vunpack.c.l.b16 %v3132
        %v3329 = vunpack.c.l.b16 %v3133
        %v3330 = vunpack.c.l.b16 %v3134
        %v3331 = vunpack.c.l.b16 %v3135
        %v3332 = vunpack.c.l.b16 %v3136
        %v3333 = vunpack.c.l.b16 %v3137
        %v3334 = vunpack.c.l.b16 %v3138
        %v3335 = vunpack.c.l.b16 %v3139
        %v3336 = vunpack.c.l.b16 %v3140
        %v3337 = vunpack.c.l.b16 %v3141
        %v3338 = vunpack.c.l.b16 %v3142
        %v3339 = vunpack.c.l.b16 %v3143
        %v3340 = vunpack.c.l.b16 %v3144
        %v3341 = vunpack.c.l.b16 %v3145
        %v3342 = vunpack.c.l.b16 %v3146
        %v3343 = vunpack.c.l.b16 %v3147
        %v3344 = vunpack.c.l.b16 %v3148
        %v3345 = vunpack.c.l.b16 %v3149
        %v3346 = vunpack.c.l.b16 %v3150
        %v3347 = vpack.c.b16 %v3252, %v3251
        %v3348 = vpack.c.b16 %v3254, %v3253
        %v3349 = vpack.c.b16 %v3256, %v3255
        %v3350 = vpack.c.b16 %v3258, %v3257
        %v3351 = vpack.c.b16 %v3260, %v3259
        %v3352 = vpack.c.b16 %v3262, %v3261
        %v3353 = vpack.c.b16 %v3264, %v3263
        %v3354 = vpack.c.b16 %v3266, %v3265
        %v3355 = vpack.c.b16 %v3268, %v3267
        %v3356 = vpack.c.b16 %v3270, %v3269
        %v3357 = vpack.c.b16 %v3272, %v3271
        %v3358 = vpack.c.b16 %v3274, %v3273
        %v3359 = vpack.c.b16 %v3276, %v3275
        %v3360 = vpack.c.b16 %v3278, %v3277
        %v3361 = vpack.c.b16 %v3280, %v3279
        %v3362 = vpack.c.b16 %v3282, %v3281
        %v3363 = vpack.c.b16 %v3284, %v3283
        %v3364 = vpack.c.b16 %v3286, %v3285
        %v3365 = vpack.c.b16 %v3288, %v3287
        %v3366 = vpack.c.b16 %v3290, %v3289
        %v3367 = vpack.c.b16 %v3292, %v3291
        %v3368 = vpack.c.b16 %v3294, %v3293
        %v3369 = vpack.c.b16 %v3296, %v3295
        %v3370 = vpack.c.b16 %v3298, %v3297
        %v3371 = vpack.c.b16 %v3300, %v3299
        %v3372 = vpack.c.b16 %v3302, %v3301
        %v3373 = vpack.c.b16 %v3304, %v3303
        %v3374 = vpack.c.b16 %v3306, %v3305
        %v3375 = vpack.c.b16 %v3308, %v3307
        %v3376 = vpack.c.b16 %v3310, %v3309
        %v3377 = vpack.c.b16 %v3312, %v3311
        %v3378 = vpack.c.b16 %v3314, %v3313
        %v3379 = vpack.c.b16 %v3316, %v3315
        %v3380 = vpack.c.b16 %v3318, %v3317
        %v3381 = vpack.c.b16 %v3320, %v3319
        %v3382 = vpack.c.b16 %v3322, %v3321
        %v3383 = vpack.c.b16 %v3324, %v3323
        %v3384 = vpack.c.b16 %v3326, %v3325
        %v3385 = vpack.c.b16 %v3328, %v3327
        %v3386 = vpack.c.b16 %v3330, %v3329
        %v3387 = vpack.c.b16 %v3332, %v3331
        %v3388 = vpack.c.b16 %v3334, %v3333
        %v3389 = vpack.c.b16 %v3336, %v3335
        %v3390 = vpack.c.b16 %v3338, %v3337
        %v3391 = vpack.c.b16 %v3340, %v3339
        %v3392 = vpack.c.b16 %v3342, %v3341
        %v3393 = vpack.c.b16 %v3344, %v3343
        %v3394 = vpack.c.b16 %v3346, %v3345
        %3443 = vmatpush.bf16.msra.mxu0 %v3354
        %3444 = vmatpush.bf16.msra.mxu0 %v3353
        %3445 = vmatpush.bf16.msra.mxu0 %v3352
        %3446 = vmatpush.bf16.msra.mxu0 %v3351
        %3447 = vmatpush.bf16.msra.mxu0 %v3350
        %3448 = vmatpush.bf16.msra.mxu0 %v3349
        %3449 = vmatpush.bf16.msra.mxu0 %v3348
        %3450 = vmatpush.bf16.msra.mxu0 %v3347
        %3451 = vmatmul.bf16.gmra.mxu0 %v2863
        %v3452 = vpop.f32.mrf.mxu0
        %v3453 = vadd.f32 %v3153, %v3452
        %v3454 = vpop.f32.mrf.mxu0
        %v3455 = vadd.f32 %v3153, %v3454
        %3456 = vmatmul.bf16.gmra.mxu0 %v2869
        %v3457 = vpop.f32.mrf.mxu0
        %v3458 = vadd.f32 %v3153, %v3457
        %v3459 = vpop.f32.mrf.mxu0
        %v3460 = vadd.f32 %v3153, %v3459
        %3461 = vmatmul.bf16.gmra.mxu0 %v2875
        %v3462 = vpop.f32.mrf.mxu0
        %v3463 = vadd.f32 %v3153, %v3462
        %v3464 = vpop.f32.mrf.mxu0
        %v3465 = vadd.f32 %v3153, %v3464
        %3466 = vmatmul.bf16.gmra.mxu0 %v2881
        %v3467 = vpop.f32.mrf.mxu0
        %v3468 = vadd.f32 %v3153, %v3467
        %v3469 = vpop.f32.mrf.mxu0
        %v3470 = vadd.f32 %v3153, %v3469
        %3471 = vmatmul.bf16.gmra.mxu0 %v2887
        %v3472 = vpop.f32.mrf.mxu0
        %v3473 = vadd.f32 %v3153, %v3472
        %v3474 = vpop.f32.mrf.mxu0
        %v3475 = vadd.f32 %v3153, %v3474
        %3476 = vmatmul.bf16.gmra.mxu0 %v2893
        %v3477 = vpop.f32.mrf.mxu0
        %v3478 = vadd.f32 %v3153, %v3477
        %v3479 = vpop.f32.mrf.mxu0
        %v3480 = vadd.f32 %v3153, %v3479
        %3481 = vmatmul.bf16.gmra.mxu0 %v2899
        %v3482 = vpop.f32.mrf.mxu0
        %v3483 = vadd.f32 %v3153, %v3482
        %v3484 = vpop.f32.mrf.mxu0
        %v3485 = vadd.f32 %v3153, %v3484
        %3486 = vmatmul.bf16.gmra.mxu0 %v2905
        %v3487 = vpop.f32.mrf.mxu0
        %v3488 = vadd.f32 %v3153, %v3487
        %v3489 = vpop.f32.mrf.mxu0
        %v3490 = vadd.f32 %v3153, %v3489
        %3491 = vmatmul.bf16.gmra.mxu0 %v2911
        %v3492 = vpop.f32.mrf.mxu0
        %v3493 = vadd.f32 %v3153, %v3492
        %v3494 = vpop.f32.mrf.mxu0
        %v3495 = vadd.f32 %v3153, %v3494
        %3496 = vmatmul.bf16.gmra.mxu0 %v2917
        %v3497 = vpop.f32.mrf.mxu0
        %v3498 = vadd.f32 %v3153, %v3497
        %v3499 = vpop.f32.mrf.mxu0
        %v3500 = vadd.f32 %v3153, %v3499
        %3501 = vmatmul.bf16.gmra.mxu0 %v2923
        %v3502 = vpop.f32.mrf.mxu0
        %v3503 = vadd.f32 %v3153, %v3502
        %v3504 = vpop.f32.mrf.mxu0
        %v3505 = vadd.f32 %v3153, %v3504
        %3506 = vmatmul.bf16.gmra.mxu0 %v2929
        %v3507 = vpop.f32.mrf.mxu0
        %v3508 = vadd.f32 %v3153, %v3507
        %v3509 = vpop.f32.mrf.mxu0
        %v3510 = vadd.f32 %v3153, %v3509
        %3511 = vmatmul.bf16.gmra.mxu0 %v2935
        %v3512 = vpop.f32.mrf.mxu0
        %v3513 = vadd.f32 %v3153, %v3512
        %v3514 = vpop.f32.mrf.mxu0
        %v3515 = vadd.f32 %v3153, %v3514
        %3516 = vmatmul.bf16.gmra.mxu0 %v2941
        %v3517 = vpop.f32.mrf.mxu0
        %v3518 = vadd.f32 %v3153, %v3517
        %v3519 = vpop.f32.mrf.mxu0
        %v3520 = vadd.f32 %v3153, %v3519
        %3521 = vmatmul.bf16.gmra.mxu0 %v2947
        %v3522 = vpop.f32.mrf.mxu0
        %v3523 = vadd.f32 %v3153, %v3522
        %v3524 = vpop.f32.mrf.mxu0
        %v3525 = vadd.f32 %v3153, %v3524
        %3526 = vmatmul.bf16.gmra.mxu0 %v2953
        %v3527 = vpop.f32.mrf.mxu0
        %v3528 = vadd.f32 %v3153, %v3527
        %v3529 = vpop.f32.mrf.mxu0
        %v3530 = vadd.f32 %v3153, %v3529
        %3531 = vmatmul.bf16.gmra.mxu0 %v2959
        %v3532 = vpop.f32.mrf.mxu0
        %v3533 = vadd.f32 %v3153, %v3532
        %v3534 = vpop.f32.mrf.mxu0
        %v3535 = vadd.f32 %v3153, %v3534
        %3536 = vmatmul.bf16.gmra.mxu0 %v2965
        %v3537 = vpop.f32.mrf.mxu0
        %v3538 = vadd.f32 %v3153, %v3537
        %v3539 = vpop.f32.mrf.mxu0
        %v3540 = vadd.f32 %v3153, %v3539
        %3541 = vmatmul.bf16.gmra.mxu0 %v2971
        %v3542 = vpop.f32.mrf.mxu0
        %v3543 = vadd.f32 %v3153, %v3542
        %v3544 = vpop.f32.mrf.mxu0
        %v3545 = vadd.f32 %v3153, %v3544
        %3546 = vmatmul.bf16.gmra.mxu0 %v2977
        %v3547 = vpop.f32.mrf.mxu0
        %v3548 = vadd.f32 %v3153, %v3547
        %v3549 = vpop.f32.mrf.mxu0
        %v3550 = vadd.f32 %v3153, %v3549
        %3551 = vmatmul.bf16.gmra.mxu0 %v2983
        %v3552 = vpop.f32.mrf.mxu0
        %v3553 = vadd.f32 %v3153, %v3552
        %v3554 = vpop.f32.mrf.mxu0
        %v3555 = vadd.f32 %v3153, %v3554
        %3556 = vmatmul.bf16.gmra.mxu0 %v2989
        %v3557 = vpop.f32.mrf.mxu0
        %v3558 = vadd.f32 %v3153, %v3557
        %v3559 = vpop.f32.mrf.mxu0
        %v3560 = vadd.f32 %v3153, %v3559
        %3561 = vmatmul.bf16.gmra.mxu0 %v2995
        %v3562 = vpop.f32.mrf.mxu0
        %v3563 = vadd.f32 %v3153, %v3562
        %v3564 = vpop.f32.mrf.mxu0
        %v3565 = vadd.f32 %v3153, %v3564
        %3566 = vmatmul.bf16.gmra.mxu0 %v3001
        %v3567 = vpop.f32.mrf.mxu0
        %v3568 = vadd.f32 %v3153, %v3567
        %v3569 = vpop.f32.mrf.mxu0
        %v3570 = vadd.f32 %v3153, %v3569
        %3571 = vmatmul.bf16.gmra.mxu0 %v3007
        %v3572 = vpop.f32.mrf.mxu0
        %v3573 = vadd.f32 %v3153, %v3572
        %v3574 = vpop.f32.mrf.mxu0
        %v3575 = vadd.f32 %v3153, %v3574
        %3576 = vmatmul.bf16.gmra.mxu0 %v3013
        %v3577 = vpop.f32.mrf.mxu0
        %v3578 = vadd.f32 %v3153, %v3577
        %v3579 = vpop.f32.mrf.mxu0
        %v3580 = vadd.f32 %v3153, %v3579
        %3581 = vmatmul.bf16.gmra.mxu0 %v3019
        %v3582 = vpop.f32.mrf.mxu0
        %v3583 = vadd.f32 %v3153, %v3582
        %v3584 = vpop.f32.mrf.mxu0
        %v3585 = vadd.f32 %v3153, %v3584
        %3586 = vmatmul.bf16.gmra.mxu0 %v3025
        %v3587 = vpop.f32.mrf.mxu0
        %v3588 = vadd.f32 %v3153, %v3587
        %v3589 = vpop.f32.mrf.mxu0
        %v3590 = vadd.f32 %v3153, %v3589
        %3591 = vmatmul.bf16.gmra.mxu0 %v3031
        %v3592 = vpop.f32.mrf.mxu0
        %v3593 = vadd.f32 %v3153, %v3592
        %v3594 = vpop.f32.mrf.mxu0
        %v3595 = vadd.f32 %v3153, %v3594
        %3596 = vmatmul.bf16.gmra.mxu0 %v3037
        %v3597 = vpop.f32.mrf.mxu0
        %v3598 = vadd.f32 %v3153, %v3597
        %v3599 = vpop.f32.mrf.mxu0
        %v3600 = vadd.f32 %v3153, %v3599
        %3601 = vmatmul.bf16.gmra.mxu0 %v3043
        %v3602 = vpop.f32.mrf.mxu0
        %v3603 = vadd.f32 %v3153, %v3602
        %v3604 = vpop.f32.mrf.mxu0
        %v3605 = vadd.f32 %v3153, %v3604
        %3606 = vmatmul.bf16.gmra.mxu0 %v3049
        %v3607 = vpop.f32.mrf.mxu0
        %v3608 = vadd.f32 %v3153, %v3607
        %v3609 = vpop.f32.mrf.mxu0
        %v3610 = vadd.f32 %v3153, %v3609
        %3611 = vdwg.mxu0
        %3612 = vmatpush.bf16.msra.mxu0 %v3362
        %3613 = vmatpush.bf16.msra.mxu0 %v3361
        %3614 = vmatpush.bf16.msra.mxu0 %v3360
        %3615 = vmatpush.bf16.msra.mxu0 %v3359
        %3616 = vmatpush.bf16.msra.mxu0 %v3358
        %3617 = vmatpush.bf16.msra.mxu0 %v3357
        %3618 = vmatpush.bf16.msra.mxu0 %v3356
        %3619 = vmatpush.bf16.msra.mxu0 %v3355
        %3620 = vmatmul.bf16.gmra.mxu0 %v2864
        %v3621 = vpop.f32.mrf.mxu0
        %v3622 = vadd.f32 %v3453, %v3621
        %v3623 = vpop.f32.mrf.mxu0
        %v3624 = vadd.f32 %v3455, %v3623
        %3625 = vmatmul.bf16.gmra.mxu0 %v2870
        %v3626 = vpop.f32.mrf.mxu0
        %v3627 = vadd.f32 %v3458, %v3626
        %v3628 = vpop.f32.mrf.mxu0
        %v3629 = vadd.f32 %v3460, %v3628
        %3630 = vmatmul.bf16.gmra.mxu0 %v2876
        %v3631 = vpop.f32.mrf.mxu0
        %v3632 = vadd.f32 %v3463, %v3631
        %v3633 = vpop.f32.mrf.mxu0
        %v3634 = vadd.f32 %v3465, %v3633
        %3635 = vmatmul.bf16.gmra.mxu0 %v2882
        %v3636 = vpop.f32.mrf.mxu0
        %v3637 = vadd.f32 %v3468, %v3636
        %v3638 = vpop.f32.mrf.mxu0
        %v3639 = vadd.f32 %v3470, %v3638
        %3640 = vmatmul.bf16.gmra.mxu0 %v2888
        %v3641 = vpop.f32.mrf.mxu0
        %v3642 = vadd.f32 %v3473, %v3641
        %v3643 = vpop.f32.mrf.mxu0
        %v3644 = vadd.f32 %v3475, %v3643
        %3645 = vmatmul.bf16.gmra.mxu0 %v2894
        %v3646 = vpop.f32.mrf.mxu0
        %v3647 = vadd.f32 %v3478, %v3646
        %v3648 = vpop.f32.mrf.mxu0
        %v3649 = vadd.f32 %v3480, %v3648
        %3650 = vmatmul.bf16.gmra.mxu0 %v2900
        %v3651 = vpop.f32.mrf.mxu0
        %v3652 = vadd.f32 %v3483, %v3651
        %v3653 = vpop.f32.mrf.mxu0
        %v3654 = vadd.f32 %v3485, %v3653
        %3655 = vmatmul.bf16.gmra.mxu0 %v2906
        %v3656 = vpop.f32.mrf.mxu0
        %v3657 = vadd.f32 %v3488, %v3656
        %v3658 = vpop.f32.mrf.mxu0
        %v3659 = vadd.f32 %v3490, %v3658
        %3660 = vmatmul.bf16.gmra.mxu0 %v2912
        %v3661 = vpop.f32.mrf.mxu0
        %v3662 = vadd.f32 %v3493, %v3661
        %v3663 = vpop.f32.mrf.mxu0
        %v3664 = vadd.f32 %v3495, %v3663
        %3665 = vmatmul.bf16.gmra.mxu0 %v2918
        %v3666 = vpop.f32.mrf.mxu0
        %v3667 = vadd.f32 %v3498, %v3666
        %v3668 = vpop.f32.mrf.mxu0
        %v3669 = vadd.f32 %v3500, %v3668
        %3670 = vmatmul.bf16.gmra.mxu0 %v2924
        %v3671 = vpop.f32.mrf.mxu0
        %v3672 = vadd.f32 %v3503, %v3671
        %v3673 = vpop.f32.mrf.mxu0
        %v3674 = vadd.f32 %v3505, %v3673
        %3675 = vmatmul.bf16.gmra.mxu0 %v2930
        %v3676 = vpop.f32.mrf.mxu0
        %v3677 = vadd.f32 %v3508, %v3676
        %v3678 = vpop.f32.mrf.mxu0
        %v3679 = vadd.f32 %v3510, %v3678
        %3680 = vmatmul.bf16.gmra.mxu0 %v2936
        %v3681 = vpop.f32.mrf.mxu0
        %v3682 = vadd.f32 %v3513, %v3681
        %v3683 = vpop.f32.mrf.mxu0
        %v3684 = vadd.f32 %v3515, %v3683
        %3685 = vmatmul.bf16.gmra.mxu0 %v2942
        %v3686 = vpop.f32.mrf.mxu0
        %v3687 = vadd.f32 %v3518, %v3686
        %v3688 = vpop.f32.mrf.mxu0
        %v3689 = vadd.f32 %v3520, %v3688
        %3690 = vmatmul.bf16.gmra.mxu0 %v2948
        %v3691 = vpop.f32.mrf.mxu0
        %v3692 = vadd.f32 %v3523, %v3691
        %v3693 = vpop.f32.mrf.mxu0
        %v3694 = vadd.f32 %v3525, %v3693
        %3695 = vmatmul.bf16.gmra.mxu0 %v2954
        %v3696 = vpop.f32.mrf.mxu0
        %v3697 = vadd.f32 %v3528, %v3696
        %v3698 = vpop.f32.mrf.mxu0
        %v3699 = vadd.f32 %v3530, %v3698
        %3700 = vmatmul.bf16.gmra.mxu0 %v2960
        %v3701 = vpop.f32.mrf.mxu0
        %v3702 = vadd.f32 %v3533, %v3701
        %v3703 = vpop.f32.mrf.mxu0
        %v3704 = vadd.f32 %v3535, %v3703
        %3705 = vmatmul.bf16.gmra.mxu0 %v2966
        %v3706 = vpop.f32.mrf.mxu0
        %v3707 = vadd.f32 %v3538, %v3706
        %v3708 = vpop.f32.mrf.mxu0
        %v3709 = vadd.f32 %v3540, %v3708
        %3710 = vmatmul.bf16.gmra.mxu0 %v2972
        %v3711 = vpop.f32.mrf.mxu0
        %v3712 = vadd.f32 %v3543, %v3711
        %v3713 = vpop.f32.mrf.mxu0
        %v3714 = vadd.f32 %v3545, %v3713
        %3715 = vmatmul.bf16.gmra.mxu0 %v2978
        %v3716 = vpop.f32.mrf.mxu0
        %v3717 = vadd.f32 %v3548, %v3716
        %v3718 = vpop.f32.mrf.mxu0
        %v3719 = vadd.f32 %v3550, %v3718
        %3720 = vmatmul.bf16.gmra.mxu0 %v2984
        %v3721 = vpop.f32.mrf.mxu0
        %v3722 = vadd.f32 %v3553, %v3721
        %v3723 = vpop.f32.mrf.mxu0
        %v3724 = vadd.f32 %v3555, %v3723
        %3725 = vmatmul.bf16.gmra.mxu0 %v2990
        %v3726 = vpop.f32.mrf.mxu0
        %v3727 = vadd.f32 %v3558, %v3726
        %v3728 = vpop.f32.mrf.mxu0
        %v3729 = vadd.f32 %v3560, %v3728
        %3730 = vmatmul.bf16.gmra.mxu0 %v2996
        %v3731 = vpop.f32.mrf.mxu0
        %v3732 = vadd.f32 %v3563, %v3731
        %v3733 = vpop.f32.mrf.mxu0
        %v3734 = vadd.f32 %v3565, %v3733
        %3735 = vmatmul.bf16.gmra.mxu0 %v3002
        %v3736 = vpop.f32.mrf.mxu0
        %v3737 = vadd.f32 %v3568, %v3736
        %v3738 = vpop.f32.mrf.mxu0
        %v3739 = vadd.f32 %v3570, %v3738
        %3740 = vmatmul.bf16.gmra.mxu0 %v3008
        %v3741 = vpop.f32.mrf.mxu0
        %v3742 = vadd.f32 %v3573, %v3741
        %v3743 = vpop.f32.mrf.mxu0
        %v3744 = vadd.f32 %v3575, %v3743
        %3745 = vmatmul.bf16.gmra.mxu0 %v3014
        %v3746 = vpop.f32.mrf.mxu0
        %v3747 = vadd.f32 %v3578, %v3746
        %v3748 = vpop.f32.mrf.mxu0
        %v3749 = vadd.f32 %v3580, %v3748
        %3750 = vmatmul.bf16.gmra.mxu0 %v3020
        %v3751 = vpop.f32.mrf.mxu0
        %v3752 = vadd.f32 %v3583, %v3751
        %v3753 = vpop.f32.mrf.mxu0
        %v3754 = vadd.f32 %v3585, %v3753
        %3755 = vmatmul.bf16.gmra.mxu0 %v3026
        %v3756 = vpop.f32.mrf.mxu0
        %v3757 = vadd.f32 %v3588, %v3756
        %v3758 = vpop.f32.mrf.mxu0
        %v3759 = vadd.f32 %v3590, %v3758
        %3760 = vmatmul.bf16.gmra.mxu0 %v3032
        %v3761 = vpop.f32.mrf.mxu0
        %v3762 = vadd.f32 %v3593, %v3761
        %v3763 = vpop.f32.mrf.mxu0
        %v3764 = vadd.f32 %v3595, %v3763
        %3765 = vmatmul.bf16.gmra.mxu0 %v3038
        %v3766 = vpop.f32.mrf.mxu0
        %v3767 = vadd.f32 %v3598, %v3766
        %v3768 = vpop.f32.mrf.mxu0
        %v3769 = vadd.f32 %v3600, %v3768
        %3770 = vmatmul.bf16.gmra.mxu0 %v3044
        %v3771 = vpop.f32.mrf.mxu0
        %v3772 = vadd.f32 %v3603, %v3771
        %v3773 = vpop.f32.mrf.mxu0
        %v3774 = vadd.f32 %v3605, %v3773
        %3775 = vmatmul.bf16.gmra.mxu0 %v3050
        %v3776 = vpop.f32.mrf.mxu0
        %v3777 = vadd.f32 %v3608, %v3776
        %v3778 = vpop.f32.mrf.mxu0
        %v3779 = vadd.f32 %v3610, %v3778
        %3780 = vdwg.mxu0
        %3781 = vmatpush.bf16.msra.mxu0 %v3370
        %3782 = vmatpush.bf16.msra.mxu0 %v3369
        %3783 = vmatpush.bf16.msra.mxu0 %v3368
        %3784 = vmatpush.bf16.msra.mxu0 %v3367
        %3785 = vmatpush.bf16.msra.mxu0 %v3366
        %3786 = vmatpush.bf16.msra.mxu0 %v3365
        %3787 = vmatpush.bf16.msra.mxu0 %v3364
        %3788 = vmatpush.bf16.msra.mxu0 %v3363
        %3789 = vmatmul.bf16.gmra.mxu0 %v2865
        %v3790 = vpop.f32.mrf.mxu0
        %v3791 = vadd.f32 %v3622, %v3790
        %v3792 = vpop.f32.mrf.mxu0
        %v3793 = vadd.f32 %v3624, %v3792
        %3794 = vmatmul.bf16.gmra.mxu0 %v2871
        %v3795 = vpop.f32.mrf.mxu0
        %v3796 = vadd.f32 %v3627, %v3795
        %v3797 = vpop.f32.mrf.mxu0
        %v3798 = vadd.f32 %v3629, %v3797
        %3799 = vmatmul.bf16.gmra.mxu0 %v2877
        %v3800 = vpop.f32.mrf.mxu0
        %v3801 = vadd.f32 %v3632, %v3800
        %v3802 = vpop.f32.mrf.mxu0
        %v3803 = vadd.f32 %v3634, %v3802
        %3804 = vmatmul.bf16.gmra.mxu0 %v2883
        %v3805 = vpop.f32.mrf.mxu0
        %v3806 = vadd.f32 %v3637, %v3805
        %v3807 = vpop.f32.mrf.mxu0
        %v3808 = vadd.f32 %v3639, %v3807
        %3809 = vmatmul.bf16.gmra.mxu0 %v2889
        %v3810 = vpop.f32.mrf.mxu0
        %v3811 = vadd.f32 %v3642, %v3810
        %v3812 = vpop.f32.mrf.mxu0
        %v3813 = vadd.f32 %v3644, %v3812
        %3814 = vmatmul.bf16.gmra.mxu0 %v2895
        %v3815 = vpop.f32.mrf.mxu0
        %v3816 = vadd.f32 %v3647, %v3815
        %v3817 = vpop.f32.mrf.mxu0
        %v3818 = vadd.f32 %v3649, %v3817
        %3819 = vmatmul.bf16.gmra.mxu0 %v2901
        %v3820 = vpop.f32.mrf.mxu0
        %v3821 = vadd.f32 %v3652, %v3820
        %v3822 = vpop.f32.mrf.mxu0
        %v3823 = vadd.f32 %v3654, %v3822
        %3824 = vmatmul.bf16.gmra.mxu0 %v2907
        %v3825 = vpop.f32.mrf.mxu0
        %v3826 = vadd.f32 %v3657, %v3825
        %v3827 = vpop.f32.mrf.mxu0
        %v3828 = vadd.f32 %v3659, %v3827
        %3829 = vmatmul.bf16.gmra.mxu0 %v2913
        %v3830 = vpop.f32.mrf.mxu0
        %v3831 = vadd.f32 %v3662, %v3830
        %v3832 = vpop.f32.mrf.mxu0
        %v3833 = vadd.f32 %v3664, %v3832
        %3834 = vmatmul.bf16.gmra.mxu0 %v2919
        %v3835 = vpop.f32.mrf.mxu0
        %v3836 = vadd.f32 %v3667, %v3835
        %v3837 = vpop.f32.mrf.mxu0
        %v3838 = vadd.f32 %v3669, %v3837
        %3839 = vmatmul.bf16.gmra.mxu0 %v2925
        %v3840 = vpop.f32.mrf.mxu0
        %v3841 = vadd.f32 %v3672, %v3840
        %v3842 = vpop.f32.mrf.mxu0
        %v3843 = vadd.f32 %v3674, %v3842
        %3844 = vmatmul.bf16.gmra.mxu0 %v2931
        %v3845 = vpop.f32.mrf.mxu0
        %v3846 = vadd.f32 %v3677, %v3845
        %v3847 = vpop.f32.mrf.mxu0
        %v3848 = vadd.f32 %v3679, %v3847
        %3849 = vmatmul.bf16.gmra.mxu0 %v2937
        %v3850 = vpop.f32.mrf.mxu0
        %v3851 = vadd.f32 %v3682, %v3850
        %v3852 = vpop.f32.mrf.mxu0
        %v3853 = vadd.f32 %v3684, %v3852
        %3854 = vmatmul.bf16.gmra.mxu0 %v2943
        %v3855 = vpop.f32.mrf.mxu0
        %v3856 = vadd.f32 %v3687, %v3855
        %v3857 = vpop.f32.mrf.mxu0
        %v3858 = vadd.f32 %v3689, %v3857
        %3859 = vmatmul.bf16.gmra.mxu0 %v2949
        %v3860 = vpop.f32.mrf.mxu0
        %v3861 = vadd.f32 %v3692, %v3860
        %v3862 = vpop.f32.mrf.mxu0
        %v3863 = vadd.f32 %v3694, %v3862
        %3864 = vmatmul.bf16.gmra.mxu0 %v2955
        %v3865 = vpop.f32.mrf.mxu0
        %v3866 = vadd.f32 %v3697, %v3865
        %v3867 = vpop.f32.mrf.mxu0
        %v3868 = vadd.f32 %v3699, %v3867
        %3869 = vmatmul.bf16.gmra.mxu0 %v2961
        %v3870 = vpop.f32.mrf.mxu0
        %v3871 = vadd.f32 %v3702, %v3870
        %v3872 = vpop.f32.mrf.mxu0
        %v3873 = vadd.f32 %v3704, %v3872
        %3874 = vmatmul.bf16.gmra.mxu0 %v2967
        %v3875 = vpop.f32.mrf.mxu0
        %v3876 = vadd.f32 %v3707, %v3875
        %v3877 = vpop.f32.mrf.mxu0
        %v3878 = vadd.f32 %v3709, %v3877
        %3879 = vmatmul.bf16.gmra.mxu0 %v2973
        %v3880 = vpop.f32.mrf.mxu0
        %v3881 = vadd.f32 %v3712, %v3880
        %v3882 = vpop.f32.mrf.mxu0
        %v3883 = vadd.f32 %v3714, %v3882
        %3884 = vmatmul.bf16.gmra.mxu0 %v2979
        %v3885 = vpop.f32.mrf.mxu0
        %v3886 = vadd.f32 %v3717, %v3885
        %v3887 = vpop.f32.mrf.mxu0
        %v3888 = vadd.f32 %v3719, %v3887
        %3889 = vmatmul.bf16.gmra.mxu0 %v2985
        %v3890 = vpop.f32.mrf.mxu0
        %v3891 = vadd.f32 %v3722, %v3890
        %v3892 = vpop.f32.mrf.mxu0
        %v3893 = vadd.f32 %v3724, %v3892
        %3894 = vmatmul.bf16.gmra.mxu0 %v2991
        %v3895 = vpop.f32.mrf.mxu0
        %v3896 = vadd.f32 %v3727, %v3895
        %v3897 = vpop.f32.mrf.mxu0
        %v3898 = vadd.f32 %v3729, %v3897
        %3899 = vmatmul.bf16.gmra.mxu0 %v2997
        %v3900 = vpop.f32.mrf.mxu0
        %v3901 = vadd.f32 %v3732, %v3900
        %v3902 = vpop.f32.mrf.mxu0
        %v3903 = vadd.f32 %v3734, %v3902
        %3904 = vmatmul.bf16.gmra.mxu0 %v3003
        %v3905 = vpop.f32.mrf.mxu0
        %v3906 = vadd.f32 %v3737, %v3905
        %v3907 = vpop.f32.mrf.mxu0
        %v3908 = vadd.f32 %v3739, %v3907
        %3909 = vmatmul.bf16.gmra.mxu0 %v3009
        %v3910 = vpop.f32.mrf.mxu0
        %v3911 = vadd.f32 %v3742, %v3910
        %v3912 = vpop.f32.mrf.mxu0
        %v3913 = vadd.f32 %v3744, %v3912
        %3914 = vmatmul.bf16.gmra.mxu0 %v3015
        %v3915 = vpop.f32.mrf.mxu0
        %v3916 = vadd.f32 %v3747, %v3915
        %v3917 = vpop.f32.mrf.mxu0
        %v3918 = vadd.f32 %v3749, %v3917
        %3919 = vmatmul.bf16.gmra.mxu0 %v3021
        %v3920 = vpop.f32.mrf.mxu0
        %v3921 = vadd.f32 %v3752, %v3920
        %v3922 = vpop.f32.mrf.mxu0
        %v3923 = vadd.f32 %v3754, %v3922
        %3924 = vmatmul.bf16.gmra.mxu0 %v3027
        %v3925 = vpop.f32.mrf.mxu0
        %v3926 = vadd.f32 %v3757, %v3925
        %v3927 = vpop.f32.mrf.mxu0
        %v3928 = vadd.f32 %v3759, %v3927
        %3929 = vmatmul.bf16.gmra.mxu0 %v3033
        %v3930 = vpop.f32.mrf.mxu0
        %v3931 = vadd.f32 %v3762, %v3930
        %v3932 = vpop.f32.mrf.mxu0
        %v3933 = vadd.f32 %v3764, %v3932
        %3934 = vmatmul.bf16.gmra.mxu0 %v3039
        %v3935 = vpop.f32.mrf.mxu0
        %v3936 = vadd.f32 %v3767, %v3935
        %v3937 = vpop.f32.mrf.mxu0
        %v3938 = vadd.f32 %v3769, %v3937
        %3939 = vmatmul.bf16.gmra.mxu0 %v3045
        %v3940 = vpop.f32.mrf.mxu0
        %v3941 = vadd.f32 %v3772, %v3940
        %v3942 = vpop.f32.mrf.mxu0
        %v3943 = vadd.f32 %v3774, %v3942
        %3944 = vmatmul.bf16.gmra.mxu0 %v3051
        %v3945 = vpop.f32.mrf.mxu0
        %v3946 = vadd.f32 %v3777, %v3945
        %v3947 = vpop.f32.mrf.mxu0
        %v3948 = vadd.f32 %v3779, %v3947
        %3949 = vdwg.mxu0
        %3950 = vmatpush.bf16.msra.mxu0 %v3378
        %3951 = vmatpush.bf16.msra.mxu0 %v3377
        %3952 = vmatpush.bf16.msra.mxu0 %v3376
        %3953 = vmatpush.bf16.msra.mxu0 %v3375
        %3954 = vmatpush.bf16.msra.mxu0 %v3374
        %3955 = vmatpush.bf16.msra.mxu0 %v3373
        %3956 = vmatpush.bf16.msra.mxu0 %v3372
        %3957 = vmatpush.bf16.msra.mxu0 %v3371
        %3958 = vmatmul.bf16.gmra.mxu0 %v2866
        %v3959 = vpop.f32.mrf.mxu0
        %v3960 = vadd.f32 %v3791, %v3959
        %v3961 = vpop.f32.mrf.mxu0
        %v3962 = vadd.f32 %v3793, %v3961
        %3963 = vmatmul.bf16.gmra.mxu0 %v2872
        %v3964 = vpop.f32.mrf.mxu0
        %v3965 = vadd.f32 %v3796, %v3964
        %v3966 = vpop.f32.mrf.mxu0
        %v3967 = vadd.f32 %v3798, %v3966
        %3968 = vmatmul.bf16.gmra.mxu0 %v2878
        %v3969 = vpop.f32.mrf.mxu0
        %v3970 = vadd.f32 %v3801, %v3969
        %v3971 = vpop.f32.mrf.mxu0
        %v3972 = vadd.f32 %v3803, %v3971
        %3973 = vmatmul.bf16.gmra.mxu0 %v2884
        %v3974 = vpop.f32.mrf.mxu0
        %v3975 = vadd.f32 %v3806, %v3974
        %v3976 = vpop.f32.mrf.mxu0
        %v3977 = vadd.f32 %v3808, %v3976
        %3978 = vmatmul.bf16.gmra.mxu0 %v2890
        %v3979 = vpop.f32.mrf.mxu0
        %v3980 = vadd.f32 %v3811, %v3979
        %v3981 = vpop.f32.mrf.mxu0
        %v3982 = vadd.f32 %v3813, %v3981
        %3983 = vmatmul.bf16.gmra.mxu0 %v2896
        %v3984 = vpop.f32.mrf.mxu0
        %v3985 = vadd.f32 %v3816, %v3984
        %v3986 = vpop.f32.mrf.mxu0
        %v3987 = vadd.f32 %v3818, %v3986
        %3988 = vmatmul.bf16.gmra.mxu0 %v2902
        %v3989 = vpop.f32.mrf.mxu0
        %v3990 = vadd.f32 %v3821, %v3989
        %v3991 = vpop.f32.mrf.mxu0
        %v3992 = vadd.f32 %v3823, %v3991
        %3993 = vmatmul.bf16.gmra.mxu0 %v2908
        %v3994 = vpop.f32.mrf.mxu0
        %v3995 = vadd.f32 %v3826, %v3994
        %v3996 = vpop.f32.mrf.mxu0
        %v3997 = vadd.f32 %v3828, %v3996
        %3998 = vmatmul.bf16.gmra.mxu0 %v2914
        %v3999 = vpop.f32.mrf.mxu0
        %v4000 = vadd.f32 %v3831, %v3999
        %v4001 = vpop.f32.mrf.mxu0
        %v4002 = vadd.f32 %v3833, %v4001
        %4003 = vmatmul.bf16.gmra.mxu0 %v2920
        %v4004 = vpop.f32.mrf.mxu0
        %v4005 = vadd.f32 %v3836, %v4004
        %v4006 = vpop.f32.mrf.mxu0
        %v4007 = vadd.f32 %v3838, %v4006
        %4008 = vmatmul.bf16.gmra.mxu0 %v2926
        %v4009 = vpop.f32.mrf.mxu0
        %v4010 = vadd.f32 %v3841, %v4009
        %v4011 = vpop.f32.mrf.mxu0
        %v4012 = vadd.f32 %v3843, %v4011
        %4013 = vmatmul.bf16.gmra.mxu0 %v2932
        %v4014 = vpop.f32.mrf.mxu0
        %v4015 = vadd.f32 %v3846, %v4014
        %v4016 = vpop.f32.mrf.mxu0
        %v4017 = vadd.f32 %v3848, %v4016
        %4018 = vmatmul.bf16.gmra.mxu0 %v2938
        %v4019 = vpop.f32.mrf.mxu0
        %v4020 = vadd.f32 %v3851, %v4019
        %v4021 = vpop.f32.mrf.mxu0
        %v4022 = vadd.f32 %v3853, %v4021
        %4023 = vmatmul.bf16.gmra.mxu0 %v2944
        %v4024 = vpop.f32.mrf.mxu0
        %v4025 = vadd.f32 %v3856, %v4024
        %v4026 = vpop.f32.mrf.mxu0
        %v4027 = vadd.f32 %v3858, %v4026
        %4028 = vmatmul.bf16.gmra.mxu0 %v2950
        %v4029 = vpop.f32.mrf.mxu0
        %v4030 = vadd.f32 %v3861, %v4029
        %v4031 = vpop.f32.mrf.mxu0
        %v4032 = vadd.f32 %v3863, %v4031
        %4033 = vmatmul.bf16.gmra.mxu0 %v2956
        %v4034 = vpop.f32.mrf.mxu0
        %v4035 = vadd.f32 %v3866, %v4034
        %v4036 = vpop.f32.mrf.mxu0
        %v4037 = vadd.f32 %v3868, %v4036
        %4038 = vmatmul.bf16.gmra.mxu0 %v2962
        %v4039 = vpop.f32.mrf.mxu0
        %v4040 = vadd.f32 %v3871, %v4039
        %v4041 = vpop.f32.mrf.mxu0
        %v4042 = vadd.f32 %v3873, %v4041
        %4043 = vmatmul.bf16.gmra.mxu0 %v2968
        %v4044 = vpop.f32.mrf.mxu0
        %v4045 = vadd.f32 %v3876, %v4044
        %v4046 = vpop.f32.mrf.mxu0
        %v4047 = vadd.f32 %v3878, %v4046
        %4048 = vmatmul.bf16.gmra.mxu0 %v2974
        %v4049 = vpop.f32.mrf.mxu0
        %v4050 = vadd.f32 %v3881, %v4049
        %v4051 = vpop.f32.mrf.mxu0
        %v4052 = vadd.f32 %v3883, %v4051
        %4053 = vmatmul.bf16.gmra.mxu0 %v2980
        %v4054 = vpop.f32.mrf.mxu0
        %v4055 = vadd.f32 %v3886, %v4054
        %v4056 = vpop.f32.mrf.mxu0
        %v4057 = vadd.f32 %v3888, %v4056
        %4058 = vmatmul.bf16.gmra.mxu0 %v2986
        %v4059 = vpop.f32.mrf.mxu0
        %v4060 = vadd.f32 %v3891, %v4059
        %v4061 = vpop.f32.mrf.mxu0
        %v4062 = vadd.f32 %v3893, %v4061
        %4063 = vmatmul.bf16.gmra.mxu0 %v2992
        %v4064 = vpop.f32.mrf.mxu0
        %v4065 = vadd.f32 %v3896, %v4064
        %v4066 = vpop.f32.mrf.mxu0
        %v4067 = vadd.f32 %v3898, %v4066
        %4068 = vmatmul.bf16.gmra.mxu0 %v2998
        %v4069 = vpop.f32.mrf.mxu0
        %v4070 = vadd.f32 %v3901, %v4069
        %v4071 = vpop.f32.mrf.mxu0
        %v4072 = vadd.f32 %v3903, %v4071
        %4073 = vmatmul.bf16.gmra.mxu0 %v3004
        %v4074 = vpop.f32.mrf.mxu0
        %v4075 = vadd.f32 %v3906, %v4074
        %v4076 = vpop.f32.mrf.mxu0
        %v4077 = vadd.f32 %v3908, %v4076
        %4078 = vmatmul.bf16.gmra.mxu0 %v3010
        %v4079 = vpop.f32.mrf.mxu0
        %v4080 = vadd.f32 %v3911, %v4079
        %v4081 = vpop.f32.mrf.mxu0
        %v4082 = vadd.f32 %v3913, %v4081
        %4083 = vmatmul.bf16.gmra.mxu0 %v3016
        %v4084 = vpop.f32.mrf.mxu0
        %v4085 = vadd.f32 %v3916, %v4084
        %v4086 = vpop.f32.mrf.mxu0
        %v4087 = vadd.f32 %v3918, %v4086
        %4088 = vmatmul.bf16.gmra.mxu0 %v3022
        %v4089 = vpop.f32.mrf.mxu0
        %v4090 = vadd.f32 %v3921, %v4089
        %v4091 = vpop.f32.mrf.mxu0
        %v4092 = vadd.f32 %v3923, %v4091
        %4093 = vmatmul.bf16.gmra.mxu0 %v3028
        %v4094 = vpop.f32.mrf.mxu0
        %v4095 = vadd.f32 %v3926, %v4094
        %v4096 = vpop.f32.mrf.mxu0
        %v4097 = vadd.f32 %v3928, %v4096
        %4098 = vmatmul.bf16.gmra.mxu0 %v3034
        %v4099 = vpop.f32.mrf.mxu0
        %v4100 = vadd.f32 %v3931, %v4099
        %v4101 = vpop.f32.mrf.mxu0
        %v4102 = vadd.f32 %v3933, %v4101
        %4103 = vmatmul.bf16.gmra.mxu0 %v3040
        %v4104 = vpop.f32.mrf.mxu0
        %v4105 = vadd.f32 %v3936, %v4104
        %v4106 = vpop.f32.mrf.mxu0
        %v4107 = vadd.f32 %v3938, %v4106
        %4108 = vmatmul.bf16.gmra.mxu0 %v3046
        %v4109 = vpop.f32.mrf.mxu0
        %v4110 = vadd.f32 %v3941, %v4109
        %v4111 = vpop.f32.mrf.mxu0
        %v4112 = vadd.f32 %v3943, %v4111
        %4113 = vmatmul.bf16.gmra.mxu0 %v3052
        %v4114 = vpop.f32.mrf.mxu0
        %v4115 = vadd.f32 %v3946, %v4114
        %v4116 = vpop.f32.mrf.mxu0
        %v4117 = vadd.f32 %v3948, %v4116
        %4118 = vdwg.mxu0
        %4119 = vmatpush.bf16.msra.mxu0 %v3386
        %4120 = vmatpush.bf16.msra.mxu0 %v3385
        %4121 = vmatpush.bf16.msra.mxu0 %v3384
        %4122 = vmatpush.bf16.msra.mxu0 %v3383
        %4123 = vmatpush.bf16.msra.mxu0 %v3382
        %4124 = vmatpush.bf16.msra.mxu0 %v3381
        %4125 = vmatpush.bf16.msra.mxu0 %v3380
        %4126 = vmatpush.bf16.msra.mxu0 %v3379
        %4127 = vmatmul.bf16.gmra.mxu0 %v2867
        %v4128 = vpop.f32.mrf.mxu0
        %v4129 = vadd.f32 %v3960, %v4128
        %v4130 = vpop.f32.mrf.mxu0
        %v4131 = vadd.f32 %v3962, %v4130
        %4132 = vmatmul.bf16.gmra.mxu0 %v2873
        %v4133 = vpop.f32.mrf.mxu0
        %v4134 = vadd.f32 %v3965, %v4133
        %v4135 = vpop.f32.mrf.mxu0
        %v4136 = vadd.f32 %v3967, %v4135
        %4137 = vmatmul.bf16.gmra.mxu0 %v2879
        %v4138 = vpop.f32.mrf.mxu0
        %v4139 = vadd.f32 %v3970, %v4138
        %v4140 = vpop.f32.mrf.mxu0
        %v4141 = vadd.f32 %v3972, %v4140
        %4142 = vmatmul.bf16.gmra.mxu0 %v2885
        %v4143 = vpop.f32.mrf.mxu0
        %v4144 = vadd.f32 %v3975, %v4143
        %v4145 = vpop.f32.mrf.mxu0
        %v4146 = vadd.f32 %v3977, %v4145
        %4147 = vmatmul.bf16.gmra.mxu0 %v2891
        %v4148 = vpop.f32.mrf.mxu0
        %v4149 = vadd.f32 %v3980, %v4148
        %v4150 = vpop.f32.mrf.mxu0
        %v4151 = vadd.f32 %v3982, %v4150
        %4152 = vmatmul.bf16.gmra.mxu0 %v2897
        %v4153 = vpop.f32.mrf.mxu0
        %v4154 = vadd.f32 %v3985, %v4153
        %v4155 = vpop.f32.mrf.mxu0
        %v4156 = vadd.f32 %v3987, %v4155
        %4157 = vmatmul.bf16.gmra.mxu0 %v2903
        %v4158 = vpop.f32.mrf.mxu0
        %v4159 = vadd.f32 %v3990, %v4158
        %v4160 = vpop.f32.mrf.mxu0
        %v4161 = vadd.f32 %v3992, %v4160
        %4162 = vmatmul.bf16.gmra.mxu0 %v2909
        %v4163 = vpop.f32.mrf.mxu0
        %v4164 = vadd.f32 %v3995, %v4163
        %v4165 = vpop.f32.mrf.mxu0
        %v4166 = vadd.f32 %v3997, %v4165
        %4167 = vmatmul.bf16.gmra.mxu0 %v2915
        %v4168 = vpop.f32.mrf.mxu0
        %v4169 = vadd.f32 %v4000, %v4168
        %v4170 = vpop.f32.mrf.mxu0
        %v4171 = vadd.f32 %v4002, %v4170
        %4172 = vmatmul.bf16.gmra.mxu0 %v2921
        %v4173 = vpop.f32.mrf.mxu0
        %v4174 = vadd.f32 %v4005, %v4173
        %v4175 = vpop.f32.mrf.mxu0
        %v4176 = vadd.f32 %v4007, %v4175
        %4177 = vmatmul.bf16.gmra.mxu0 %v2927
        %v4178 = vpop.f32.mrf.mxu0
        %v4179 = vadd.f32 %v4010, %v4178
        %v4180 = vpop.f32.mrf.mxu0
        %v4181 = vadd.f32 %v4012, %v4180
        %4182 = vmatmul.bf16.gmra.mxu0 %v2933
        %v4183 = vpop.f32.mrf.mxu0
        %v4184 = vadd.f32 %v4015, %v4183
        %v4185 = vpop.f32.mrf.mxu0
        %v4186 = vadd.f32 %v4017, %v4185
        %4187 = vmatmul.bf16.gmra.mxu0 %v2939
        %v4188 = vpop.f32.mrf.mxu0
        %v4189 = vadd.f32 %v4020, %v4188
        %v4190 = vpop.f32.mrf.mxu0
        %v4191 = vadd.f32 %v4022, %v4190
        %4192 = vmatmul.bf16.gmra.mxu0 %v2945
        %v4193 = vpop.f32.mrf.mxu0
        %v4194 = vadd.f32 %v4025, %v4193
        %v4195 = vpop.f32.mrf.mxu0
        %v4196 = vadd.f32 %v4027, %v4195
        %4197 = vmatmul.bf16.gmra.mxu0 %v2951
        %v4198 = vpop.f32.mrf.mxu0
        %v4199 = vadd.f32 %v4030, %v4198
        %v4200 = vpop.f32.mrf.mxu0
        %v4201 = vadd.f32 %v4032, %v4200
        %4202 = vmatmul.bf16.gmra.mxu0 %v2957
        %v4203 = vpop.f32.mrf.mxu0
        %v4204 = vadd.f32 %v4035, %v4203
        %v4205 = vpop.f32.mrf.mxu0
        %v4206 = vadd.f32 %v4037, %v4205
        %4207 = vmatmul.bf16.gmra.mxu0 %v2963
        %v4208 = vpop.f32.mrf.mxu0
        %v4209 = vadd.f32 %v4040, %v4208
        %v4210 = vpop.f32.mrf.mxu0
        %v4211 = vadd.f32 %v4042, %v4210
        %4212 = vmatmul.bf16.gmra.mxu0 %v2969
        %v4213 = vpop.f32.mrf.mxu0
        %v4214 = vadd.f32 %v4045, %v4213
        %v4215 = vpop.f32.mrf.mxu0
        %v4216 = vadd.f32 %v4047, %v4215
        %4217 = vmatmul.bf16.gmra.mxu0 %v2975
        %v4218 = vpop.f32.mrf.mxu0
        %v4219 = vadd.f32 %v4050, %v4218
        %v4220 = vpop.f32.mrf.mxu0
        %v4221 = vadd.f32 %v4052, %v4220
        %4222 = vmatmul.bf16.gmra.mxu0 %v2981
        %v4223 = vpop.f32.mrf.mxu0
        %v4224 = vadd.f32 %v4055, %v4223
        %v4225 = vpop.f32.mrf.mxu0
        %v4226 = vadd.f32 %v4057, %v4225
        %4227 = vmatmul.bf16.gmra.mxu0 %v2987
        %v4228 = vpop.f32.mrf.mxu0
        %v4229 = vadd.f32 %v4060, %v4228
        %v4230 = vpop.f32.mrf.mxu0
        %v4231 = vadd.f32 %v4062, %v4230
        %4232 = vmatmul.bf16.gmra.mxu0 %v2993
        %v4233 = vpop.f32.mrf.mxu0
        %v4234 = vadd.f32 %v4065, %v4233
        %v4235 = vpop.f32.mrf.mxu0
        %v4236 = vadd.f32 %v4067, %v4235
        %4237 = vmatmul.bf16.gmra.mxu0 %v2999
        %v4238 = vpop.f32.mrf.mxu0
        %v4239 = vadd.f32 %v4070, %v4238
        %v4240 = vpop.f32.mrf.mxu0
        %v4241 = vadd.f32 %v4072, %v4240
        %4242 = vmatmul.bf16.gmra.mxu0 %v3005
        %v4243 = vpop.f32.mrf.mxu0
        %v4244 = vadd.f32 %v4075, %v4243
        %v4245 = vpop.f32.mrf.mxu0
        %v4246 = vadd.f32 %v4077, %v4245
        %4247 = vmatmul.bf16.gmra.mxu0 %v3011
        %v4248 = vpop.f32.mrf.mxu0
        %v4249 = vadd.f32 %v4080, %v4248
        %v4250 = vpop.f32.mrf.mxu0
        %v4251 = vadd.f32 %v4082, %v4250
        %4252 = vmatmul.bf16.gmra.mxu0 %v3017
        %v4253 = vpop.f32.mrf.mxu0
        %v4254 = vadd.f32 %v4085, %v4253
        %v4255 = vpop.f32.mrf.mxu0
        %v4256 = vadd.f32 %v4087, %v4255
        %4257 = vmatmul.bf16.gmra.mxu0 %v3023
        %v4258 = vpop.f32.mrf.mxu0
        %v4259 = vadd.f32 %v4090, %v4258
        %v4260 = vpop.f32.mrf.mxu0
        %v4261 = vadd.f32 %v4092, %v4260
        %4262 = vmatmul.bf16.gmra.mxu0 %v3029
        %v4263 = vpop.f32.mrf.mxu0
        %v4264 = vadd.f32 %v4095, %v4263
        %v4265 = vpop.f32.mrf.mxu0
        %v4266 = vadd.f32 %v4097, %v4265
        %4267 = vmatmul.bf16.gmra.mxu0 %v3035
        %v4268 = vpop.f32.mrf.mxu0
        %v4269 = vadd.f32 %v4100, %v4268
        %v4270 = vpop.f32.mrf.mxu0
        %v4271 = vadd.f32 %v4102, %v4270
        %4272 = vmatmul.bf16.gmra.mxu0 %v3041
        %v4273 = vpop.f32.mrf.mxu0
        %v4274 = vadd.f32 %v4105, %v4273
        %v4275 = vpop.f32.mrf.mxu0
        %v4276 = vadd.f32 %v4107, %v4275
        %4277 = vmatmul.bf16.gmra.mxu0 %v3047
        %v4278 = vpop.f32.mrf.mxu0
        %v4279 = vadd.f32 %v4110, %v4278
        %v4280 = vpop.f32.mrf.mxu0
        %v4281 = vadd.f32 %v4112, %v4280
        %4282 = vmatmul.bf16.gmra.mxu0 %v3053
        %v4283 = vpop.f32.mrf.mxu0
        %v4284 = vadd.f32 %v4115, %v4283
        %v4285 = vpop.f32.mrf.mxu0
        %v4286 = vadd.f32 %v4117, %v4285
        %4287 = vdwg.mxu0
        %4288 = vmatpush.bf16.msra.mxu0 %v3394
        %4289 = vmatpush.bf16.msra.mxu0 %v3393
        %4290 = vmatpush.bf16.msra.mxu0 %v3392
        %4291 = vmatpush.bf16.msra.mxu0 %v3391
        %4292 = vmatpush.bf16.msra.mxu0 %v3390
        %4293 = vmatpush.bf16.msra.mxu0 %v3389
        %4294 = vmatpush.bf16.msra.mxu0 %v3388
        %4295 = vmatpush.bf16.msra.mxu0 %v3387
        %4296 = vmatmul.bf16.gmra.mxu0 %v2868
        %v4297 = vpop.f32.mrf.mxu0
        %v4298 = vadd.f32 %v4129, %v4297
        %v4299 = vpop.f32.mrf.mxu0
        %v4300 = vadd.f32 %v4131, %v4299
        %4301 = vmatmul.bf16.gmra.mxu0 %v2874
        %v4302 = vpop.f32.mrf.mxu0
        %v4303 = vadd.f32 %v4134, %v4302
        %v4304 = vpop.f32.mrf.mxu0
        %v4305 = vadd.f32 %v4136, %v4304
        %4306 = vmatmul.bf16.gmra.mxu0 %v2880
        %v4307 = vpop.f32.mrf.mxu0
        %v4308 = vadd.f32 %v4139, %v4307
        %v4309 = vpop.f32.mrf.mxu0
        %v4310 = vadd.f32 %v4141, %v4309
        %4311 = vmatmul.bf16.gmra.mxu0 %v2886
        %v4312 = vpop.f32.mrf.mxu0
        %v4313 = vadd.f32 %v4144, %v4312
        %v4314 = vpop.f32.mrf.mxu0
        %v4315 = vadd.f32 %v4146, %v4314
        %4316 = vmatmul.bf16.gmra.mxu0 %v2892
        %v4317 = vpop.f32.mrf.mxu0
        %v4318 = vadd.f32 %v4149, %v4317
        %v4319 = vpop.f32.mrf.mxu0
        %v4320 = vadd.f32 %v4151, %v4319
        %4321 = vmatmul.bf16.gmra.mxu0 %v2898
        %v4322 = vpop.f32.mrf.mxu0
        %v4323 = vadd.f32 %v4154, %v4322
        %v4324 = vpop.f32.mrf.mxu0
        %v4325 = vadd.f32 %v4156, %v4324
        %4326 = vmatmul.bf16.gmra.mxu0 %v2904
        %v4327 = vpop.f32.mrf.mxu0
        %v4328 = vadd.f32 %v4159, %v4327
        %v4329 = vpop.f32.mrf.mxu0
        %v4330 = vadd.f32 %v4161, %v4329
        %4331 = vmatmul.bf16.gmra.mxu0 %v2910
        %v4332 = vpop.f32.mrf.mxu0
        %v4333 = vadd.f32 %v4164, %v4332
        %v4334 = vpop.f32.mrf.mxu0
        %v4335 = vadd.f32 %v4166, %v4334
        %4336 = vmatmul.bf16.gmra.mxu0 %v2916
        %v4337 = vpop.f32.mrf.mxu0
        %v4338 = vadd.f32 %v4169, %v4337
        %v4339 = vpop.f32.mrf.mxu0
        %v4340 = vadd.f32 %v4171, %v4339
        %4341 = vmatmul.bf16.gmra.mxu0 %v2922
        %v4342 = vpop.f32.mrf.mxu0
        %v4343 = vadd.f32 %v4174, %v4342
        %v4344 = vpop.f32.mrf.mxu0
        %v4345 = vadd.f32 %v4176, %v4344
        %4346 = vmatmul.bf16.gmra.mxu0 %v2928
        %v4347 = vpop.f32.mrf.mxu0
        %v4348 = vadd.f32 %v4179, %v4347
        %v4349 = vpop.f32.mrf.mxu0
        %v4350 = vadd.f32 %v4181, %v4349
        %4351 = vmatmul.bf16.gmra.mxu0 %v2934
        %v4352 = vpop.f32.mrf.mxu0
        %v4353 = vadd.f32 %v4184, %v4352
        %v4354 = vpop.f32.mrf.mxu0
        %v4355 = vadd.f32 %v4186, %v4354
        %4356 = vmatmul.bf16.gmra.mxu0 %v2940
        %v4357 = vpop.f32.mrf.mxu0
        %v4358 = vadd.f32 %v4189, %v4357
        %v4359 = vpop.f32.mrf.mxu0
        %v4360 = vadd.f32 %v4191, %v4359
        %4361 = vmatmul.bf16.gmra.mxu0 %v2946
        %v4362 = vpop.f32.mrf.mxu0
        %v4363 = vadd.f32 %v4194, %v4362
        %v4364 = vpop.f32.mrf.mxu0
        %v4365 = vadd.f32 %v4196, %v4364
        %4366 = vmatmul.bf16.gmra.mxu0 %v2952
        %v4367 = vpop.f32.mrf.mxu0
        %v4368 = vadd.f32 %v4199, %v4367
        %v4369 = vpop.f32.mrf.mxu0
        %v4370 = vadd.f32 %v4201, %v4369
        %4371 = vmatmul.bf16.gmra.mxu0 %v2958
        %v4372 = vpop.f32.mrf.mxu0
        %v4373 = vadd.f32 %v4204, %v4372
        %v4374 = vpop.f32.mrf.mxu0
        %v4375 = vadd.f32 %v4206, %v4374
        %4376 = vmatmul.bf16.gmra.mxu0 %v2964
        %v4377 = vpop.f32.mrf.mxu0
        %v4378 = vadd.f32 %v4209, %v4377
        %v4379 = vpop.f32.mrf.mxu0
        %v4380 = vadd.f32 %v4211, %v4379
        %4381 = vmatmul.bf16.gmra.mxu0 %v2970
        %v4382 = vpop.f32.mrf.mxu0
        %v4383 = vadd.f32 %v4214, %v4382
        %v4384 = vpop.f32.mrf.mxu0
        %v4385 = vadd.f32 %v4216, %v4384
        %4386 = vmatmul.bf16.gmra.mxu0 %v2976
        %v4387 = vpop.f32.mrf.mxu0
        %v4388 = vadd.f32 %v4219, %v4387
        %v4389 = vpop.f32.mrf.mxu0
        %v4390 = vadd.f32 %v4221, %v4389
        %4391 = vmatmul.bf16.gmra.mxu0 %v2982
        %v4392 = vpop.f32.mrf.mxu0
        %v4393 = vadd.f32 %v4224, %v4392
        %v4394 = vpop.f32.mrf.mxu0
        %v4395 = vadd.f32 %v4226, %v4394
        %4396 = vmatmul.bf16.gmra.mxu0 %v2988
        %v4397 = vpop.f32.mrf.mxu0
        %v4398 = vadd.f32 %v4229, %v4397
        %v4399 = vpop.f32.mrf.mxu0
        %v4400 = vadd.f32 %v4231, %v4399
        %4401 = vmatmul.bf16.gmra.mxu0 %v2994
        %v4402 = vpop.f32.mrf.mxu0
        %v4403 = vadd.f32 %v4234, %v4402
        %v4404 = vpop.f32.mrf.mxu0
        %v4405 = vadd.f32 %v4236, %v4404
        %4406 = vmatmul.bf16.gmra.mxu0 %v3000
        %v4407 = vpop.f32.mrf.mxu0
        %v4408 = vadd.f32 %v4239, %v4407
        %v4409 = vpop.f32.mrf.mxu0
        %v4410 = vadd.f32 %v4241, %v4409
        %4411 = vmatmul.bf16.gmra.mxu0 %v3006
        %v4412 = vpop.f32.mrf.mxu0
        %v4413 = vadd.f32 %v4244, %v4412
        %v4414 = vpop.f32.mrf.mxu0
        %v4415 = vadd.f32 %v4246, %v4414
        %4416 = vmatmul.bf16.gmra.mxu0 %v3012
        %v4417 = vpop.f32.mrf.mxu0
        %v4418 = vadd.f32 %v4249, %v4417
        %v4419 = vpop.f32.mrf.mxu0
        %v4420 = vadd.f32 %v4251, %v4419
        %4421 = vmatmul.bf16.gmra.mxu0 %v3018
        %v4422 = vpop.f32.mrf.mxu0
        %v4423 = vadd.f32 %v4254, %v4422
        %v4424 = vpop.f32.mrf.mxu0
        %v4425 = vadd.f32 %v4256, %v4424
        %4426 = vmatmul.bf16.gmra.mxu0 %v3024
        %v4427 = vpop.f32.mrf.mxu0
        %v4428 = vadd.f32 %v4259, %v4427
        %v4429 = vpop.f32.mrf.mxu0
        %v4430 = vadd.f32 %v4261, %v4429
        %4431 = vmatmul.bf16.gmra.mxu0 %v3030
        %v4432 = vpop.f32.mrf.mxu0
        %v4433 = vadd.f32 %v4264, %v4432
        %v4434 = vpop.f32.mrf.mxu0
        %v4435 = vadd.f32 %v4266, %v4434
        %4436 = vmatmul.bf16.gmra.mxu0 %v3036
        %v4437 = vpop.f32.mrf.mxu0
        %v4438 = vadd.f32 %v4269, %v4437
        %v4439 = vpop.f32.mrf.mxu0
        %v4440 = vadd.f32 %v4271, %v4439
        %4441 = vmatmul.bf16.gmra.mxu0 %v3042
        %v4442 = vpop.f32.mrf.mxu0
        %v4443 = vadd.f32 %v4274, %v4442
        %v4444 = vpop.f32.mrf.mxu0
        %v4445 = vadd.f32 %v4276, %v4444
        %4446 = vmatmul.bf16.gmra.mxu0 %v3048
        %v4447 = vpop.f32.mrf.mxu0
        %v4448 = vadd.f32 %v4279, %v4447
        %v4449 = vpop.f32.mrf.mxu0
        %v4450 = vadd.f32 %v4281, %v4449
        %4451 = vmatmul.bf16.gmra.mxu0 %v3054
        %v4452 = vpop.f32.mrf.mxu0
        %v4453 = vadd.f32 %v4284, %v4452
        %v4454 = vpop.f32.mrf.mxu0
        %v4455 = vadd.f32 %v4286, %v4454
        %4456 = vdwg.mxu0
        %v4457 = vld [vmem:[%s375] sm:$0xff]
        %v4458 = vld [vmem:[%s375 + $0x8] sm:$0xff]
        %v4459 = vld [vmem:[%s375 + $0x10] sm:$0xff]
        %v4460 = vld [vmem:[%s375 + $0x18] sm:$0xff]
        %v4461 = vld [vmem:[%s375 + $0x20] sm:$0xff]
        %v4462 = vld [vmem:[%s375 + $0x28] sm:$0xff]
        %v4463 = vld [vmem:[%s375 + $0x30] sm:$0xff]
        %v4464 = vld [vmem:[%s375 + $0x38] sm:$0xff]
        %v4465 = vld [vmem:[%s375 + $0x40] sm:$0xff]
        %v4466 = vld [vmem:[%s375 + $0x48] sm:$0xff]
        %v4467 = vld [vmem:[%s375 + $0x50] sm:$0xff]
        %v4468 = vld [vmem:[%s375 + $0x58] sm:$0xff]
        %v4469 = vld [vmem:[%s375 + $0x60] sm:$0xff]
        %v4470 = vld [vmem:[%s375 + $0x68] sm:$0xff]
        %v4471 = vld [vmem:[%s375 + $0x70] sm:$0xff]
        %v4472 = vld [vmem:[%s375 + $0x78] sm:$0xff]
        %v4473 = vld [vmem:[%s375 + $0x80] sm:$0xff]
        %v4474 = vld [vmem:[%s375 + $0x88] sm:$0xff]
        %v4475 = vld [vmem:[%s375 + $0x90] sm:$0xff]
        %v4476 = vld [vmem:[%s375 + $0x98] sm:$0xff]
        %v4477 = vld [vmem:[%s375 + $0xa0] sm:$0xff]
        %v4478 = vld [vmem:[%s375 + $0xa8] sm:$0xff]
        %v4479 = vld [vmem:[%s375 + $0xb0] sm:$0xff]
        %v4480 = vld [vmem:[%s375 + $0xb8] sm:$0xff]
        %v4481 = vld [vmem:[%s375 + $0xc0] sm:$0xff]
        %v4482 = vld [vmem:[%s375 + $0xc8] sm:$0xff]
        %v4483 = vld [vmem:[%s375 + $0xd0] sm:$0xff]
        %v4484 = vld [vmem:[%s375 + $0xd8] sm:$0xff]
        %v4485 = vld [vmem:[%s375 + $0xe0] sm:$0xff]
        %v4486 = vld [vmem:[%s375 + $0xe8] sm:$0xff]
        %v4487 = vld [vmem:[%s375 + $0xf0] sm:$0xff]
        %v4488 = vld [vmem:[%s375 + $0xf8] sm:$0xff]
        %v4489 = vld [vmem:[%s375 + $0x100] sm:$0xff]
        %v4490 = vld [vmem:[%s375 + $0x108] sm:$0xff]
        %v4491 = vld [vmem:[%s375 + $0x110] sm:$0xff]
        %v4492 = vld [vmem:[%s375 + $0x118] sm:$0xff]
        %v4493 = vld [vmem:[%s375 + $0x120] sm:$0xff]
        %v4494 = vld [vmem:[%s375 + $0x128] sm:$0xff]
        %v4495 = vld [vmem:[%s375 + $0x130] sm:$0xff]
        %v4496 = vld [vmem:[%s375 + $0x138] sm:$0xff]
        %v4497 = vld [vmem:[%s375 + $0x140] sm:$0xff]
        %v4498 = vld [vmem:[%s375 + $0x148] sm:$0xff]
        %v4499 = vld [vmem:[%s375 + $0x150] sm:$0xff]
        %v4500 = vld [vmem:[%s375 + $0x158] sm:$0xff]
        %v4501 = vld [vmem:[%s375 + $0x160] sm:$0xff]
        %v4502 = vld [vmem:[%s375 + $0x168] sm:$0xff]
        %v4503 = vld [vmem:[%s375 + $0x170] sm:$0xff]
        %v4504 = vld [vmem:[%s375 + $0x178] sm:$0xff]
        %v4505 = vld [vmem:[%s375 + $0x180] sm:$0xff]
        %v4506 = vld [vmem:[%s375 + $0x188] sm:$0xff]
        %v4507 = vld [vmem:[%s375 + $0x190] sm:$0xff]
        %v4508 = vld [vmem:[%s375 + $0x198] sm:$0xff]
        %v4509 = vld [vmem:[%s375 + $0x1a0] sm:$0xff]
        %v4510 = vld [vmem:[%s375 + $0x1a8] sm:$0xff]
        %v4511 = vld [vmem:[%s375 + $0x1b0] sm:$0xff]
        %v4512 = vld [vmem:[%s375 + $0x1b8] sm:$0xff]
        %v4513 = vld [vmem:[%s375 + $0x1c0] sm:$0xff]
        %v4514 = vld [vmem:[%s375 + $0x1c8] sm:$0xff]
        %v4515 = vld [vmem:[%s375 + $0x1d0] sm:$0xff]
        %v4516 = vld [vmem:[%s375 + $0x1d8] sm:$0xff]
        %v4517 = vld [vmem:[%s375 + $0x1e0] sm:$0xff]
        %v4518 = vld [vmem:[%s375 + $0x1e8] sm:$0xff]
        %v4519 = vld [vmem:[%s375 + $0x1f0] sm:$0xff]
        %v4520 = vld [vmem:[%s375 + $0x1f8] sm:$0xff]
        %v4521 = vadd.f32 %v4298, %v4457
        %v4522 = vadd.f32 %v4300, %v4458
        %v4523 = vadd.f32 %v4303, %v4459
        %v4524 = vadd.f32 %v4305, %v4460
        %v4525 = vadd.f32 %v4308, %v4461
        %v4526 = vadd.f32 %v4310, %v4462
        %v4527 = vadd.f32 %v4313, %v4463
        %v4528 = vadd.f32 %v4315, %v4464
        %v4529 = vadd.f32 %v4318, %v4465
        %v4530 = vadd.f32 %v4320, %v4466
        %v4531 = vadd.f32 %v4323, %v4467
        %v4532 = vadd.f32 %v4325, %v4468
        %v4533 = vadd.f32 %v4328, %v4469
        %v4534 = vadd.f32 %v4330, %v4470
        %v4535 = vadd.f32 %v4333, %v4471
        %v4536 = vadd.f32 %v4335, %v4472
        %v4537 = vadd.f32 %v4338, %v4473
        %v4538 = vadd.f32 %v4340, %v4474
        %v4539 = vadd.f32 %v4343, %v4475
        %v4540 = vadd.f32 %v4345, %v4476
        %v4541 = vadd.f32 %v4348, %v4477
        %v4542 = vadd.f32 %v4350, %v4478
        %v4543 = vadd.f32 %v4353, %v4479
        %v4544 = vadd.f32 %v4355, %v4480
        %v4545 = vadd.f32 %v4358, %v4481
        %v4546 = vadd.f32 %v4360, %v4482
        %v4547 = vadd.f32 %v4363, %v4483
        %v4548 = vadd.f32 %v4365, %v4484
        %v4549 = vadd.f32 %v4368, %v4485
        %v4550 = vadd.f32 %v4370, %v4486
        %v4551 = vadd.f32 %v4373, %v4487
        %v4552 = vadd.f32 %v4375, %v4488
        %v4553 = vadd.f32 %v4378, %v4489
        %v4554 = vadd.f32 %v4380, %v4490
        %v4555 = vadd.f32 %v4383, %v4491
        %v4556 = vadd.f32 %v4385, %v4492
        %v4557 = vadd.f32 %v4388, %v4493
        %v4558 = vadd.f32 %v4390, %v4494
        %v4559 = vadd.f32 %v4393, %v4495
        %v4560 = vadd.f32 %v4395, %v4496
        %v4561 = vadd.f32 %v4398, %v4497
        %v4562 = vadd.f32 %v4400, %v4498
        %v4563 = vadd.f32 %v4403, %v4499
        %v4564 = vadd.f32 %v4405, %v4500
        %v4565 = vadd.f32 %v4408, %v4501
        %v4566 = vadd.f32 %v4410, %v4502
        %v4567 = vadd.f32 %v4413, %v4503
        %v4568 = vadd.f32 %v4415, %v4504
        %v4569 = vadd.f32 %v4418, %v4505
        %v4570 = vadd.f32 %v4420, %v4506
        %v4571 = vadd.f32 %v4423, %v4507
        %v4572 = vadd.f32 %v4425, %v4508
        %v4573 = vadd.f32 %v4428, %v4509
        %v4574 = vadd.f32 %v4430, %v4510
        %v4575 = vadd.f32 %v4433, %v4511
        %v4576 = vadd.f32 %v4435, %v4512
        %v4577 = vadd.f32 %v4438, %v4513
        %v4578 = vadd.f32 %v4440, %v4514
        %v4579 = vadd.f32 %v4443, %v4515
        %v4580 = vadd.f32 %v4445, %v4516
        %v4581 = vadd.f32 %v4448, %v4517
        %v4582 = vadd.f32 %v4450, %v4518
        %v4583 = vadd.f32 %v4453, %v4519
        %v4584 = vadd.f32 %v4455, %v4520
        %v4585 = vmul.f32 %v1525, %v4521
        %v4586 = vmul.f32 %v1528, %v4522
        %v4587 = vmul.f32 %v1531, %v4523
        %v4588 = vmul.f32 %v1534, %v4524
        %v4589 = vmul.f32 %v1537, %v4525
        %v4590 = vmul.f32 %v1540, %v4526
        %v4591 = vmul.f32 %v1543, %v4527
        %v4592 = vmul.f32 %v1546, %v4528
        %v4593 = vmul.f32 %v1549, %v4529
        %v4594 = vmul.f32 %v1552, %v4530
        %v4595 = vmul.f32 %v1555, %v4531
        %v4596 = vmul.f32 %v1558, %v4532
        %v4597 = vmul.f32 %v1561, %v4533
        %v4598 = vmul.f32 %v1564, %v4534
        %v4599 = vmul.f32 %v1567, %v4535
        %v4600 = vmul.f32 %v1570, %v4536
        %v4601 = vmul.f32 %v1573, %v4537
        %v4602 = vmul.f32 %v1576, %v4538
        %v4603 = vmul.f32 %v1579, %v4539
        %v4604 = vmul.f32 %v1582, %v4540
        %v4605 = vmul.f32 %v1585, %v4541
        %v4606 = vmul.f32 %v1588, %v4542
        %v4607 = vmul.f32 %v1591, %v4543
        %v4608 = vmul.f32 %v1594, %v4544
        %v4609 = vmul.f32 %v1597, %v4545
        %v4610 = vmul.f32 %v1600, %v4546
        %v4611 = vmul.f32 %v1603, %v4547
        %v4612 = vmul.f32 %v1606, %v4548
        %v4613 = vmul.f32 %v1609, %v4549
        %v4614 = vmul.f32 %v1612, %v4550
        %v4615 = vmul.f32 %v1615, %v4551
        %v4616 = vmul.f32 %v1618, %v4552
        %v4617 = vmul.f32 %v1621, %v4553
        %v4618 = vmul.f32 %v1624, %v4554
        %v4619 = vmul.f32 %v1627, %v4555
        %v4620 = vmul.f32 %v1630, %v4556
        %v4621 = vmul.f32 %v1633, %v4557
        %v4622 = vmul.f32 %v1636, %v4558
        %v4623 = vmul.f32 %v1639, %v4559
        %v4624 = vmul.f32 %v1642, %v4560
        %v4625 = vmul.f32 %v1645, %v4561
        %v4626 = vmul.f32 %v1648, %v4562
        %v4627 = vmul.f32 %v1651, %v4563
        %v4628 = vmul.f32 %v1654, %v4564
        %v4629 = vmul.f32 %v1657, %v4565
        %v4630 = vmul.f32 %v1660, %v4566
        %v4631 = vmul.f32 %v1663, %v4567
        %v4632 = vmul.f32 %v1666, %v4568
        %v4633 = vmul.f32 %v1669, %v4569
        %v4634 = vmul.f32 %v1672, %v4570
        %v4635 = vmul.f32 %v1675, %v4571
        %v4636 = vmul.f32 %v1678, %v4572
        %v4637 = vmul.f32 %v1681, %v4573
        %v4638 = vmul.f32 %v1684, %v4574
        %v4639 = vmul.f32 %v1687, %v4575
        %v4640 = vmul.f32 %v1690, %v4576
        %v4641 = vmul.f32 %v1693, %v4577
        %v4642 = vmul.f32 %v1696, %v4578
        %v4643 = vmul.f32 %v1699, %v4579
        %v4644 = vmul.f32 %v1702, %v4580
        %v4645 = vmul.f32 %v1705, %v4581
        %v4646 = vmul.f32 %v1708, %v4582
        %v4647 = vmul.f32 %v1711, %v4583
        %v4648 = vmul.f32 %v1714, %v4584
        %v4649 = vld [vmem:[%s7] sm:$0xff]
        %v4650 = vld [vmem:[%s7 + $0x8] sm:$0xff]
        %v4651 = vld [vmem:[%s7 + $0x10] sm:$0xff]
        %v4652 = vld [vmem:[%s7 + $0x18] sm:$0xff]
        %v4653 = vld [vmem:[%s8] sm:$0x1]
        %v4655 = vperm.slane %v4653, 0
        %vm4657 = vcmask 261120
        %v4659 = vsel %vm4657, %v4585, 0
        %v4662 = vsel %vm4657, %v4586, 0
        %v4665 = vsel %vm4657, %v4587, 0
        %v4668 = vsel %vm4657, %v4588, 0
        %v4671 = vsel %vm4657, %v4589, 0
        %v4674 = vsel %vm4657, %v4590, 0
        %v4677 = vsel %vm4657, %v4591, 0
        %v4680 = vsel %vm4657, %v4592, 0
        %v4683 = vsel %vm4657, %v4593, 0
        %v4686 = vsel %vm4657, %v4594, 0
        %v4689 = vsel %vm4657, %v4595, 0
        %v4692 = vsel %vm4657, %v4596, 0
        %v4695 = vsel %vm4657, %v4597, 0
        %v4698 = vsel %vm4657, %v4598, 0
        %v4701 = vsel %vm4657, %v4599, 0
        %v4704 = vsel %vm4657, %v4600, 0
        %v4707 = vsel %vm4657, %v4601, 0
        %v4710 = vsel %vm4657, %v4602, 0
        %v4713 = vsel %vm4657, %v4603, 0
        %v4716 = vsel %vm4657, %v4604, 0
        %v4719 = vsel %vm4657, %v4605, 0
        %v4722 = vsel %vm4657, %v4606, 0
        %v4725 = vsel %vm4657, %v4607, 0
        %v4728 = vsel %vm4657, %v4608, 0
        %v4731 = vsel %vm4657, %v4609, 0
        %v4734 = vsel %vm4657, %v4610, 0
        %v4737 = vsel %vm4657, %v4611, 0
        %v4740 = vsel %vm4657, %v4612, 0
        %v4743 = vsel %vm4657, %v4613, 0
        %v4746 = vsel %vm4657, %v4614, 0
        %v4749 = vsel %vm4657, %v4615, 0
        %v4752 = vsel %vm4657, %v4616, 0
        %v4755 = vsel %vm4657, %v4617, 0
        %v4758 = vsel %vm4657, %v4618, 0
        %v4761 = vsel %vm4657, %v4619, 0
        %v4764 = vsel %vm4657, %v4620, 0
        %v4767 = vsel %vm4657, %v4621, 0
        %v4770 = vsel %vm4657, %v4622, 0
        %v4773 = vsel %vm4657, %v4623, 0
        %v4776 = vsel %vm4657, %v4624, 0
        %v4779 = vsel %vm4657, %v4625, 0
        %v4782 = vsel %vm4657, %v4626, 0
        %v4785 = vsel %vm4657, %v4627, 0
        %v4788 = vsel %vm4657, %v4628, 0
        %v4791 = vsel %vm4657, %v4629, 0
        %v4794 = vsel %vm4657, %v4630, 0
        %v4797 = vsel %vm4657, %v4631, 0
        %v4800 = vsel %vm4657, %v4632, 0
        %v4803 = vsel %vm4657, %v4633, 0
        %v4806 = vsel %vm4657, %v4634, 0
        %v4809 = vsel %vm4657, %v4635, 0
        %v4812 = vsel %vm4657, %v4636, 0
        %v4815 = vsel %vm4657, %v4637, 0
        %v4818 = vsel %vm4657, %v4638, 0
        %v4821 = vsel %vm4657, %v4639, 0
        %v4824 = vsel %vm4657, %v4640, 0
        %v4827 = vsel %vm4657, %v4641, 0
        %v4830 = vsel %vm4657, %v4642, 0
        %v4833 = vsel %vm4657, %v4643, 0
        %v4836 = vsel %vm4657, %v4644, 0
        %v4839 = vsel %vm4657, %v4645, 0
        %v4842 = vsel %vm4657, %v4646, 0
        %v4845 = vsel %vm4657, %v4647, 0
        %v4848 = vsel %vm4657, %v4648, 0
        %4850 = vmatpush.msra.mxu0 0.0
        %4851 = vmatpush.msra.mxu0 0.0
        %4852 = vmatpush.msra.mxu0 0.0
        %4853 = vmatpush.msra.mxu0 0.0
        %4854 = vmatpush.msra.mxu0 0.0
        %4855 = vmatpush.msra.mxu0 0.0
        %4856 = vmatpush.msra.mxu0 0.0
        %4857 = vmatpush.msra.mxu0 0.0
        %4858 = vmatpush.msra.mxu0 0.0
        %4859 = vmatpush.msra.mxu0 0.0
        %4860 = vmatpush.msra.mxu0 0.0
        %4861 = vmatpush.msra.mxu0 0.0
        %4862 = vmatpush.msra.mxu0 %v4652
        %4863 = vmatpush.msra.mxu0 %v4651
        %4864 = vmatpush.msra.mxu0 %v4650
        %4865 = vmatpush.msra.mxu0 %v4649
        %4866 = vmatmul.f32.gmra.mxu0 %v4659
        %v4867 = vpop.f32.mrf.mxu0
        %v4868 = vadd.f32 %v4655, %v4867
        %4869 = vmatmul.f32.gmra.mxu0 %v4662
        %v4870 = vpop.f32.mrf.mxu0
        %v4871 = vadd.f32 %v4655, %v4870
        %4872 = vmatmul.f32.gmra.mxu0 %v4665
        %v4873 = vpop.f32.mrf.mxu0
        %v4874 = vadd.f32 %v4655, %v4873
        %4875 = vmatmul.f32.gmra.mxu0 %v4668
        %v4876 = vpop.f32.mrf.mxu0
        %v4877 = vadd.f32 %v4655, %v4876
        %4878 = vmatmul.f32.gmra.mxu0 %v4671
        %v4879 = vpop.f32.mrf.mxu0
        %v4880 = vadd.f32 %v4655, %v4879
        %4881 = vmatmul.f32.gmra.mxu0 %v4674
        %v4882 = vpop.f32.mrf.mxu0
        %v4883 = vadd.f32 %v4655, %v4882
        %4884 = vmatmul.f32.gmra.mxu0 %v4677
        %v4885 = vpop.f32.mrf.mxu0
        %v4886 = vadd.f32 %v4655, %v4885
        %4887 = vmatmul.f32.gmra.mxu0 %v4680
        %v4888 = vpop.f32.mrf.mxu0
        %v4889 = vadd.f32 %v4655, %v4888
        %4890 = vmatmul.f32.gmra.mxu0 %v4683
        %v4891 = vpop.f32.mrf.mxu0
        %v4892 = vadd.f32 %v4655, %v4891
        %4893 = vmatmul.f32.gmra.mxu0 %v4686
        %v4894 = vpop.f32.mrf.mxu0
        %v4895 = vadd.f32 %v4655, %v4894
        %4896 = vmatmul.f32.gmra.mxu0 %v4689
        %v4897 = vpop.f32.mrf.mxu0
        %v4898 = vadd.f32 %v4655, %v4897
        %4899 = vmatmul.f32.gmra.mxu0 %v4692
        %v4900 = vpop.f32.mrf.mxu0
        %v4901 = vadd.f32 %v4655, %v4900
        %4902 = vmatmul.f32.gmra.mxu0 %v4695
        %v4903 = vpop.f32.mrf.mxu0
        %v4904 = vadd.f32 %v4655, %v4903
        %4905 = vmatmul.f32.gmra.mxu0 %v4698
        %v4906 = vpop.f32.mrf.mxu0
        %v4907 = vadd.f32 %v4655, %v4906
        %4908 = vmatmul.f32.gmra.mxu0 %v4701
        %v4909 = vpop.f32.mrf.mxu0
        %v4910 = vadd.f32 %v4655, %v4909
        %4911 = vmatmul.f32.gmra.mxu0 %v4704
        %v4912 = vpop.f32.mrf.mxu0
        %v4913 = vadd.f32 %v4655, %v4912
        %4914 = vmatmul.f32.gmra.mxu0 %v4707
        %v4915 = vpop.f32.mrf.mxu0
        %v4916 = vadd.f32 %v4655, %v4915
        %4917 = vmatmul.f32.gmra.mxu0 %v4710
        %v4918 = vpop.f32.mrf.mxu0
        %v4919 = vadd.f32 %v4655, %v4918
        %4920 = vmatmul.f32.gmra.mxu0 %v4713
        %v4921 = vpop.f32.mrf.mxu0
        %v4922 = vadd.f32 %v4655, %v4921
        %4923 = vmatmul.f32.gmra.mxu0 %v4716
        %v4924 = vpop.f32.mrf.mxu0
        %v4925 = vadd.f32 %v4655, %v4924
        %4926 = vmatmul.f32.gmra.mxu0 %v4719
        %v4927 = vpop.f32.mrf.mxu0
        %v4928 = vadd.f32 %v4655, %v4927
        %4929 = vmatmul.f32.gmra.mxu0 %v4722
        %v4930 = vpop.f32.mrf.mxu0
        %v4931 = vadd.f32 %v4655, %v4930
        %4932 = vmatmul.f32.gmra.mxu0 %v4725
        %v4933 = vpop.f32.mrf.mxu0
        %v4934 = vadd.f32 %v4655, %v4933
        %4935 = vmatmul.f32.gmra.mxu0 %v4728
        %v4936 = vpop.f32.mrf.mxu0
        %v4937 = vadd.f32 %v4655, %v4936
        %4938 = vmatmul.f32.gmra.mxu0 %v4731
        %v4939 = vpop.f32.mrf.mxu0
        %v4940 = vadd.f32 %v4655, %v4939
        %4941 = vmatmul.f32.gmra.mxu0 %v4734
        %v4942 = vpop.f32.mrf.mxu0
        %v4943 = vadd.f32 %v4655, %v4942
        %4944 = vmatmul.f32.gmra.mxu0 %v4737
        %v4945 = vpop.f32.mrf.mxu0
        %v4946 = vadd.f32 %v4655, %v4945
        %4947 = vmatmul.f32.gmra.mxu0 %v4740
        %v4948 = vpop.f32.mrf.mxu0
        %v4949 = vadd.f32 %v4655, %v4948
        %4950 = vmatmul.f32.gmra.mxu0 %v4743
        %v4951 = vpop.f32.mrf.mxu0
        %v4952 = vadd.f32 %v4655, %v4951
        %4953 = vmatmul.f32.gmra.mxu0 %v4746
        %v4954 = vpop.f32.mrf.mxu0
        %v4955 = vadd.f32 %v4655, %v4954
        %4956 = vmatmul.f32.gmra.mxu0 %v4749
        %v4957 = vpop.f32.mrf.mxu0
        %v4958 = vadd.f32 %v4655, %v4957
        %4959 = vmatmul.f32.gmra.mxu0 %v4752
        %v4960 = vpop.f32.mrf.mxu0
        %v4961 = vadd.f32 %v4655, %v4960
        %4962 = vmatmul.f32.gmra.mxu0 %v4755
        %v4963 = vpop.f32.mrf.mxu0
        %v4964 = vadd.f32 %v4655, %v4963
        %4965 = vmatmul.f32.gmra.mxu0 %v4758
        %v4966 = vpop.f32.mrf.mxu0
        %v4967 = vadd.f32 %v4655, %v4966
        %4968 = vmatmul.f32.gmra.mxu0 %v4761
        %v4969 = vpop.f32.mrf.mxu0
        %v4970 = vadd.f32 %v4655, %v4969
        %4971 = vmatmul.f32.gmra.mxu0 %v4764
        %v4972 = vpop.f32.mrf.mxu0
        %v4973 = vadd.f32 %v4655, %v4972
        %4974 = vmatmul.f32.gmra.mxu0 %v4767
        %v4975 = vpop.f32.mrf.mxu0
        %v4976 = vadd.f32 %v4655, %v4975
        %4977 = vmatmul.f32.gmra.mxu0 %v4770
        %v4978 = vpop.f32.mrf.mxu0
        %v4979 = vadd.f32 %v4655, %v4978
        %4980 = vmatmul.f32.gmra.mxu0 %v4773
        %v4981 = vpop.f32.mrf.mxu0
        %v4982 = vadd.f32 %v4655, %v4981
        %4983 = vmatmul.f32.gmra.mxu0 %v4776
        %v4984 = vpop.f32.mrf.mxu0
        %v4985 = vadd.f32 %v4655, %v4984
        %4986 = vmatmul.f32.gmra.mxu0 %v4779
        %v4987 = vpop.f32.mrf.mxu0
        %v4988 = vadd.f32 %v4655, %v4987
        %4989 = vmatmul.f32.gmra.mxu0 %v4782
        %v4990 = vpop.f32.mrf.mxu0
        %v4991 = vadd.f32 %v4655, %v4990
        %4992 = vmatmul.f32.gmra.mxu0 %v4785
        %v4993 = vpop.f32.mrf.mxu0
        %v4994 = vadd.f32 %v4655, %v4993
        %4995 = vmatmul.f32.gmra.mxu0 %v4788
        %v4996 = vpop.f32.mrf.mxu0
        %v4997 = vadd.f32 %v4655, %v4996
        %4998 = vmatmul.f32.gmra.mxu0 %v4791
        %v4999 = vpop.f32.mrf.mxu0
        %v5000 = vadd.f32 %v4655, %v4999
        %5001 = vmatmul.f32.gmra.mxu0 %v4794
        %v5002 = vpop.f32.mrf.mxu0
        %v5003 = vadd.f32 %v4655, %v5002
        %5004 = vmatmul.f32.gmra.mxu0 %v4797
        %v5005 = vpop.f32.mrf.mxu0
        %v5006 = vadd.f32 %v4655, %v5005
        %5007 = vmatmul.f32.gmra.mxu0 %v4800
        %v5008 = vpop.f32.mrf.mxu0
        %v5009 = vadd.f32 %v4655, %v5008
        %5010 = vmatmul.f32.gmra.mxu0 %v4803
        %v5011 = vpop.f32.mrf.mxu0
        %v5012 = vadd.f32 %v4655, %v5011
        %5013 = vmatmul.f32.gmra.mxu0 %v4806
        %v5014 = vpop.f32.mrf.mxu0
        %v5015 = vadd.f32 %v4655, %v5014
        %5016 = vmatmul.f32.gmra.mxu0 %v4809
        %v5017 = vpop.f32.mrf.mxu0
        %v5018 = vadd.f32 %v4655, %v5017
        %5019 = vmatmul.f32.gmra.mxu0 %v4812
        %v5020 = vpop.f32.mrf.mxu0
        %v5021 = vadd.f32 %v4655, %v5020
        %5022 = vmatmul.f32.gmra.mxu0 %v4815
        %v5023 = vpop.f32.mrf.mxu0
        %v5024 = vadd.f32 %v4655, %v5023
        %5025 = vmatmul.f32.gmra.mxu0 %v4818
        %v5026 = vpop.f32.mrf.mxu0
        %v5027 = vadd.f32 %v4655, %v5026
        %5028 = vmatmul.f32.gmra.mxu0 %v4821
        %v5029 = vpop.f32.mrf.mxu0
        %v5030 = vadd.f32 %v4655, %v5029
        %5031 = vmatmul.f32.gmra.mxu0 %v4824
        %v5032 = vpop.f32.mrf.mxu0
        %v5033 = vadd.f32 %v4655, %v5032
        %5034 = vmatmul.f32.gmra.mxu0 %v4827
        %v5035 = vpop.f32.mrf.mxu0
        %v5036 = vadd.f32 %v4655, %v5035
        %5037 = vmatmul.f32.gmra.mxu0 %v4830
        %v5038 = vpop.f32.mrf.mxu0
        %v5039 = vadd.f32 %v4655, %v5038
        %5040 = vmatmul.f32.gmra.mxu0 %v4833
        %v5041 = vpop.f32.mrf.mxu0
        %v5042 = vadd.f32 %v4655, %v5041
        %5043 = vmatmul.f32.gmra.mxu0 %v4836
        %v5044 = vpop.f32.mrf.mxu0
        %v5045 = vadd.f32 %v4655, %v5044
        %5046 = vmatmul.f32.gmra.mxu0 %v4839
        %v5047 = vpop.f32.mrf.mxu0
        %v5048 = vadd.f32 %v4655, %v5047
        %5049 = vmatmul.f32.gmra.mxu0 %v4842
        %v5050 = vpop.f32.mrf.mxu0
        %v5051 = vadd.f32 %v4655, %v5050
        %5052 = vmatmul.f32.gmra.mxu0 %v4845
        %v5053 = vpop.f32.mrf.mxu0
        %v5054 = vadd.f32 %v4655, %v5053
        %5055 = vmatmul.f32.gmra.mxu0 %v4848
        %v5056 = vpop.f32.mrf.mxu0
        %v5057 = vadd.f32 %v4655, %v5056
        %5058 = vdwg.mxu0
        %5059 = vst [vmem:[%s358] sm:$0xff] %v4868
        %5060 = vst [vmem:[%s358 + $0x8] sm:$0xff] %v4871
        %5061 = vst [vmem:[%s358 + $0x10] sm:$0xff] %v4874
        %5062 = vst [vmem:[%s358 + $0x18] sm:$0xff] %v4877
        %5063 = vst [vmem:[%s358 + $0x20] sm:$0xff] %v4880
        %5064 = vst [vmem:[%s358 + $0x28] sm:$0xff] %v4883
        %5065 = vst [vmem:[%s358 + $0x30] sm:$0xff] %v4886
        %5066 = vst [vmem:[%s358 + $0x38] sm:$0xff] %v4889
        %5067 = vst [vmem:[%s358 + $0x40] sm:$0xff] %v4892
        %5068 = vst [vmem:[%s358 + $0x48] sm:$0xff] %v4895
        %5069 = vst [vmem:[%s358 + $0x50] sm:$0xff] %v4898
        %5070 = vst [vmem:[%s358 + $0x58] sm:$0xff] %v4901
        %5071 = vst [vmem:[%s358 + $0x60] sm:$0xff] %v4904
        %5072 = vst [vmem:[%s358 + $0x68] sm:$0xff] %v4907
        %5073 = vst [vmem:[%s358 + $0x70] sm:$0xff] %v4910
        %5074 = vst [vmem:[%s358 + $0x78] sm:$0xff] %v4913
        %5075 = vst [vmem:[%s358 + $0x80] sm:$0xff] %v4916
        %5076 = vst [vmem:[%s358 + $0x88] sm:$0xff] %v4919
        %5077 = vst [vmem:[%s358 + $0x90] sm:$0xff] %v4922
        %5078 = vst [vmem:[%s358 + $0x98] sm:$0xff] %v4925
        %5079 = vst [vmem:[%s358 + $0xa0] sm:$0xff] %v4928
        %5080 = vst [vmem:[%s358 + $0xa8] sm:$0xff] %v4931
        %5081 = vst [vmem:[%s358 + $0xb0] sm:$0xff] %v4934
        %5082 = vst [vmem:[%s358 + $0xb8] sm:$0xff] %v4937
        %5083 = vst [vmem:[%s358 + $0xc0] sm:$0xff] %v4940
        %5084 = vst [vmem:[%s358 + $0xc8] sm:$0xff] %v4943
        %5085 = vst [vmem:[%s358 + $0xd0] sm:$0xff] %v4946
        %5086 = vst [vmem:[%s358 + $0xd8] sm:$0xff] %v4949
        %5087 = vst [vmem:[%s358 + $0xe0] sm:$0xff] %v4952
        %5088 = vst [vmem:[%s358 + $0xe8] sm:$0xff] %v4955
        %5089 = vst [vmem:[%s358 + $0xf0] sm:$0xff] %v4958
        %5090 = vst [vmem:[%s358 + $0xf8] sm:$0xff] %v4961
        %5091 = vst [vmem:[%s358 + $0x100] sm:$0xff] %v4964
        %5092 = vst [vmem:[%s358 + $0x108] sm:$0xff] %v4967
        %5093 = vst [vmem:[%s358 + $0x110] sm:$0xff] %v4970
        %5094 = vst [vmem:[%s358 + $0x118] sm:$0xff] %v4973
        %5095 = vst [vmem:[%s358 + $0x120] sm:$0xff] %v4976
        %5096 = vst [vmem:[%s358 + $0x128] sm:$0xff] %v4979
        %5097 = vst [vmem:[%s358 + $0x130] sm:$0xff] %v4982
        %5098 = vst [vmem:[%s358 + $0x138] sm:$0xff] %v4985
        %5099 = vst [vmem:[%s358 + $0x140] sm:$0xff] %v4988
        %5100 = vst [vmem:[%s358 + $0x148] sm:$0xff] %v4991
        %5101 = vst [vmem:[%s358 + $0x150] sm:$0xff] %v4994
        %5102 = vst [vmem:[%s358 + $0x158] sm:$0xff] %v4997
        %5103 = vst [vmem:[%s358 + $0x160] sm:$0xff] %v5000
        %5104 = vst [vmem:[%s358 + $0x168] sm:$0xff] %v5003
        %5105 = vst [vmem:[%s358 + $0x170] sm:$0xff] %v5006
        %5106 = vst [vmem:[%s358 + $0x178] sm:$0xff] %v5009
        %5107 = vst [vmem:[%s358 + $0x180] sm:$0xff] %v5012
        %5108 = vst [vmem:[%s358 + $0x188] sm:$0xff] %v5015
        %5109 = vst [vmem:[%s358 + $0x190] sm:$0xff] %v5018
        %5110 = vst [vmem:[%s358 + $0x198] sm:$0xff] %v5021
        %5111 = vst [vmem:[%s358 + $0x1a0] sm:$0xff] %v5024
        %5112 = vst [vmem:[%s358 + $0x1a8] sm:$0xff] %v5027
        %5113 = vst [vmem:[%s358 + $0x1b0] sm:$0xff] %v5030
        %5114 = vst [vmem:[%s358 + $0x1b8] sm:$0xff] %v5033
        %5115 = vst [vmem:[%s358 + $0x1c0] sm:$0xff] %v5036
        %5116 = vst [vmem:[%s358 + $0x1c8] sm:$0xff] %v5039
        %5117 = vst [vmem:[%s358 + $0x1d0] sm:$0xff] %v5042
        %5118 = vst [vmem:[%s358 + $0x1d8] sm:$0xff] %v5045
        %5119 = vst [vmem:[%s358 + $0x1e0] sm:$0xff] %v5048
        %5120 = vst [vmem:[%s358 + $0x1e8] sm:$0xff] %v5051
        %5121 = vst [vmem:[%s358 + $0x1f0] sm:$0xff] %v5054
        %5122 = vst [vmem:[%s358 + $0x1f8] sm:$0xff] %v5057
        %s5123 = sand.u32 %s235, 1
        %s5124 = scalar_lea.sflag [#allocation3], %s5123
        %s5125 = sand.u32 %s235, 1
        %s5126 = smul.addr %s5125, 512
        %s5127 = scalar_lea.vmem [#allocation2], %s5126
        // Predicated region
        $region57: #{tpu_custom_call.1} parent=55 // pred_check
          %p5128 = pneg %p245
        $region58: #{tpu_custom_call.1} parent=55 // pred_check_branch
          %5130 = sbr.rel (%p5128) target = $region60
        $region59: #{tpu_custom_call.1} parent=55 // pred_region
          %s5131 = smul.u32 64, %s23
          %5133 = vsyncadd %s5124, 0
          %s5134 = smul.addr %s5131, 8
          %s5135 = scalar_lea.hbm %s9, %s5134
          %s5136 = sshll.u32 %s5127, 4
          %s5137 = int_to_ptr.vmem [resolvable:$true] %s5136
          %s5138 = sshll.u32 %s5135, 4
          %s5139 = int_to_ptr.hbm [resolvable:$true] %s5138
          %5144 = dma.vmem_to_hbm [thread:$0]  %s5137, 8192, %s5139, %s5124, 128, 128, 8
        $region60: #{tpu_custom_call.1} parent=55 // pred_fallthru
          _
      $region56: #{tpu_custom_call.1} parent=5 // pred_fallthru
        _
      %p5145 = scmp.le.s32.totalorder 2, %s18
      // Predicated region
      $region61: #{tpu_custom_call.1} parent=5 // pred_check
        %p5146 = pneg %p5145
      $region62: #{tpu_custom_call.1} parent=5 // pred_check_branch
        %5148 = sbr.rel (%p5146) target = $region64
      $region63: #{tpu_custom_call.1} parent=5 // pred_region
        %s5149 = ssub.s32 %s18, 2
        // Predicated region
        $region65: #{tpu_custom_call.1} parent=63 // pred_check
          %p5150 = pneg %p251
        $region66: #{tpu_custom_call.1} parent=63 // pred_check_branch
          %5152 = sbr.rel (%p5150) target = $region68
        $region67: #{tpu_custom_call.1} parent=63 // pred_region
          %s5153 = sand.u32 %s236, 1
          %s5154 = scalar_lea.sflag [#allocation3], %s5153
          %s5155 = sand.u32 %s236, 1
          %s5156 = smul.addr %s5155, 512
          %s5157 = scalar_lea.vmem [#allocation2], %s5156
          %5159 = dma.done %s5154, 8192
        $region68: #{tpu_custom_call.1} parent=63 // pred_fallthru
          _
      $region64: #{tpu_custom_call.1} parent=5 // pred_fallthru
        _
    $region6: #{tpu_custom_call.1} parent=1 // loop_footer
      %s22 = sadd.s32 1, %s18
    $region7: #{tpu_custom_call.1} parent=1 // loop_footer_branch
      %17 = sbr.rel target = $region3
    $region8: #{tpu_custom_call.1} parent=1 // loop_exit
      _
    %5160 = vsyncpa [#allocation3], 1
    %s5161 = scalar_lea.sflag [#allocation3], 1
    %5162 = vsyncpa %s5161, 1

</llo_original>
